<compile_context>
chip_gen: v5e
topology: v5e:2x2
jax: 0.10.0
libtpu: 0.0.40
codegen_flags: <defaults>
</compile_context>

<pallas_src>
import functools

import jax
import jax.numpy as jnp
from jax.experimental import pallas as pl
from jax.experimental.pallas import tpu as pltpu

# ---------------------------------------------------------------------------
# Model dimensions (synthetic, small)
# ---------------------------------------------------------------------------
N_PCL = 128      # points in the observed point cloud
N_KPS = 8        # transformed keypoints
N_PAD = 8        # duplicated keypoints to pad points to a multiple of 16
N_PTS = N_PCL + N_KPS + N_PAD   # 144
C_IN = 3         # xyz
C_MID = 64
C_FEAT = 128
C_HEAD = 64
ROT_DIM = 6      # rot6d

B_TILE_MAX = 32          # max batch elements per grid step (tunable)
OUT_W = 128              # lane-dense fused output: [rot6 | dt3 | ds3 | pad]
VMEM_LIMIT_BYTES = 48 * 1024 * 1024


def _ceil_to(x, m):
    return ((x + m - 1) // m) * m


def _detect_new_gen():
    """True on chips with a 256x256 MXU + bf16 VPU (v6e / v7x)."""
    try:
        kind = jax.devices()[0].device_kind.lower()
        return ("v6" in kind) or ("v7" in kind)
    except Exception:
        # Fused/bf16 path is correct everywhere; only slower on older gens.
        return True


_NEW_GEN = _detect_new_gen()


# ---------------------------------------------------------------------------
# Pallas kernel: fused FeatNet + RotHead + TS head (b_tile batch elems / step)
# ---------------------------------------------------------------------------
def _georef_kernel(
    pts_ref, iscale_ref,
    w1_ref, b1_ref,          # feat layer 1 (rot|ts column-fused)        (3,128)
    w2_ref, b2_ref,          # feat layer 2 (block-diag rot|ts)          (128,256)
    w3_ref, wsb_ref, b3_ref,  # head layer 1 fused [rot-h|t-h|s-h]       (256,256)
    wr2_ref, br2_ref,        # rot head second conv                      (128,64)
    wout_ref, bout_ref,      # fused final FC -> 128 lanes               (192,128)
    out_ref,
    *, b_tile, new_gen,
):
    f32 = jnp.float32
    bf16 = jnp.bfloat16
    act_dt = bf16 if new_gen else f32   # elementwise-chain dtype

    def act(acc_f32, bias_ref):
        # bias-add + ReLU in bf16 on v6e/v7x (bf16 VALU), f32 on v5e.
        x = acc_f32.astype(act_dt) + bias_ref[...].astype(act_dt)
        return jnp.maximum(x, 0.0)

    m = b_tile * N_PTS
    pts = pts_ref[...]                                         # (m, 3) bf16

    # ---- FeatNet layer 1: rot + ts branches fused along columns ------------
    h1 = act(jnp.dot(pts, w1_ref[...], preferred_element_type=f32), b1_ref)

    # ---- FeatNet layer 2: block-diagonal fused [feat_r | feat_t] -----------
    feat = act(jnp.dot(h1.astype(bf16), w2_ref[...],
                       preferred_element_type=f32), b2_ref)    # (m, 256)

    # ---- Head layer 1: cols = [rot-h1 (128) | t-h (64) | s-h (64)] ---------
    feat_b = feat.astype(bf16)
    if new_gen:
        # 256x256 MXU: the zero blocks of the fused weight are free.
        h3 = jnp.dot(feat_b, w3_ref[...], preferred_element_type=f32)
    else:
        # 128x128 MXU (v5e/v5p/older): skip the 50%-zero blocks.
        h3 = jnp.concatenate(
            [jnp.dot(feat_b[:, :C_FEAT], w3_ref[:C_FEAT, :C_FEAT],
                     preferred_element_type=f32),
             jnp.dot(feat_b[:, C_FEAT:], w3_ref[C_FEAT:, C_FEAT:],
                     preferred_element_type=f32)],
            axis=-1)                                           # (m, 256)

    # Per-batch bias: constant [br1|bt1|bs1] plus the init_scale contribution
    # (Conv1d over cat(t_feat, init_scale) == ws1a@t_feat + ws1b@init_scale,
    # so the scale term folds into a per-batch bias — exact).
    bias3 = (jnp.dot(iscale_ref[...], wsb_ref[...],
                     preferred_element_type=f32) + b3_ref[...])    # (b_tile, 256)
    h3 = h3.reshape(b_tile, N_PTS, 2 * C_FEAT).astype(act_dt)
    h3 = jnp.maximum(h3 + bias3.astype(act_dt)[:, None, :], 0.0)

    # ---- Rot head second point-wise conv -----------------------------------
    rot_in = h3[:, :, :C_FEAT].reshape(m, C_FEAT)
    rot_h = act(jnp.dot(rot_in.astype(bf16), wr2_ref[...],
                        preferred_element_type=f32), br2_ref)
    rot_h = rot_h.reshape(b_tile, N_PTS, C_HEAD)

    # ---- Global max pools over all (pcl + kps) points -----------------------
    rot_pool = jnp.max(rot_h, axis=1)                          # (b_tile, 64)
    ts_pool = jnp.max(h3[:, :, C_FEAT:], axis=1)               # (b_tile, 128) = [t|s]

    # ---- Single fused final FC -> lane-dense [rot6 | dt3 | ds3 | pad] -------
    pool = jnp.concatenate(
        [rot_pool.astype(bf16), ts_pool.astype(bf16)], axis=-1)  # (b_tile, 192)
    out_ref[...] = (jnp.dot(pool, wout_ref[...], preferred_element_type=f32)
                    + bout_ref[...])


# ---------------------------------------------------------------------------
# Weight pre-packing (sibling matmuls fused; bulk weights cast to bf16)
# ---------------------------------------------------------------------------
def _pack_params(params):
    f32 = jnp.float32
    bf16 = jnp.bfloat16

    # Feat layer 1: pts @ [w1r | w1t]  -> (3, 128)
    w1 = jnp.concatenate([params["w1r"], params["w1t"]], axis=1).astype(bf16)
    b1 = jnp.concatenate([params["b1r"], params["b1t"]], axis=1).astype(f32)

    # Feat layer 2: block-diag(w2r, w2t)  -> (128, 256), cols = [feat_r|feat_t]
    w2 = jnp.zeros((2 * C_MID, 2 * C_FEAT), f32)
    w2 = w2.at[:C_MID, :C_FEAT].set(params["w2r"])
    w2 = w2.at[C_MID:, C_FEAT:].set(params["w2t"])
    w2 = w2.astype(bf16)
    b2 = jnp.concatenate([params["b2r"], params["b2t"]], axis=1).astype(f32)

    # Head layer 1 fused: rows = [feat_r | feat_t], cols = [rot-h1 | t-h | s-h]
    w3 = jnp.zeros((2 * C_FEAT, C_FEAT + 2 * C_HEAD), f32)
    w3 = w3.at[:C_FEAT, :C_FEAT].set(params["wr1"])
    w3 = w3.at[C_FEAT:, C_FEAT:C_FEAT + C_HEAD].set(params["wt1"])
    w3 = w3.at[C_FEAT:, C_FEAT + C_HEAD:].set(params["ws1a"])
    w3 = w3.astype(bf16)
    # init_scale contribution only hits the s-branch columns
    wsb = jnp.zeros((3, C_FEAT + 2 * C_HEAD), f32)
    wsb = wsb.at[:, C_FEAT + C_HEAD:].set(params["ws1b"])
    b3 = jnp.concatenate(
        [params["br1"], params["bt1"], params["bs1"]], axis=1).astype(f32)

    wr2 = params["wr2"].astype(bf16)          # (128, 64)
    br2 = params["br2"].astype(f32)           # (1, 64)

    # Fused final FC: rows = [rot_pool(64) | t_pool(64) | s_pool(64)],
    # cols = OUT_W lanes [rot6 | dt3 | ds3 | pad].
    wout = jnp.zeros((3 * C_HEAD, OUT_W), f32)
    wout = wout.at[:C_HEAD, :ROT_DIM].set(params["wrf"])
    wout = wout.at[C_HEAD:2 * C_HEAD, ROT_DIM:ROT_DIM + 3].set(params["wtf"])
    wout = wout.at[2 * C_HEAD:, ROT_DIM + 3:ROT_DIM + 6].set(params["wsf"])
    wout = wout.astype(bf16)
    bout = jnp.zeros((1, OUT_W), f32)
    bout = bout.at[:, :ROT_DIM].set(params["brf"])
    bout = bout.at[:, ROT_DIM:ROT_DIM + 3].set(params["btf"])
    bout = bout.at[:, ROT_DIM + 3:ROT_DIM + 6].set(params["bsf"])

    return [w1, b1, w2, b2, w3, wsb, b3, wr2, br2, wout, bout]


def _const_spec(shape):
    nd = len(shape)
    return pl.BlockSpec(shape, lambda b, _nd=nd: (0,) * _nd)


# ---------------------------------------------------------------------------
# Wrapper
# ---------------------------------------------------------------------------
@jax.jit
def georef_forward(x, tfd_kps, init_pose, init_scale, params):
    """Forward pass of GeoReF.

    x:         (bs, 3, N_PCL)  point cloud        (PyTorch NCL layout)
    tfd_kps:   (bs, 3, N_KPS)  transformed kps    (PyTorch NCL layout)
    init_pose: (bs, 3, 4)      [R | t]
    init_scale:(bs, 3)
    Returns dict {'pose_0': (bs,3,4), 'scale_0': (bs,3)}.
    """
    bs = x.shape[0]
    f32 = jnp.float32
    bf16 = jnp.bfloat16

    # NCL -> (bs, L, C): points on sublanes, channels on lanes.
    pcl = jnp.transpose(x, (0, 2, 1)).astype(f32)          # (bs, N_PCL, 3)
    kps = jnp.transpose(tfd_kps, (0, 2, 1)).astype(f32)    # (bs, N_KPS, 3)
    # Concat pcl + kps, pad with duplicated keypoints (max-pool unaffected).
    pad_pts = kps[:, :N_PAD, :]
    pts = jnp.concatenate([pcl, kps, pad_pts], axis=1)     # (bs, N_PTS, 3)
    iscale = init_scale.astype(f32)                        # (bs, 3)

    # Adaptive batch tile (keeps tiny demo batches from 16x-overpadding while
    # still amortizing per-step overhead at production batch sizes).
    b_tile = min(B_TILE_MAX, _ceil_to(bs, 8))
    bs_pad = _ceil_to(bs, b_tile)
    if bs_pad != bs:
        pts = jnp.pad(pts, ((0, bs_pad - bs), (0, 0), (0, 0)))
        iscale_p = jnp.pad(iscale, ((0, bs_pad - bs), (0, 0)))
    else:
        iscale_p = iscale

    # Pre-flatten + pre-cast points: drops the in-kernel relayout/cast of the
    # lane-sparse (M,3) block and halves its DMA bytes.
    pts_flat = pts.reshape(bs_pad * N_PTS, C_IN).astype(bf16)

    weights = _pack_params(params)

    in_specs = [
        pl.BlockSpec((b_tile * N_PTS, C_IN), lambda b: (b, 0)),
        pl.BlockSpec((b_tile, 3), lambda b: (b, 0)),
    ] + [_const_spec(w.shape) for w in weights]
    out_specs = pl.BlockSpec((b_tile, OUT_W), lambda b: (b, 0))

    out = pl.pallas_call(
        functools.partial(_georef_kernel, b_tile=b_tile, new_gen=_NEW_GEN),
        out_shape=jax.ShapeDtypeStruct((bs_pad, OUT_W), f32),
        grid_spec=pltpu.PrefetchScalarGridSpec(
            num_scalar_prefetch=0,
            grid=(bs_pad // b_tile,),
            in_specs=in_specs,
            out_specs=out_specs,
        ),
        compiler_params=pltpu.CompilerParams(
            dimension_semantics=("parallel",),
            vmem_limit_bytes=VMEM_LIMIT_BYTES,
        ),
    )(pts_flat, iscale_p, *weights)

    rot_deltas = out[:bs, :ROT_DIM]                    # (bs, 6)
    trans_deltas = out[:bs, ROT_DIM:ROT_DIM + 3]       # (bs, 3)
    scale_deltas = out[:bs, ROT_DIM + 3:ROT_DIM + 6]   # (bs, 3)

    # --- rot6d -> rotation matrix (Gram-Schmidt), plain-JAX glue ------------
    def rot6d_to_mat(d6, eps=1e-4):
        a1, a2 = d6[..., :3], d6[..., 3:]
        b1 = a1 / (jnp.linalg.norm(a1, axis=-1, keepdims=True) + eps)
        a2p = a2 - jnp.sum(b1 * a2, axis=-1, keepdims=True) * b1
        b2 = a2p / (jnp.linalg.norm(a2p, axis=-1, keepdims=True) + eps)
        b3 = jnp.cross(b1, b2)
        return jnp.stack([b1, b2, b3], axis=-1)  # columns

    rot_m_deltas = rot6d_to_mat(rot_deltas)                  # (bs, 3, 3)

    rot_inits = init_pose[:, :3, :3].astype(f32)
    trans_inits = init_pose[:, :3, 3].astype(f32)

    # pose_scale_from_delta_init (ego rot, 3D delta_T_space, scale_type='iter')
    pred_rot = jnp.einsum("bij,bjk->bik", rot_m_deltas, rot_inits)
    pred_trans = trans_inits + trans_deltas
    pred_scale = init_scale.astype(f32) + scale_deltas

    pred_pose = jnp.concatenate([pred_rot, pred_trans[:, :, None]], axis=-1)

    # TODO(synk): CLASS_AWARE gather over obj_class and the do_loss branch
    # (PM / rot / trans / scale losses, event storage) are not reproduced here.
    return {"pose_0": pred_pose, "scale_0": pred_scale}


# ---------------------------------------------------------------------------
# Deterministic parameter init
# ---------------------------------------------------------------------------
def init_params(key):
    shapes = {
        # feat net, rotation branch
        "w1r": (C_IN, C_MID), "b1r": (1, C_MID),
        "w2r": (C_MID, C_FEAT), "b2r": (1, C_FEAT),
        # feat net, ts branch
        "w1t": (C_IN, C_MID), "b1t": (1, C_MID),
        "w2t": (C_MID, C_FEAT), "b2t": (1, C_FEAT),
        # rot head
        "wr1": (C_FEAT, C_FEAT), "br1": (1, C_FEAT),
        "wr2": (C_FEAT, C_HEAD), "br2": (1, C_HEAD),
        "wrf": (C_HEAD, ROT_DIM), "brf": (1, ROT_DIM),
        # trans head
        "wt1": (C_FEAT, C_HEAD), "bt1": (1, C_HEAD),
        "wtf": (C_HEAD, 3), "btf": (1, 3),
        # scale head (split conv over cat(t_feat, init_scale))
        "ws1a": (C_FEAT, C_HEAD), "ws1b": (3, C_HEAD), "bs1": (1, C_HEAD),
        "wsf": (C_HEAD, 3), "bsf": (1, 3),
    }
    params = {}
    keys = jax.random.split(key, len(shapes))
    for k, (name, shp) in zip(keys, sorted(shapes.items())):
        fan_in = shp[0] if len(shp) > 1 else 1
        params[name] = (jax.random.normal(k, shp, jnp.float32)
                        * (0.5 / jnp.sqrt(fan_in)))
    return params


# ---------------------------------------------------------------------------
if __name__ == "__main__":
    key = jax.random.PRNGKey(0)
    k_p, k_x, k_k, k_r, k_t, k_s = jax.random.split(key, 6)

    bs = 2
    params = init_params(k_p)

    x = jax.random.normal(k_x, (bs, 3, N_PCL), jnp.float32)        # NCL
    tfd_kps = jax.random.normal(k_k, (bs, 3, N_KPS), jnp.float32)  # NCL

    # init pose [R | t] with a valid rotation (from random rot6d) + trans.
    d6 = jax.random.normal(k_r, (bs, 6), jnp.float32)
    a1, a2 = d6[:, :3], d6[:, 3:]
    b1 = a1 / (jnp.linalg.norm(a1, axis=-1, keepdims=True) + 1e-4)
    a2p = a2 - jnp.sum(b1 * a2, axis=-1, keepdims=True) * b1
    b2 = a2p / (jnp.linalg.norm(a2p, axis=-1, keepdims=True) + 1e-4)
    b3 = jnp.cross(b1, b2)
    R0 = jnp.stack([b1, b2, b3], axis=-1)
    t0 = jax.random.normal(k_t, (bs, 3), jnp.float32) * 0.1 + jnp.array([0., 0., 1.])
    init_pose = jnp.concatenate([R0, t0[:, :, None]], axis=-1)      # (bs, 3, 4)
    init_scale = jnp.abs(jax.random.normal(k_s, (bs, 3), jnp.float32)) + 0.5

    out = georef_forward(x, tfd_kps, init_pose, init_scale, params)
    jax.block_until_ready(out)

    assert out["pose_0"].shape == (bs, 3, 4)
    assert out["scale_0"].shape == (bs, 3)
    assert bool(jnp.all(jnp.isfinite(out["pose_0"])))
    assert bool(jnp.all(jnp.isfinite(out["scale_0"])))
    print("KERNEL_OK")
</pallas_src>

<mosaic_0001>
module attributes {stable_mosaic.version = 11 : i64} {
  func.func @_georef_kernel(%arg0: i32, %arg1: memref<1152x3xbf16, #tpu.memory_space<vmem>>, %arg2: memref<8x3xf32, #tpu.memory_space<vmem>>, %arg3: memref<3x128xbf16, #tpu.memory_space<vmem>>, %arg4: memref<1x128xf32, #tpu.memory_space<vmem>>, %arg5: memref<128x256xbf16, #tpu.memory_space<vmem>>, %arg6: memref<1x256xf32, #tpu.memory_space<vmem>>, %arg7: memref<256x256xbf16, #tpu.memory_space<vmem>>, %arg8: memref<3x256xf32, #tpu.memory_space<vmem>>, %arg9: memref<1x256xf32, #tpu.memory_space<vmem>>, %arg10: memref<128x64xbf16, #tpu.memory_space<vmem>>, %arg11: memref<1x64xf32, #tpu.memory_space<vmem>>, %arg12: memref<192x128xbf16, #tpu.memory_space<vmem>>, %arg13: memref<1x128xf32, #tpu.memory_space<vmem>>, %arg14: memref<8x128xf32, #tpu.memory_space<vmem>>) attributes {dimension_semantics = [#tpu.dimension_semantics<parallel>], iteration_bounds = array<i64: 1>, scalar_prefetch = 0 : i64, scratch_operands = 0 : i64, tpu.core_type = #tpu.core_type<tc>, window_params = [{transform_indices = @transform_0, window_bounds = array<i64: 1152, 3>}, {transform_indices = @transform_1, window_bounds = array<i64: 8, 3>}, {pipeline_mode = #tpu.pipeline_mode<synchronous>, transform_indices = @transform_2, window_bounds = array<i64: 3, 128>}, {pipeline_mode = #tpu.pipeline_mode<synchronous>, transform_indices = @transform_3, window_bounds = array<i64: 1, 128>}, {pipeline_mode = #tpu.pipeline_mode<synchronous>, transform_indices = @transform_4, window_bounds = array<i64: 128, 256>}, {pipeline_mode = #tpu.pipeline_mode<synchronous>, transform_indices = @transform_5, window_bounds = array<i64: 1, 256>}, {pipeline_mode = #tpu.pipeline_mode<synchronous>, transform_indices = @transform_6, window_bounds = array<i64: 256, 256>}, {pipeline_mode = #tpu.pipeline_mode<synchronous>, transform_indices = @transform_7, window_bounds = array<i64: 3, 256>}, {pipeline_mode = #tpu.pipeline_mode<synchronous>, transform_indices = @transform_8, window_bounds = array<i64: 1, 256>}, {pipeline_mode = #tpu.pipeline_mode<synchronous>, transform_indices = @transform_9, window_bounds = array<i64: 128, 64>}, {pipeline_mode = #tpu.pipeline_mode<synchronous>, transform_indices = @transform_10, window_bounds = array<i64: 1, 64>}, {pipeline_mode = #tpu.pipeline_mode<synchronous>, transform_indices = @transform_11, window_bounds = array<i64: 192, 128>}, {pipeline_mode = #tpu.pipeline_mode<synchronous>, transform_indices = @transform_12, window_bounds = array<i64: 1, 128>}, {transform_indices = @transform_13, window_bounds = array<i64: 8, 128>}]} {
    %c0 = arith.constant 0 : index
    %c0_0 = arith.constant 0 : index
    %0 = vector.load %arg1[%c0, %c0_0] : memref<1152x3xbf16, #tpu.memory_space<vmem>>, vector<1152x3xbf16>
    %c0_1 = arith.constant 0 : index
    %c0_2 = arith.constant 0 : index
    %1 = vector.load %arg3[%c0_1, %c0_2] : memref<3x128xbf16, #tpu.memory_space<vmem>>, vector<3x128xbf16>
    %cst = arith.constant dense<0.000000e+00> : vector<1152x128xf32>
    %2 = tpu.matmul %0, %1, %cst {dimension_numbers = #tpu.dot_dimension_numbers<[1], [0], [0], [1], [0, 0, 1, 1], [], []>} : vector<1152x3xbf16>, vector<3x128xbf16>, vector<1152x128xf32> -> vector<1152x128xf32>
    %c0_3 = arith.constant 0 : index
    %c0_4 = arith.constant 0 : index
    %3 = vector.load %arg4[%c0_3, %c0_4] : memref<1x128xf32, #tpu.memory_space<vmem>>, vector<1x128xf32>
    %4 = vector.broadcast %3 : vector<1x128xf32> to vector<1152x128xf32>
    %5 = arith.addf %2, %4 : vector<1152x128xf32>
    %cst_5 = arith.constant 0.000000e+00 : f32
    %6 = vector.broadcast %cst_5 : f32 to vector<1152x128xf32>
    %7 = arith.maximumf %5, %6 : vector<1152x128xf32>
    %8 = arith.truncf %7 : vector<1152x128xf32> to vector<1152x128xbf16>
    %c0_6 = arith.constant 0 : index
    %c0_7 = arith.constant 0 : index
    %9 = vector.load %arg5[%c0_6, %c0_7] : memref<128x256xbf16, #tpu.memory_space<vmem>>, vector<128x256xbf16>
    %cst_8 = arith.constant dense<0.000000e+00> : vector<1152x256xf32>
    %10 = tpu.matmul %8, %9, %cst_8 {dimension_numbers = #tpu.dot_dimension_numbers<[1], [0], [0], [1], [0, 0, 1, 1], [], []>} : vector<1152x128xbf16>, vector<128x256xbf16>, vector<1152x256xf32> -> vector<1152x256xf32>
    %c0_9 = arith.constant 0 : index
    %c0_10 = arith.constant 0 : index
    %11 = vector.load %arg6[%c0_9, %c0_10] : memref<1x256xf32, #tpu.memory_space<vmem>>, vector<1x256xf32>
    %12 = vector.broadcast %11 : vector<1x256xf32> to vector<1152x256xf32>
    %13 = arith.addf %10, %12 : vector<1152x256xf32>
    %cst_11 = arith.constant 0.000000e+00 : f32
    %14 = vector.broadcast %cst_11 : f32 to vector<1152x256xf32>
    %15 = arith.maximumf %13, %14 : vector<1152x256xf32>
    %16 = arith.truncf %15 : vector<1152x256xf32> to vector<1152x256xbf16>
    %17 = vector.extract_strided_slice %16 {offsets = [0, 0], sizes = [1152, 128], strides = [1, 1]} : vector<1152x256xbf16> to vector<1152x128xbf16>
    %c0_12 = arith.constant 0 : index
    %c0_13 = arith.constant 0 : index
    %18 = vector.load %arg7[%c0_12, %c0_13] : memref<256x256xbf16, #tpu.memory_space<vmem>>, vector<128x128xbf16>
    %cst_14 = arith.constant dense<0.000000e+00> : vector<1152x128xf32>
    %19 = tpu.matmul %17, %18, %cst_14 {dimension_numbers = #tpu.dot_dimension_numbers<[1], [0], [0], [1], [0, 0, 1, 1], [], []>} : vector<1152x128xbf16>, vector<128x128xbf16>, vector<1152x128xf32> -> vector<1152x128xf32>
    %20 = vector.extract_strided_slice %16 {offsets = [0, 128], sizes = [1152, 128], strides = [1, 1]} : vector<1152x256xbf16> to vector<1152x128xbf16>
    %c128 = arith.constant 128 : index
    %c128_15 = arith.constant 128 : index
    %21 = vector.load %arg7[%c128, %c128_15] : memref<256x256xbf16, #tpu.memory_space<vmem>>, vector<128x128xbf16>
    %cst_16 = arith.constant dense<0.000000e+00> : vector<1152x128xf32>
    %22 = tpu.matmul %20, %21, %cst_16 {dimension_numbers = #tpu.dot_dimension_numbers<[1], [0], [0], [1], [0, 0, 1, 1], [], []>} : vector<1152x128xbf16>, vector<128x128xbf16>, vector<1152x128xf32> -> vector<1152x128xf32>
    %23 = tpu.concatenate %19, %22 in 1 : vector<1152x128xf32>, vector<1152x128xf32> -> vector<1152x256xf32>
    %c0_17 = arith.constant 0 : index
    %c0_18 = arith.constant 0 : index
    %24 = vector.load %arg2[%c0_17, %c0_18] : memref<8x3xf32, #tpu.memory_space<vmem>>, vector<8x3xf32>
    %c0_19 = arith.constant 0 : index
    %c0_20 = arith.constant 0 : index
    %25 = vector.load %arg8[%c0_19, %c0_20] : memref<3x256xf32, #tpu.memory_space<vmem>>, vector<3x256xf32>
    %cst_21 = arith.constant dense<0.000000e+00> : vector<8x256xf32>
    %26 = tpu.matmul %24, %25, %cst_21 {dimension_numbers = #tpu.dot_dimension_numbers<[1], [0], [0], [1], [0, 0, 1, 1], [], []>} : vector<8x3xf32>, vector<3x256xf32>, vector<8x256xf32> -> vector<8x256xf32>
    %c0_22 = arith.constant 0 : index
    %c0_23 = arith.constant 0 : index
    %27 = vector.load %arg9[%c0_22, %c0_23] : memref<1x256xf32, #tpu.memory_space<vmem>>, vector<1x256xf32>
    %28 = vector.broadcast %27 : vector<1x256xf32> to vector<8x256xf32>
    %29 = arith.addf %26, %28 : vector<8x256xf32>
    %30 = vector.shape_cast %23 : vector<1152x256xf32> to vector<8x144x256xf32>
    %31 = vector.shape_cast %29 : vector<8x256xf32> to vector<8x1x256xf32>
    %32 = vector.broadcast %31 : vector<8x1x256xf32> to vector<8x144x256xf32>
    %33 = arith.addf %30, %32 : vector<8x144x256xf32>
    %cst_24 = arith.constant 0.000000e+00 : f32
    %34 = vector.broadcast %cst_24 : f32 to vector<8x144x256xf32>
    %35 = arith.maximumf %33, %34 : vector<8x144x256xf32>
    %36 = vector.extract_strided_slice %35 {offsets = [0, 0, 0], sizes = [8, 144, 128], strides = [1, 1, 1]} : vector<8x144x256xf32> to vector<8x144x128xf32>
    %37 = vector.shape_cast %36 : vector<8x144x128xf32> to vector<1152x128xf32>
    %38 = arith.truncf %37 : vector<1152x128xf32> to vector<1152x128xbf16>
    %c0_25 = arith.constant 0 : index
    %c0_26 = arith.constant 0 : index
    %39 = vector.load %arg10[%c0_25, %c0_26] : memref<128x64xbf16, #tpu.memory_space<vmem>>, vector<128x64xbf16>
    %cst_27 = arith.constant dense<0.000000e+00> : vector<1152x64xf32>
    %40 = tpu.matmul %38, %39, %cst_27 {dimension_numbers = #tpu.dot_dimension_numbers<[1], [0], [0], [1], [0, 0, 1, 1], [], []>} : vector<1152x128xbf16>, vector<128x64xbf16>, vector<1152x64xf32> -> vector<1152x64xf32>
    %c0_28 = arith.constant 0 : index
    %c0_29 = arith.constant 0 : index
    %41 = vector.load %arg11[%c0_28, %c0_29] : memref<1x64xf32, #tpu.memory_space<vmem>>, vector<1x64xf32>
    %42 = vector.broadcast %41 : vector<1x64xf32> to vector<1152x64xf32>
    %43 = arith.addf %40, %42 : vector<1152x64xf32>
    %cst_30 = arith.constant 0.000000e+00 : f32
    %44 = vector.broadcast %cst_30 : f32 to vector<1152x64xf32>
    %45 = arith.maximumf %43, %44 : vector<1152x64xf32>
    %46 = vector.shape_cast %45 : vector<1152x64xf32> to vector<8x144x64xf32>
    %cst_31 = arith.constant dense<0xFF800000> : vector<8x64xf32>
    %47 = vector.multi_reduction <maximumf>, %46, %cst_31 [1] : vector<8x144x64xf32> to vector<8x64xf32>
    %48 = vector.extract_strided_slice %35 {offsets = [0, 0, 128], sizes = [8, 144, 128], strides = [1, 1, 1]} : vector<8x144x256xf32> to vector<8x144x128xf32>
    %cst_32 = arith.constant dense<0xFF800000> : vector<8x128xf32>
    %49 = vector.multi_reduction <maximumf>, %48, %cst_32 [1] : vector<8x144x128xf32> to vector<8x128xf32>
    %50 = arith.truncf %47 : vector<8x64xf32> to vector<8x64xbf16>
    %51 = arith.truncf %49 : vector<8x128xf32> to vector<8x128xbf16>
    %52 = tpu.concatenate %50, %51 in 1 : vector<8x64xbf16>, vector<8x128xbf16> -> vector<8x192xbf16>
    %c0_33 = arith.constant 0 : index
    %c0_34 = arith.constant 0 : index
    %53 = vector.load %arg12[%c0_33, %c0_34] : memref<192x128xbf16, #tpu.memory_space<vmem>>, vector<192x128xbf16>
    %cst_35 = arith.constant dense<0.000000e+00> : vector<8x128xf32>
    %54 = tpu.matmul %52, %53, %cst_35 {dimension_numbers = #tpu.dot_dimension_numbers<[1], [0], [0], [1], [0, 0, 1, 1], [], []>} : vector<8x192xbf16>, vector<192x128xbf16>, vector<8x128xf32> -> vector<8x128xf32>
    %c0_36 = arith.constant 0 : index
    %c0_37 = arith.constant 0 : index
    %55 = vector.load %arg13[%c0_36, %c0_37] : memref<1x128xf32, #tpu.memory_space<vmem>>, vector<1x128xf32>
    %56 = vector.broadcast %55 : vector<1x128xf32> to vector<8x128xf32>
    %57 = arith.addf %54, %56 : vector<8x128xf32>
    %c0_38 = arith.constant 0 : index
    %c0_39 = arith.constant 0 : index
    %58 = vector.load %arg14[%c0_38, %c0_39] : memref<8x128xf32, #tpu.memory_space<vmem>>, vector<8x128xf32>
    tpu.vector_store %arg14[%c0_38, %c0_39], %57 {strides = array<i32>} : memref<8x128xf32, #tpu.memory_space<vmem>>, vector<8x128xf32>,
    return
  }
  func.func @transform_0(%arg0: i32) -> (i32, i32) {
    %c0_i32 = arith.constant 0 : i32
    %c0_i32_0 = arith.constant 0 : i32
    return %arg0, %c0_i32 : i32, i32
  }
  func.func @transform_1(%arg0: i32) -> (i32, i32) {
    %c0_i32 = arith.constant 0 : i32
    %c0_i32_0 = arith.constant 0 : i32
    return %arg0, %c0_i32 : i32, i32
  }
  func.func @transform_2(%arg0: i32) -> (i32, i32) {
    %c0_i32 = arith.constant 0 : i32
    %c0_i32_0 = arith.constant 0 : i32
    %c0_i32_1 = arith.constant 0 : i32
    return %c0_i32, %c0_i32_0 : i32, i32
  }
  func.func @transform_3(%arg0: i32) -> (i32, i32) {
    %c0_i32 = arith.constant 0 : i32
    %c0_i32_0 = arith.constant 0 : i32
    %c0_i32_1 = arith.constant 0 : i32
    return %c0_i32, %c0_i32_0 : i32, i32
  }
  func.func @transform_4(%arg0: i32) -> (i32, i32) {
    %c0_i32 = arith.constant 0 : i32
    %c0_i32_0 = arith.constant 0 : i32
    %c0_i32_1 = arith.constant 0 : i32
    return %c0_i32, %c0_i32_0 : i32, i32
  }
  func.func @transform_5(%arg0: i32) -> (i32, i32) {
    %c0_i32 = arith.constant 0 : i32
    %c0_i32_0 = arith.constant 0 : i32
    %c0_i32_1 = arith.constant 0 : i32
    return %c0_i32, %c0_i32_0 : i32, i32
  }
  func.func @transform_6(%arg0: i32) -> (i32, i32) {
    %c0_i32 = arith.constant 0 : i32
    %c0_i32_0 = arith.constant 0 : i32
    %c0_i32_1 = arith.constant 0 : i32
    return %c0_i32, %c0_i32_0 : i32, i32
  }
  func.func @transform_7(%arg0: i32) -> (i32, i32) {
    %c0_i32 = arith.constant 0 : i32
    %c0_i32_0 = arith.constant 0 : i32
    %c0_i32_1 = arith.constant 0 : i32
    return %c0_i32, %c0_i32_0 : i32, i32
  }
  func.func @transform_8(%arg0: i32) -> (i32, i32) {
    %c0_i32 = arith.constant 0 : i32
    %c0_i32_0 = arith.constant 0 : i32
    %c0_i32_1 = arith.constant 0 : i32
    return %c0_i32, %c0_i32_0 : i32, i32
  }
  func.func @transform_9(%arg0: i32) -> (i32, i32) {
    %c0_i32 = arith.constant 0 : i32
    %c0_i32_0 = arith.constant 0 : i32
    %c0_i32_1 = arith.constant 0 : i32
    return %c0_i32, %c0_i32_0 : i32, i32
  }
  func.func @transform_10(%arg0: i32) -> (i32, i32) {
    %c0_i32 = arith.constant 0 : i32
    %c0_i32_0 = arith.constant 0 : i32
    %c0_i32_1 = arith.constant 0 : i32
    return %c0_i32, %c0_i32_0 : i32, i32
  }
  func.func @transform_11(%arg0: i32) -> (i32, i32) {
    %c0_i32 = arith.constant 0 : i32
    %c0_i32_0 = arith.constant 0 : i32
    %c0_i32_1 = arith.constant 0 : i32
    return %c0_i32, %c0_i32_0 : i32, i32
  }
  func.func @transform_12(%arg0: i32) -> (i32, i32) {
    %c0_i32 = arith.constant 0 : i32
    %c0_i32_0 = arith.constant 0 : i32
    %c0_i32_1 = arith.constant 0 : i32
    return %c0_i32, %c0_i32_0 : i32, i32
  }
  func.func @transform_13(%arg0: i32) -> (i32, i32) {
    %c0_i32 = arith.constant 0 : i32
    %c0_i32_0 = arith.constant 0 : i32
    return %arg0, %c0_i32 : i32, i32
  }
}

</mosaic_0001>

<llo_original>
// kernel: georef_forward.1
$region0: #{georef_forward.1}
  #allocation0 [shape = 'u32[]', space=smem, size = 0x4, offset = 0x4, fixed_abs, tag = 'smem constant byte address 0x4 - core index']
  #allocation1 [shape = 'u32[72,128]{1,0:T(1,128)}', space=vmem, size = 0x9000, scoped, tag = 'internal scratch']
  %s0 = inlined_call_operand.vmem [shape: bf16[1152,3], index: 0, kind: input, shape index: {}]
  %s1 = inlined_call_operand.vmem [shape: f32[8,3], index: 1, kind: input, shape index: {}]
  %s2 = inlined_call_operand.vmem [shape: bf16[3,128], index: 2, kind: input, shape index: {}]
  %s3 = inlined_call_operand.vmem [shape: f32[1,128], index: 3, kind: input, shape index: {}]
  %s4 = inlined_call_operand.vmem [shape: bf16[128,256], index: 4, kind: input, shape index: {}]
  %s5 = inlined_call_operand.vmem [shape: f32[1,256], index: 5, kind: input, shape index: {}]
  %s6 = inlined_call_operand.vmem [shape: bf16[256,256], index: 6, kind: input, shape index: {}]
  %s7 = inlined_call_operand.vmem [shape: f32[3,256], index: 7, kind: input, shape index: {}]
  %s8 = inlined_call_operand.vmem [shape: f32[1,256], index: 8, kind: input, shape index: {}]
  %s9 = inlined_call_operand.vmem [shape: bf16[128,64], index: 9, kind: input, shape index: {}]
  %s10 = inlined_call_operand.vmem [shape: f32[1,64], index: 10, kind: input, shape index: {}]
  %s11 = inlined_call_operand.vmem [shape: bf16[192,128], index: 11, kind: input, shape index: {}]
  %s12 = inlined_call_operand.vmem [shape: f32[1,128], index: 12, kind: input, shape index: {}]
  %s13 = inlined_call_operand.vmem [shape: f32[8,128], index: 13, kind: output, shape index: {}]
  %s14 = sld [smem:[#allocation0]]
  $region62: #{georef_forward.1} parent=0
    _
  %s16 = ssub.s32 1, %s14
  %s17 = scalar_select 0, %s16, %s14
  // Predicated region
  $region2: #{georef_forward.1} parent=0 // pred_check
    _
  $region3: #{georef_forward.1} parent=0 // pred_check_branch
    %19 = sbr.rel (0) target = $region5
  $region4: #{georef_forward.1} parent=0 // pred_region
    _
  $region5: #{georef_forward.1} parent=0 // pred_fallthru
    _
  // Predicated region
  $region6: #{georef_forward.1} parent=0 // pred_check
    _
  $region7: #{georef_forward.1} parent=0 // pred_check_branch
    %21 = sbr.rel (0) target = $region9
  $region8: #{georef_forward.1} parent=0 // pred_region
    _
  $region9: #{georef_forward.1} parent=0 // pred_fallthru
    _
  // Predicated region
  $region10: #{georef_forward.1} parent=0 // pred_check
    _
  $region11: #{georef_forward.1} parent=0 // pred_check_branch
    %23 = sbr.rel (0) target = $region13
  $region12: #{georef_forward.1} parent=0 // pred_region
    _
  $region13: #{georef_forward.1} parent=0 // pred_fallthru
    _
  // Predicated region
  $region14: #{georef_forward.1} parent=0 // pred_check
    _
  $region15: #{georef_forward.1} parent=0 // pred_check_branch
    %25 = sbr.rel (0) target = $region17
  $region16: #{georef_forward.1} parent=0 // pred_region
    _
  $region17: #{georef_forward.1} parent=0 // pred_fallthru
    _
  // Predicated region
  $region18: #{georef_forward.1} parent=0 // pred_check
    _
  $region19: #{georef_forward.1} parent=0 // pred_check_branch
    %27 = sbr.rel (0) target = $region21
  $region20: #{georef_forward.1} parent=0 // pred_region
    _
  $region21: #{georef_forward.1} parent=0 // pred_fallthru
    _
  // Predicated region
  $region22: #{georef_forward.1} parent=0 // pred_check
    _
  $region23: #{georef_forward.1} parent=0 // pred_check_branch
    %29 = sbr.rel (0) target = $region25
  $region24: #{georef_forward.1} parent=0 // pred_region
    _
  $region25: #{georef_forward.1} parent=0 // pred_fallthru
    _
  // Predicated region
  $region26: #{georef_forward.1} parent=0 // pred_check
    _
  $region27: #{georef_forward.1} parent=0 // pred_check_branch
    %31 = sbr.rel (0) target = $region29
  $region28: #{georef_forward.1} parent=0 // pred_region
    _
  $region29: #{georef_forward.1} parent=0 // pred_fallthru
    _
  // Predicated region
  $region30: #{georef_forward.1} parent=0 // pred_check
    _
  $region31: #{georef_forward.1} parent=0 // pred_check_branch
    %33 = sbr.rel (0) target = $region33
  $region32: #{georef_forward.1} parent=0 // pred_region
    _
  $region33: #{georef_forward.1} parent=0 // pred_fallthru
    _
  // Predicated region
  $region34: #{georef_forward.1} parent=0 // pred_check
    _
  $region35: #{georef_forward.1} parent=0 // pred_check_branch
    %35 = sbr.rel (0) target = $region37
  $region36: #{georef_forward.1} parent=0 // pred_region
    _
  $region37: #{georef_forward.1} parent=0 // pred_fallthru
    _
  // Predicated region
  $region38: #{georef_forward.1} parent=0 // pred_check
    _
  $region39: #{georef_forward.1} parent=0 // pred_check_branch
    %37 = sbr.rel (0) target = $region41
  $region40: #{georef_forward.1} parent=0 // pred_region
    _
  $region41: #{georef_forward.1} parent=0 // pred_fallthru
    _
  // Predicated region
  $region42: #{georef_forward.1} parent=0 // pred_check
    _
  $region43: #{georef_forward.1} parent=0 // pred_check_branch
    %39 = sbr.rel (0) target = $region45
  $region44: #{georef_forward.1} parent=0 // pred_region
    _
  $region45: #{georef_forward.1} parent=0 // pred_fallthru
    _
  // Predicated region
  $region46: #{georef_forward.1} parent=0 // pred_check
    _
  $region47: #{georef_forward.1} parent=0 // pred_check_branch
    %41 = sbr.rel (0) target = $region49
  $region48: #{georef_forward.1} parent=0 // pred_region
    _
  $region49: #{georef_forward.1} parent=0 // pred_fallthru
    _
  // Predicated region
  $region50: #{georef_forward.1} parent=0 // pred_check
    _
  $region51: #{georef_forward.1} parent=0 // pred_check_branch
    %43 = sbr.rel (0) target = $region53
  $region52: #{georef_forward.1} parent=0 // pred_region
    _
  $region53: #{georef_forward.1} parent=0 // pred_fallthru
    _
  %v45 = vld [vmem:[%s0] sm:$0xf]
  %v46 = vld [vmem:[%s0 + $0x4] sm:$0xf]
  %v47 = vld [vmem:[%s0 + $0x8] sm:$0xf]
  %v48 = vld [vmem:[%s0 + $0xc] sm:$0xf]
  %v49 = vld [vmem:[%s0 + $0x10] sm:$0xf]
  %v50 = vld [vmem:[%s0 + $0x14] sm:$0xf]
  %v51 = vld [vmem:[%s0 + $0x18] sm:$0xf]
  %v52 = vld [vmem:[%s0 + $0x1c] sm:$0xf]
  %v53 = vld [vmem:[%s0 + $0x20] sm:$0xf]
  %v54 = vld [vmem:[%s0 + $0x24] sm:$0xf]
  %v55 = vld [vmem:[%s0 + $0x28] sm:$0xf]
  %v56 = vld [vmem:[%s0 + $0x2c] sm:$0xf]
  %v57 = vld [vmem:[%s0 + $0x30] sm:$0xf]
  %v58 = vld [vmem:[%s0 + $0x34] sm:$0xf]
  %v59 = vld [vmem:[%s0 + $0x38] sm:$0xf]
  %v60 = vld [vmem:[%s0 + $0x3c] sm:$0xf]
  %v61 = vld [vmem:[%s0 + $0x40] sm:$0xf]
  %v62 = vld [vmem:[%s0 + $0x44] sm:$0xf]
  %v63 = vld [vmem:[%s0 + $0x48] sm:$0xf]
  %v64 = vld [vmem:[%s0 + $0x4c] sm:$0xf]
  %v65 = vld [vmem:[%s0 + $0x50] sm:$0xf]
  %v66 = vld [vmem:[%s0 + $0x54] sm:$0xf]
  %v67 = vld [vmem:[%s0 + $0x58] sm:$0xf]
  %v68 = vld [vmem:[%s0 + $0x5c] sm:$0xf]
  %v69 = vld [vmem:[%s0 + $0x60] sm:$0xf]
  %v70 = vld [vmem:[%s0 + $0x64] sm:$0xf]
  %v71 = vld [vmem:[%s0 + $0x68] sm:$0xf]
  %v72 = vld [vmem:[%s0 + $0x6c] sm:$0xf]
  %v73 = vld [vmem:[%s0 + $0x70] sm:$0xf]
  %v74 = vld [vmem:[%s0 + $0x74] sm:$0xf]
  %v75 = vld [vmem:[%s0 + $0x78] sm:$0xf]
  %v76 = vld [vmem:[%s0 + $0x7c] sm:$0xf]
  %v77 = vld [vmem:[%s0 + $0x80] sm:$0xf]
  %v78 = vld [vmem:[%s0 + $0x84] sm:$0xf]
  %v79 = vld [vmem:[%s0 + $0x88] sm:$0xf]
  %v80 = vld [vmem:[%s0 + $0x8c] sm:$0xf]
  %v81 = vld [vmem:[%s0 + $0x90] sm:$0xf]
  %v82 = vld [vmem:[%s0 + $0x94] sm:$0xf]
  %v83 = vld [vmem:[%s0 + $0x98] sm:$0xf]
  %v84 = vld [vmem:[%s0 + $0x9c] sm:$0xf]
  %v85 = vld [vmem:[%s0 + $0xa0] sm:$0xf]
  %v86 = vld [vmem:[%s0 + $0xa4] sm:$0xf]
  %v87 = vld [vmem:[%s0 + $0xa8] sm:$0xf]
  %v88 = vld [vmem:[%s0 + $0xac] sm:$0xf]
  %v89 = vld [vmem:[%s0 + $0xb0] sm:$0xf]
  %v90 = vld [vmem:[%s0 + $0xb4] sm:$0xf]
  %v91 = vld [vmem:[%s0 + $0xb8] sm:$0xf]
  %v92 = vld [vmem:[%s0 + $0xbc] sm:$0xf]
  %v93 = vld [vmem:[%s0 + $0xc0] sm:$0xf]
  %v94 = vld [vmem:[%s0 + $0xc4] sm:$0xf]
  %v95 = vld [vmem:[%s0 + $0xc8] sm:$0xf]
  %v96 = vld [vmem:[%s0 + $0xcc] sm:$0xf]
  %v97 = vld [vmem:[%s0 + $0xd0] sm:$0xf]
  %v98 = vld [vmem:[%s0 + $0xd4] sm:$0xf]
  %v99 = vld [vmem:[%s0 + $0xd8] sm:$0xf]
  %v100 = vld [vmem:[%s0 + $0xdc] sm:$0xf]
  %v101 = vld [vmem:[%s0 + $0xe0] sm:$0xf]
  %v102 = vld [vmem:[%s0 + $0xe4] sm:$0xf]
  %v103 = vld [vmem:[%s0 + $0xe8] sm:$0xf]
  %v104 = vld [vmem:[%s0 + $0xec] sm:$0xf]
  %v105 = vld [vmem:[%s0 + $0xf0] sm:$0xf]
  %v106 = vld [vmem:[%s0 + $0xf4] sm:$0xf]
  %v107 = vld [vmem:[%s0 + $0xf8] sm:$0xf]
  %v108 = vld [vmem:[%s0 + $0xfc] sm:$0xf]
  %v109 = vld [vmem:[%s0 + $0x100] sm:$0xf]
  %v110 = vld [vmem:[%s0 + $0x104] sm:$0xf]
  %v111 = vld [vmem:[%s0 + $0x108] sm:$0xf]
  %v112 = vld [vmem:[%s0 + $0x10c] sm:$0xf]
  %v113 = vld [vmem:[%s0 + $0x110] sm:$0xf]
  %v114 = vld [vmem:[%s0 + $0x114] sm:$0xf]
  %v115 = vld [vmem:[%s0 + $0x118] sm:$0xf]
  %v116 = vld [vmem:[%s0 + $0x11c] sm:$0xf]
  %v117 = vld [vmem:[%s0 + $0x120] sm:$0xf]
  %v118 = vld [vmem:[%s0 + $0x124] sm:$0xf]
  %v119 = vld [vmem:[%s0 + $0x128] sm:$0xf]
  %v120 = vld [vmem:[%s0 + $0x12c] sm:$0xf]
  %v121 = vld [vmem:[%s0 + $0x130] sm:$0xf]
  %v122 = vld [vmem:[%s0 + $0x134] sm:$0xf]
  %v123 = vld [vmem:[%s0 + $0x138] sm:$0xf]
  %v124 = vld [vmem:[%s0 + $0x13c] sm:$0xf]
  %v125 = vld [vmem:[%s0 + $0x140] sm:$0xf]
  %v126 = vld [vmem:[%s0 + $0x144] sm:$0xf]
  %v127 = vld [vmem:[%s0 + $0x148] sm:$0xf]
  %v128 = vld [vmem:[%s0 + $0x14c] sm:$0xf]
  %v129 = vld [vmem:[%s0 + $0x150] sm:$0xf]
  %v130 = vld [vmem:[%s0 + $0x154] sm:$0xf]
  %v131 = vld [vmem:[%s0 + $0x158] sm:$0xf]
  %v132 = vld [vmem:[%s0 + $0x15c] sm:$0xf]
  %v133 = vld [vmem:[%s0 + $0x160] sm:$0xf]
  %v134 = vld [vmem:[%s0 + $0x164] sm:$0xf]
  %v135 = vld [vmem:[%s0 + $0x168] sm:$0xf]
  %v136 = vld [vmem:[%s0 + $0x16c] sm:$0xf]
  %v137 = vld [vmem:[%s0 + $0x170] sm:$0xf]
  %v138 = vld [vmem:[%s0 + $0x174] sm:$0xf]
  %v139 = vld [vmem:[%s0 + $0x178] sm:$0xf]
  %v140 = vld [vmem:[%s0 + $0x17c] sm:$0xf]
  %v141 = vld [vmem:[%s0 + $0x180] sm:$0xf]
  %v142 = vld [vmem:[%s0 + $0x184] sm:$0xf]
  %v143 = vld [vmem:[%s0 + $0x188] sm:$0xf]
  %v144 = vld [vmem:[%s0 + $0x18c] sm:$0xf]
  %v145 = vld [vmem:[%s0 + $0x190] sm:$0xf]
  %v146 = vld [vmem:[%s0 + $0x194] sm:$0xf]
  %v147 = vld [vmem:[%s0 + $0x198] sm:$0xf]
  %v148 = vld [vmem:[%s0 + $0x19c] sm:$0xf]
  %v149 = vld [vmem:[%s0 + $0x1a0] sm:$0xf]
  %v150 = vld [vmem:[%s0 + $0x1a4] sm:$0xf]
  %v151 = vld [vmem:[%s0 + $0x1a8] sm:$0xf]
  %v152 = vld [vmem:[%s0 + $0x1ac] sm:$0xf]
  %v153 = vld [vmem:[%s0 + $0x1b0] sm:$0xf]
  %v154 = vld [vmem:[%s0 + $0x1b4] sm:$0xf]
  %v155 = vld [vmem:[%s0 + $0x1b8] sm:$0xf]
  %v156 = vld [vmem:[%s0 + $0x1bc] sm:$0xf]
  %v157 = vld [vmem:[%s0 + $0x1c0] sm:$0xf]
  %v158 = vld [vmem:[%s0 + $0x1c4] sm:$0xf]
  %v159 = vld [vmem:[%s0 + $0x1c8] sm:$0xf]
  %v160 = vld [vmem:[%s0 + $0x1cc] sm:$0xf]
  %v161 = vld [vmem:[%s0 + $0x1d0] sm:$0xf]
  %v162 = vld [vmem:[%s0 + $0x1d4] sm:$0xf]
  %v163 = vld [vmem:[%s0 + $0x1d8] sm:$0xf]
  %v164 = vld [vmem:[%s0 + $0x1dc] sm:$0xf]
  %v165 = vld [vmem:[%s0 + $0x1e0] sm:$0xf]
  %v166 = vld [vmem:[%s0 + $0x1e4] sm:$0xf]
  %v167 = vld [vmem:[%s0 + $0x1e8] sm:$0xf]
  %v168 = vld [vmem:[%s0 + $0x1ec] sm:$0xf]
  %v169 = vld [vmem:[%s0 + $0x1f0] sm:$0xf]
  %v170 = vld [vmem:[%s0 + $0x1f4] sm:$0xf]
  %v171 = vld [vmem:[%s0 + $0x1f8] sm:$0xf]
  %v172 = vld [vmem:[%s0 + $0x1fc] sm:$0xf]
  %v173 = vld [vmem:[%s0 + $0x200] sm:$0xf]
  %v174 = vld [vmem:[%s0 + $0x204] sm:$0xf]
  %v175 = vld [vmem:[%s0 + $0x208] sm:$0xf]
  %v176 = vld [vmem:[%s0 + $0x20c] sm:$0xf]
  %v177 = vld [vmem:[%s0 + $0x210] sm:$0xf]
  %v178 = vld [vmem:[%s0 + $0x214] sm:$0xf]
  %v179 = vld [vmem:[%s0 + $0x218] sm:$0xf]
  %v180 = vld [vmem:[%s0 + $0x21c] sm:$0xf]
  %v181 = vld [vmem:[%s0 + $0x220] sm:$0xf]
  %v182 = vld [vmem:[%s0 + $0x224] sm:$0xf]
  %v183 = vld [vmem:[%s0 + $0x228] sm:$0xf]
  %v184 = vld [vmem:[%s0 + $0x22c] sm:$0xf]
  %v185 = vld [vmem:[%s0 + $0x230] sm:$0xf]
  %v186 = vld [vmem:[%s0 + $0x234] sm:$0xf]
  %v187 = vld [vmem:[%s0 + $0x238] sm:$0xf]
  %v188 = vld [vmem:[%s0 + $0x23c] sm:$0xf]
  %v189 = vld [vmem:[%s2] sm:$0x3]
  %v190 = vld [vmem:[%s3] sm:$0x1]
  %v192 = vperm.slane %v190, 0
  %v338 = vunpack.c.l.b16 %v45
  %v339 = vunpack.c.l.b16 %v46
  %v340 = vunpack.c.l.b16 %v47
  %v341 = vunpack.c.l.b16 %v48
  %v342 = vunpack.c.l.b16 %v49
  %v343 = vunpack.c.l.b16 %v50
  %v344 = vunpack.c.l.b16 %v51
  %v345 = vunpack.c.l.b16 %v52
  %v346 = vunpack.c.l.b16 %v53
  %v347 = vunpack.c.l.b16 %v54
  %v348 = vunpack.c.l.b16 %v55
  %v349 = vunpack.c.l.b16 %v56
  %v350 = vunpack.c.l.b16 %v57
  %v351 = vunpack.c.l.b16 %v58
  %v352 = vunpack.c.l.b16 %v59
  %v353 = vunpack.c.l.b16 %v60
  %v354 = vunpack.c.l.b16 %v61
  %v355 = vunpack.c.l.b16 %v62
  %v356 = vunpack.c.l.b16 %v63
  %v357 = vunpack.c.l.b16 %v64
  %v358 = vunpack.c.l.b16 %v65
  %v359 = vunpack.c.l.b16 %v66
  %v360 = vunpack.c.l.b16 %v67
  %v361 = vunpack.c.l.b16 %v68
  %v362 = vunpack.c.l.b16 %v69
  %v363 = vunpack.c.l.b16 %v70
  %v364 = vunpack.c.l.b16 %v71
  %v365 = vunpack.c.l.b16 %v72
  %v366 = vunpack.c.l.b16 %v73
  %v367 = vunpack.c.l.b16 %v74
  %v368 = vunpack.c.l.b16 %v75
  %v369 = vunpack.c.l.b16 %v76
  %v370 = vunpack.c.l.b16 %v77
  %v371 = vunpack.c.l.b16 %v78
  %v372 = vunpack.c.l.b16 %v79
  %v373 = vunpack.c.l.b16 %v80
  %v374 = vunpack.c.l.b16 %v81
  %v375 = vunpack.c.l.b16 %v82
  %v376 = vunpack.c.l.b16 %v83
  %v377 = vunpack.c.l.b16 %v84
  %v378 = vunpack.c.l.b16 %v85
  %v379 = vunpack.c.l.b16 %v86
  %v380 = vunpack.c.l.b16 %v87
  %v381 = vunpack.c.l.b16 %v88
  %v382 = vunpack.c.l.b16 %v89
  %v383 = vunpack.c.l.b16 %v90
  %v384 = vunpack.c.l.b16 %v91
  %v385 = vunpack.c.l.b16 %v92
  %v386 = vunpack.c.l.b16 %v93
  %v387 = vunpack.c.l.b16 %v94
  %v388 = vunpack.c.l.b16 %v95
  %v389 = vunpack.c.l.b16 %v96
  %v390 = vunpack.c.l.b16 %v97
  %v391 = vunpack.c.l.b16 %v98
  %v392 = vunpack.c.l.b16 %v99
  %v393 = vunpack.c.l.b16 %v100
  %v394 = vunpack.c.l.b16 %v101
  %v395 = vunpack.c.l.b16 %v102
  %v396 = vunpack.c.l.b16 %v103
  %v397 = vunpack.c.l.b16 %v104
  %v398 = vunpack.c.l.b16 %v105
  %v399 = vunpack.c.l.b16 %v106
  %v400 = vunpack.c.l.b16 %v107
  %v401 = vunpack.c.l.b16 %v108
  %v402 = vunpack.c.l.b16 %v109
  %v403 = vunpack.c.l.b16 %v110
  %v404 = vunpack.c.l.b16 %v111
  %v405 = vunpack.c.l.b16 %v112
  %v406 = vunpack.c.l.b16 %v113
  %v407 = vunpack.c.l.b16 %v114
  %v408 = vunpack.c.l.b16 %v115
  %v409 = vunpack.c.l.b16 %v116
  %v410 = vunpack.c.l.b16 %v117
  %v411 = vunpack.c.l.b16 %v118
  %v412 = vunpack.c.l.b16 %v119
  %v413 = vunpack.c.l.b16 %v120
  %v414 = vunpack.c.l.b16 %v121
  %v415 = vunpack.c.l.b16 %v122
  %v416 = vunpack.c.l.b16 %v123
  %v417 = vunpack.c.l.b16 %v124
  %v418 = vunpack.c.l.b16 %v125
  %v419 = vunpack.c.l.b16 %v126
  %v420 = vunpack.c.l.b16 %v127
  %v421 = vunpack.c.l.b16 %v128
  %v422 = vunpack.c.l.b16 %v129
  %v423 = vunpack.c.l.b16 %v130
  %v424 = vunpack.c.l.b16 %v131
  %v425 = vunpack.c.l.b16 %v132
  %v426 = vunpack.c.l.b16 %v133
  %v427 = vunpack.c.l.b16 %v134
  %v428 = vunpack.c.l.b16 %v135
  %v429 = vunpack.c.l.b16 %v136
  %v430 = vunpack.c.l.b16 %v137
  %v431 = vunpack.c.l.b16 %v138
  %v432 = vunpack.c.l.b16 %v139
  %v433 = vunpack.c.l.b16 %v140
  %v434 = vunpack.c.l.b16 %v141
  %v435 = vunpack.c.l.b16 %v142
  %v436 = vunpack.c.l.b16 %v143
  %v437 = vunpack.c.l.b16 %v144
  %v438 = vunpack.c.l.b16 %v145
  %v439 = vunpack.c.l.b16 %v146
  %v440 = vunpack.c.l.b16 %v147
  %v441 = vunpack.c.l.b16 %v148
  %v442 = vunpack.c.l.b16 %v149
  %v443 = vunpack.c.l.b16 %v150
  %v444 = vunpack.c.l.b16 %v151
  %v445 = vunpack.c.l.b16 %v152
  %v446 = vunpack.c.l.b16 %v153
  %v447 = vunpack.c.l.b16 %v154
  %v448 = vunpack.c.l.b16 %v155
  %v449 = vunpack.c.l.b16 %v156
  %v450 = vunpack.c.l.b16 %v157
  %v451 = vunpack.c.l.b16 %v158
  %v452 = vunpack.c.l.b16 %v159
  %v453 = vunpack.c.l.b16 %v160
  %v454 = vunpack.c.l.b16 %v161
  %v455 = vunpack.c.l.b16 %v162
  %v456 = vunpack.c.l.b16 %v163
  %v457 = vunpack.c.l.b16 %v164
  %v458 = vunpack.c.l.b16 %v165
  %v459 = vunpack.c.l.b16 %v166
  %v460 = vunpack.c.l.b16 %v167
  %v461 = vunpack.c.l.b16 %v168
  %v462 = vunpack.c.l.b16 %v169
  %v463 = vunpack.c.l.b16 %v170
  %v464 = vunpack.c.l.b16 %v171
  %v465 = vunpack.c.l.b16 %v172
  %v466 = vunpack.c.l.b16 %v173
  %v467 = vunpack.c.l.b16 %v174
  %v468 = vunpack.c.l.b16 %v175
  %v469 = vunpack.c.l.b16 %v176
  %v470 = vunpack.c.l.b16 %v177
  %v471 = vunpack.c.l.b16 %v178
  %v472 = vunpack.c.l.b16 %v179
  %v473 = vunpack.c.l.b16 %v180
  %v474 = vunpack.c.l.b16 %v181
  %v475 = vunpack.c.l.b16 %v182
  %v476 = vunpack.c.l.b16 %v183
  %v477 = vunpack.c.l.b16 %v184
  %v478 = vunpack.c.l.b16 %v185
  %v479 = vunpack.c.l.b16 %v186
  %v480 = vunpack.c.l.b16 %v187
  %v481 = vunpack.c.l.b16 %v188
  %v482 = vpack.c.b16 %v339, %v338
  %v483 = vpack.c.b16 %v341, %v340
  %v484 = vpack.c.b16 %v343, %v342
  %v485 = vpack.c.b16 %v345, %v344
  %v486 = vpack.c.b16 %v347, %v346
  %v487 = vpack.c.b16 %v349, %v348
  %v488 = vpack.c.b16 %v351, %v350
  %v489 = vpack.c.b16 %v353, %v352
  %v490 = vpack.c.b16 %v355, %v354
  %v491 = vpack.c.b16 %v357, %v356
  %v492 = vpack.c.b16 %v359, %v358
  %v493 = vpack.c.b16 %v361, %v360
  %v494 = vpack.c.b16 %v363, %v362
  %v495 = vpack.c.b16 %v365, %v364
  %v496 = vpack.c.b16 %v367, %v366
  %v497 = vpack.c.b16 %v369, %v368
  %v498 = vpack.c.b16 %v371, %v370
  %v499 = vpack.c.b16 %v373, %v372
  %v500 = vpack.c.b16 %v375, %v374
  %v501 = vpack.c.b16 %v377, %v376
  %v502 = vpack.c.b16 %v379, %v378
  %v503 = vpack.c.b16 %v381, %v380
  %v504 = vpack.c.b16 %v383, %v382
  %v505 = vpack.c.b16 %v385, %v384
  %v506 = vpack.c.b16 %v387, %v386
  %v507 = vpack.c.b16 %v389, %v388
  %v508 = vpack.c.b16 %v391, %v390
  %v509 = vpack.c.b16 %v393, %v392
  %v510 = vpack.c.b16 %v395, %v394
  %v511 = vpack.c.b16 %v397, %v396
  %v512 = vpack.c.b16 %v399, %v398
  %v513 = vpack.c.b16 %v401, %v400
  %v514 = vpack.c.b16 %v403, %v402
  %v515 = vpack.c.b16 %v405, %v404
  %v516 = vpack.c.b16 %v407, %v406
  %v517 = vpack.c.b16 %v409, %v408
  %v518 = vpack.c.b16 %v411, %v410
  %v519 = vpack.c.b16 %v413, %v412
  %v520 = vpack.c.b16 %v415, %v414
  %v521 = vpack.c.b16 %v417, %v416
  %v522 = vpack.c.b16 %v419, %v418
  %v523 = vpack.c.b16 %v421, %v420
  %v524 = vpack.c.b16 %v423, %v422
  %v525 = vpack.c.b16 %v425, %v424
  %v526 = vpack.c.b16 %v427, %v426
  %v527 = vpack.c.b16 %v429, %v428
  %v528 = vpack.c.b16 %v431, %v430
  %v529 = vpack.c.b16 %v433, %v432
  %v530 = vpack.c.b16 %v435, %v434
  %v531 = vpack.c.b16 %v437, %v436
  %v532 = vpack.c.b16 %v439, %v438
  %v533 = vpack.c.b16 %v441, %v440
  %v534 = vpack.c.b16 %v443, %v442
  %v535 = vpack.c.b16 %v445, %v444
  %v536 = vpack.c.b16 %v447, %v446
  %v537 = vpack.c.b16 %v449, %v448
  %v538 = vpack.c.b16 %v451, %v450
  %v539 = vpack.c.b16 %v453, %v452
  %v540 = vpack.c.b16 %v455, %v454
  %v541 = vpack.c.b16 %v457, %v456
  %v542 = vpack.c.b16 %v459, %v458
  %v543 = vpack.c.b16 %v461, %v460
  %v544 = vpack.c.b16 %v463, %v462
  %v545 = vpack.c.b16 %v465, %v464
  %v546 = vpack.c.b16 %v467, %v466
  %v547 = vpack.c.b16 %v469, %v468
  %v548 = vpack.c.b16 %v471, %v470
  %v549 = vpack.c.b16 %v473, %v472
  %v550 = vpack.c.b16 %v475, %v474
  %v551 = vpack.c.b16 %v477, %v476
  %v552 = vpack.c.b16 %v479, %v478
  %v553 = vpack.c.b16 %v481, %v480
  %vm554 = vcmask 23552
  %v556 = vsel %vm554, %v482, 0
  %v559 = vsel %vm554, %v483, 0
  %v562 = vsel %vm554, %v484, 0
  %v565 = vsel %vm554, %v485, 0
  %v568 = vsel %vm554, %v486, 0
  %v571 = vsel %vm554, %v487, 0
  %v574 = vsel %vm554, %v488, 0
  %v577 = vsel %vm554, %v489, 0
  %v580 = vsel %vm554, %v490, 0
  %v583 = vsel %vm554, %v491, 0
  %v586 = vsel %vm554, %v492, 0
  %v589 = vsel %vm554, %v493, 0
  %v592 = vsel %vm554, %v494, 0
  %v595 = vsel %vm554, %v495, 0
  %v598 = vsel %vm554, %v496, 0
  %v601 = vsel %vm554, %v497, 0
  %v604 = vsel %vm554, %v498, 0
  %v607 = vsel %vm554, %v499, 0
  %v610 = vsel %vm554, %v500, 0
  %v613 = vsel %vm554, %v501, 0
  %v616 = vsel %vm554, %v502, 0
  %v619 = vsel %vm554, %v503, 0
  %v622 = vsel %vm554, %v504, 0
  %v625 = vsel %vm554, %v505, 0
  %v628 = vsel %vm554, %v506, 0
  %v631 = vsel %vm554, %v507, 0
  %v634 = vsel %vm554, %v508, 0
  %v637 = vsel %vm554, %v509, 0
  %v640 = vsel %vm554, %v510, 0
  %v643 = vsel %vm554, %v511, 0
  %v646 = vsel %vm554, %v512, 0
  %v649 = vsel %vm554, %v513, 0
  %v652 = vsel %vm554, %v514, 0
  %v655 = vsel %vm554, %v515, 0
  %v658 = vsel %vm554, %v516, 0
  %v661 = vsel %vm554, %v517, 0
  %v664 = vsel %vm554, %v518, 0
  %v667 = vsel %vm554, %v519, 0
  %v670 = vsel %vm554, %v520, 0
  %v673 = vsel %vm554, %v521, 0
  %v676 = vsel %vm554, %v522, 0
  %v679 = vsel %vm554, %v523, 0
  %v682 = vsel %vm554, %v524, 0
  %v685 = vsel %vm554, %v525, 0
  %v688 = vsel %vm554, %v526, 0
  %v691 = vsel %vm554, %v527, 0
  %v694 = vsel %vm554, %v528, 0
  %v697 = vsel %vm554, %v529, 0
  %v700 = vsel %vm554, %v530, 0
  %v703 = vsel %vm554, %v531, 0
  %v706 = vsel %vm554, %v532, 0
  %v709 = vsel %vm554, %v533, 0
  %v712 = vsel %vm554, %v534, 0
  %v715 = vsel %vm554, %v535, 0
  %v718 = vsel %vm554, %v536, 0
  %v721 = vsel %vm554, %v537, 0
  %v724 = vsel %vm554, %v538, 0
  %v727 = vsel %vm554, %v539, 0
  %v730 = vsel %vm554, %v540, 0
  %v733 = vsel %vm554, %v541, 0
  %v736 = vsel %vm554, %v542, 0
  %v739 = vsel %vm554, %v543, 0
  %v742 = vsel %vm554, %v544, 0
  %v745 = vsel %vm554, %v545, 0
  %v748 = vsel %vm554, %v546, 0
  %v751 = vsel %vm554, %v547, 0
  %v754 = vsel %vm554, %v548, 0
  %v757 = vsel %vm554, %v549, 0
  %v760 = vsel %vm554, %v550, 0
  %v763 = vsel %vm554, %v551, 0
  %v766 = vsel %vm554, %v552, 0
  %v769 = vsel %vm554, %v553, 0
  %vm771 = vcmask 1040384
  %vm772 = vcmask 1041408
  %v773 = vsel %vm771, 4294967295, 65535
  %v774 = vsel %vm772, %v773, 0
  %v776 = vand.u32 %v189, %v774
  %778 = vmatpush.bf16.msra.mxu0 0
  %779 = vmatpush.bf16.msra.mxu0 0
  %780 = vmatpush.bf16.msra.mxu0 0
  %781 = vmatpush.bf16.msra.mxu0 0
  %782 = vmatpush.bf16.msra.mxu0 0
  %783 = vmatpush.bf16.msra.mxu0 0
  %784 = vmatpush.bf16.msra.mxu0 0
  %785 = vmatpush.bf16.msra.mxu0 %v776
  %786 = vmatmul.bf16.gmra.mxu0 %v556
  %v787 = vpop.f32.mrf.mxu0
  %v788 = vadd.f32 %v192, %v787
  %v789 = vpop.f32.mrf.mxu0
  %v790 = vadd.f32 %v192, %v789
  %791 = vmatmul.bf16.gmra.mxu0 %v559
  %v792 = vpop.f32.mrf.mxu0
  %v793 = vadd.f32 %v192, %v792
  %v794 = vpop.f32.mrf.mxu0
  %v795 = vadd.f32 %v192, %v794
  %796 = vmatmul.bf16.gmra.mxu0 %v562
  %v797 = vpop.f32.mrf.mxu0
  %v798 = vadd.f32 %v192, %v797
  %v799 = vpop.f32.mrf.mxu0
  %v800 = vadd.f32 %v192, %v799
  %801 = vmatmul.bf16.gmra.mxu0 %v565
  %v802 = vpop.f32.mrf.mxu0
  %v803 = vadd.f32 %v192, %v802
  %v804 = vpop.f32.mrf.mxu0
  %v805 = vadd.f32 %v192, %v804
  %806 = vmatmul.bf16.gmra.mxu0 %v568
  %v807 = vpop.f32.mrf.mxu0
  %v808 = vadd.f32 %v192, %v807
  %v809 = vpop.f32.mrf.mxu0
  %v810 = vadd.f32 %v192, %v809
  %811 = vmatmul.bf16.gmra.mxu0 %v571
  %v812 = vpop.f32.mrf.mxu0
  %v813 = vadd.f32 %v192, %v812
  %v814 = vpop.f32.mrf.mxu0
  %v815 = vadd.f32 %v192, %v814
  %816 = vmatmul.bf16.gmra.mxu0 %v574
  %v817 = vpop.f32.mrf.mxu0
  %v818 = vadd.f32 %v192, %v817
  %v819 = vpop.f32.mrf.mxu0
  %v820 = vadd.f32 %v192, %v819
  %821 = vmatmul.bf16.gmra.mxu0 %v577
  %v822 = vpop.f32.mrf.mxu0
  %v823 = vadd.f32 %v192, %v822
  %v824 = vpop.f32.mrf.mxu0
  %v825 = vadd.f32 %v192, %v824
  %826 = vmatmul.bf16.gmra.mxu0 %v580
  %v827 = vpop.f32.mrf.mxu0
  %v828 = vadd.f32 %v192, %v827
  %v829 = vpop.f32.mrf.mxu0
  %v830 = vadd.f32 %v192, %v829
  %831 = vmatmul.bf16.gmra.mxu0 %v583
  %v832 = vpop.f32.mrf.mxu0
  %v833 = vadd.f32 %v192, %v832
  %v834 = vpop.f32.mrf.mxu0
  %v835 = vadd.f32 %v192, %v834
  %836 = vmatmul.bf16.gmra.mxu0 %v586
  %v837 = vpop.f32.mrf.mxu0
  %v838 = vadd.f32 %v192, %v837
  %v839 = vpop.f32.mrf.mxu0
  %v840 = vadd.f32 %v192, %v839
  %841 = vmatmul.bf16.gmra.mxu0 %v589
  %v842 = vpop.f32.mrf.mxu0
  %v843 = vadd.f32 %v192, %v842
  %v844 = vpop.f32.mrf.mxu0
  %v845 = vadd.f32 %v192, %v844
  %846 = vmatmul.bf16.gmra.mxu0 %v592
  %v847 = vpop.f32.mrf.mxu0
  %v848 = vadd.f32 %v192, %v847
  %v849 = vpop.f32.mrf.mxu0
  %v850 = vadd.f32 %v192, %v849
  %851 = vmatmul.bf16.gmra.mxu0 %v595
  %v852 = vpop.f32.mrf.mxu0
  %v853 = vadd.f32 %v192, %v852
  %v854 = vpop.f32.mrf.mxu0
  %v855 = vadd.f32 %v192, %v854
  %856 = vmatmul.bf16.gmra.mxu0 %v598
  %v857 = vpop.f32.mrf.mxu0
  %v858 = vadd.f32 %v192, %v857
  %v859 = vpop.f32.mrf.mxu0
  %v860 = vadd.f32 %v192, %v859
  %861 = vmatmul.bf16.gmra.mxu0 %v601
  %v862 = vpop.f32.mrf.mxu0
  %v863 = vadd.f32 %v192, %v862
  %v864 = vpop.f32.mrf.mxu0
  %v865 = vadd.f32 %v192, %v864
  %866 = vmatmul.bf16.gmra.mxu0 %v604
  %v867 = vpop.f32.mrf.mxu0
  %v868 = vadd.f32 %v192, %v867
  %v869 = vpop.f32.mrf.mxu0
  %v870 = vadd.f32 %v192, %v869
  %871 = vmatmul.bf16.gmra.mxu0 %v607
  %v872 = vpop.f32.mrf.mxu0
  %v873 = vadd.f32 %v192, %v872
  %v874 = vpop.f32.mrf.mxu0
  %v875 = vadd.f32 %v192, %v874
  %876 = vmatmul.bf16.gmra.mxu0 %v610
  %v877 = vpop.f32.mrf.mxu0
  %v878 = vadd.f32 %v192, %v877
  %v879 = vpop.f32.mrf.mxu0
  %v880 = vadd.f32 %v192, %v879
  %881 = vmatmul.bf16.gmra.mxu0 %v613
  %v882 = vpop.f32.mrf.mxu0
  %v883 = vadd.f32 %v192, %v882
  %v884 = vpop.f32.mrf.mxu0
  %v885 = vadd.f32 %v192, %v884
  %886 = vmatmul.bf16.gmra.mxu0 %v616
  %v887 = vpop.f32.mrf.mxu0
  %v888 = vadd.f32 %v192, %v887
  %v889 = vpop.f32.mrf.mxu0
  %v890 = vadd.f32 %v192, %v889
  %891 = vmatmul.bf16.gmra.mxu0 %v619
  %v892 = vpop.f32.mrf.mxu0
  %v893 = vadd.f32 %v192, %v892
  %v894 = vpop.f32.mrf.mxu0
  %v895 = vadd.f32 %v192, %v894
  %896 = vmatmul.bf16.gmra.mxu0 %v622
  %v897 = vpop.f32.mrf.mxu0
  %v898 = vadd.f32 %v192, %v897
  %v899 = vpop.f32.mrf.mxu0
  %v900 = vadd.f32 %v192, %v899
  %901 = vmatmul.bf16.gmra.mxu0 %v625
  %v902 = vpop.f32.mrf.mxu0
  %v903 = vadd.f32 %v192, %v902
  %v904 = vpop.f32.mrf.mxu0
  %v905 = vadd.f32 %v192, %v904
  %906 = vmatmul.bf16.gmra.mxu0 %v628
  %v907 = vpop.f32.mrf.mxu0
  %v908 = vadd.f32 %v192, %v907
  %v909 = vpop.f32.mrf.mxu0
  %v910 = vadd.f32 %v192, %v909
  %911 = vmatmul.bf16.gmra.mxu0 %v631
  %v912 = vpop.f32.mrf.mxu0
  %v913 = vadd.f32 %v192, %v912
  %v914 = vpop.f32.mrf.mxu0
  %v915 = vadd.f32 %v192, %v914
  %916 = vmatmul.bf16.gmra.mxu0 %v634
  %v917 = vpop.f32.mrf.mxu0
  %v918 = vadd.f32 %v192, %v917
  %v919 = vpop.f32.mrf.mxu0
  %v920 = vadd.f32 %v192, %v919
  %921 = vmatmul.bf16.gmra.mxu0 %v637
  %v922 = vpop.f32.mrf.mxu0
  %v923 = vadd.f32 %v192, %v922
  %v924 = vpop.f32.mrf.mxu0
  %v925 = vadd.f32 %v192, %v924
  %926 = vmatmul.bf16.gmra.mxu0 %v640
  %v927 = vpop.f32.mrf.mxu0
  %v928 = vadd.f32 %v192, %v927
  %v929 = vpop.f32.mrf.mxu0
  %v930 = vadd.f32 %v192, %v929
  %931 = vmatmul.bf16.gmra.mxu0 %v643
  %v932 = vpop.f32.mrf.mxu0
  %v933 = vadd.f32 %v192, %v932
  %v934 = vpop.f32.mrf.mxu0
  %v935 = vadd.f32 %v192, %v934
  %936 = vmatmul.bf16.gmra.mxu0 %v646
  %v937 = vpop.f32.mrf.mxu0
  %v938 = vadd.f32 %v192, %v937
  %v939 = vpop.f32.mrf.mxu0
  %v940 = vadd.f32 %v192, %v939
  %941 = vmatmul.bf16.gmra.mxu0 %v649
  %v942 = vpop.f32.mrf.mxu0
  %v943 = vadd.f32 %v192, %v942
  %v944 = vpop.f32.mrf.mxu0
  %v945 = vadd.f32 %v192, %v944
  %946 = vmatmul.bf16.gmra.mxu0 %v652
  %v947 = vpop.f32.mrf.mxu0
  %v948 = vadd.f32 %v192, %v947
  %v949 = vpop.f32.mrf.mxu0
  %v950 = vadd.f32 %v192, %v949
  %951 = vmatmul.bf16.gmra.mxu0 %v655
  %v952 = vpop.f32.mrf.mxu0
  %v953 = vadd.f32 %v192, %v952
  %v954 = vpop.f32.mrf.mxu0
  %v955 = vadd.f32 %v192, %v954
  %956 = vmatmul.bf16.gmra.mxu0 %v658
  %v957 = vpop.f32.mrf.mxu0
  %v958 = vadd.f32 %v192, %v957
  %v959 = vpop.f32.mrf.mxu0
  %v960 = vadd.f32 %v192, %v959
  %961 = vmatmul.bf16.gmra.mxu0 %v661
  %v962 = vpop.f32.mrf.mxu0
  %v963 = vadd.f32 %v192, %v962
  %v964 = vpop.f32.mrf.mxu0
  %v965 = vadd.f32 %v192, %v964
  %966 = vmatmul.bf16.gmra.mxu0 %v664
  %v967 = vpop.f32.mrf.mxu0
  %v968 = vadd.f32 %v192, %v967
  %v969 = vpop.f32.mrf.mxu0
  %v970 = vadd.f32 %v192, %v969
  %971 = vmatmul.bf16.gmra.mxu0 %v667
  %v972 = vpop.f32.mrf.mxu0
  %v973 = vadd.f32 %v192, %v972
  %v974 = vpop.f32.mrf.mxu0
  %v975 = vadd.f32 %v192, %v974
  %976 = vmatmul.bf16.gmra.mxu0 %v670
  %v977 = vpop.f32.mrf.mxu0
  %v978 = vadd.f32 %v192, %v977
  %v979 = vpop.f32.mrf.mxu0
  %v980 = vadd.f32 %v192, %v979
  %981 = vmatmul.bf16.gmra.mxu0 %v673
  %v982 = vpop.f32.mrf.mxu0
  %v983 = vadd.f32 %v192, %v982
  %v984 = vpop.f32.mrf.mxu0
  %v985 = vadd.f32 %v192, %v984
  %986 = vmatmul.bf16.gmra.mxu0 %v676
  %v987 = vpop.f32.mrf.mxu0
  %v988 = vadd.f32 %v192, %v987
  %v989 = vpop.f32.mrf.mxu0
  %v990 = vadd.f32 %v192, %v989
  %991 = vmatmul.bf16.gmra.mxu0 %v679
  %v992 = vpop.f32.mrf.mxu0
  %v993 = vadd.f32 %v192, %v992
  %v994 = vpop.f32.mrf.mxu0
  %v995 = vadd.f32 %v192, %v994
  %996 = vmatmul.bf16.gmra.mxu0 %v682
  %v997 = vpop.f32.mrf.mxu0
  %v998 = vadd.f32 %v192, %v997
  %v999 = vpop.f32.mrf.mxu0
  %v1000 = vadd.f32 %v192, %v999
  %1001 = vmatmul.bf16.gmra.mxu0 %v685
  %v1002 = vpop.f32.mrf.mxu0
  %v1003 = vadd.f32 %v192, %v1002
  %v1004 = vpop.f32.mrf.mxu0
  %v1005 = vadd.f32 %v192, %v1004
  %1006 = vmatmul.bf16.gmra.mxu0 %v688
  %v1007 = vpop.f32.mrf.mxu0
  %v1008 = vadd.f32 %v192, %v1007
  %v1009 = vpop.f32.mrf.mxu0
  %v1010 = vadd.f32 %v192, %v1009
  %1011 = vmatmul.bf16.gmra.mxu0 %v691
  %v1012 = vpop.f32.mrf.mxu0
  %v1013 = vadd.f32 %v192, %v1012
  %v1014 = vpop.f32.mrf.mxu0
  %v1015 = vadd.f32 %v192, %v1014
  %1016 = vmatmul.bf16.gmra.mxu0 %v694
  %v1017 = vpop.f32.mrf.mxu0
  %v1018 = vadd.f32 %v192, %v1017
  %v1019 = vpop.f32.mrf.mxu0
  %v1020 = vadd.f32 %v192, %v1019
  %1021 = vmatmul.bf16.gmra.mxu0 %v697
  %v1022 = vpop.f32.mrf.mxu0
  %v1023 = vadd.f32 %v192, %v1022
  %v1024 = vpop.f32.mrf.mxu0
  %v1025 = vadd.f32 %v192, %v1024
  %1026 = vmatmul.bf16.gmra.mxu0 %v700
  %v1027 = vpop.f32.mrf.mxu0
  %v1028 = vadd.f32 %v192, %v1027
  %v1029 = vpop.f32.mrf.mxu0
  %v1030 = vadd.f32 %v192, %v1029
  %1031 = vmatmul.bf16.gmra.mxu0 %v703
  %v1032 = vpop.f32.mrf.mxu0
  %v1033 = vadd.f32 %v192, %v1032
  %v1034 = vpop.f32.mrf.mxu0
  %v1035 = vadd.f32 %v192, %v1034
  %1036 = vmatmul.bf16.gmra.mxu0 %v706
  %v1037 = vpop.f32.mrf.mxu0
  %v1038 = vadd.f32 %v192, %v1037
  %v1039 = vpop.f32.mrf.mxu0
  %v1040 = vadd.f32 %v192, %v1039
  %1041 = vmatmul.bf16.gmra.mxu0 %v709
  %v1042 = vpop.f32.mrf.mxu0
  %v1043 = vadd.f32 %v192, %v1042
  %v1044 = vpop.f32.mrf.mxu0
  %v1045 = vadd.f32 %v192, %v1044
  %1046 = vmatmul.bf16.gmra.mxu0 %v712
  %v1047 = vpop.f32.mrf.mxu0
  %v1048 = vadd.f32 %v192, %v1047
  %v1049 = vpop.f32.mrf.mxu0
  %v1050 = vadd.f32 %v192, %v1049
  %1051 = vmatmul.bf16.gmra.mxu0 %v715
  %v1052 = vpop.f32.mrf.mxu0
  %v1053 = vadd.f32 %v192, %v1052
  %v1054 = vpop.f32.mrf.mxu0
  %v1055 = vadd.f32 %v192, %v1054
  %1056 = vmatmul.bf16.gmra.mxu0 %v718
  %v1057 = vpop.f32.mrf.mxu0
  %v1058 = vadd.f32 %v192, %v1057
  %v1059 = vpop.f32.mrf.mxu0
  %v1060 = vadd.f32 %v192, %v1059
  %1061 = vmatmul.bf16.gmra.mxu0 %v721
  %v1062 = vpop.f32.mrf.mxu0
  %v1063 = vadd.f32 %v192, %v1062
  %v1064 = vpop.f32.mrf.mxu0
  %v1065 = vadd.f32 %v192, %v1064
  %1066 = vmatmul.bf16.gmra.mxu0 %v724
  %v1067 = vpop.f32.mrf.mxu0
  %v1068 = vadd.f32 %v192, %v1067
  %v1069 = vpop.f32.mrf.mxu0
  %v1070 = vadd.f32 %v192, %v1069
  %1071 = vmatmul.bf16.gmra.mxu0 %v727
  %v1072 = vpop.f32.mrf.mxu0
  %v1073 = vadd.f32 %v192, %v1072
  %v1074 = vpop.f32.mrf.mxu0
  %v1075 = vadd.f32 %v192, %v1074
  %1076 = vmatmul.bf16.gmra.mxu0 %v730
  %v1077 = vpop.f32.mrf.mxu0
  %v1078 = vadd.f32 %v192, %v1077
  %v1079 = vpop.f32.mrf.mxu0
  %v1080 = vadd.f32 %v192, %v1079
  %1081 = vmatmul.bf16.gmra.mxu0 %v733
  %v1082 = vpop.f32.mrf.mxu0
  %v1083 = vadd.f32 %v192, %v1082
  %v1084 = vpop.f32.mrf.mxu0
  %v1085 = vadd.f32 %v192, %v1084
  %1086 = vmatmul.bf16.gmra.mxu0 %v736
  %v1087 = vpop.f32.mrf.mxu0
  %v1088 = vadd.f32 %v192, %v1087
  %v1089 = vpop.f32.mrf.mxu0
  %v1090 = vadd.f32 %v192, %v1089
  %1091 = vmatmul.bf16.gmra.mxu0 %v739
  %v1092 = vpop.f32.mrf.mxu0
  %v1093 = vadd.f32 %v192, %v1092
  %v1094 = vpop.f32.mrf.mxu0
  %v1095 = vadd.f32 %v192, %v1094
  %1096 = vmatmul.bf16.gmra.mxu0 %v742
  %v1097 = vpop.f32.mrf.mxu0
  %v1098 = vadd.f32 %v192, %v1097
  %v1099 = vpop.f32.mrf.mxu0
  %v1100 = vadd.f32 %v192, %v1099
  %1101 = vmatmul.bf16.gmra.mxu0 %v745
  %v1102 = vpop.f32.mrf.mxu0
  %v1103 = vadd.f32 %v192, %v1102
  %v1104 = vpop.f32.mrf.mxu0
  %v1105 = vadd.f32 %v192, %v1104
  %1106 = vmatmul.bf16.gmra.mxu0 %v748
  %v1107 = vpop.f32.mrf.mxu0
  %v1108 = vadd.f32 %v192, %v1107
  %v1109 = vpop.f32.mrf.mxu0
  %v1110 = vadd.f32 %v192, %v1109
  %1111 = vmatmul.bf16.gmra.mxu0 %v751
  %v1112 = vpop.f32.mrf.mxu0
  %v1113 = vadd.f32 %v192, %v1112
  %v1114 = vpop.f32.mrf.mxu0
  %v1115 = vadd.f32 %v192, %v1114
  %1116 = vmatmul.bf16.gmra.mxu0 %v754
  %v1117 = vpop.f32.mrf.mxu0
  %v1118 = vadd.f32 %v192, %v1117
  %v1119 = vpop.f32.mrf.mxu0
  %v1120 = vadd.f32 %v192, %v1119
  %1121 = vmatmul.bf16.gmra.mxu0 %v757
  %v1122 = vpop.f32.mrf.mxu0
  %v1123 = vadd.f32 %v192, %v1122
  %v1124 = vpop.f32.mrf.mxu0
  %v1125 = vadd.f32 %v192, %v1124
  %1126 = vmatmul.bf16.gmra.mxu0 %v760
  %v1127 = vpop.f32.mrf.mxu0
  %v1128 = vadd.f32 %v192, %v1127
  %v1129 = vpop.f32.mrf.mxu0
  %v1130 = vadd.f32 %v192, %v1129
  %1131 = vmatmul.bf16.gmra.mxu0 %v763
  %v1132 = vpop.f32.mrf.mxu0
  %v1133 = vadd.f32 %v192, %v1132
  %v1134 = vpop.f32.mrf.mxu0
  %v1135 = vadd.f32 %v192, %v1134
  %1136 = vmatmul.bf16.gmra.mxu0 %v766
  %v1137 = vpop.f32.mrf.mxu0
  %v1138 = vadd.f32 %v192, %v1137
  %v1139 = vpop.f32.mrf.mxu0
  %v1140 = vadd.f32 %v192, %v1139
  %1141 = vmatmul.bf16.gmra.mxu0 %v769
  %v1142 = vpop.f32.mrf.mxu0
  %v1143 = vadd.f32 %v192, %v1142
  %v1144 = vpop.f32.mrf.mxu0
  %v1145 = vadd.f32 %v192, %v1144
  %1146 = vdwg.mxu0
  %v1147 = vmax.f32 %v788, 0.0
  %v1148 = vmax.f32 %v790, 0.0
  %v1149 = vmax.f32 %v793, 0.0
  %v1150 = vmax.f32 %v795, 0.0
  %v1151 = vmax.f32 %v798, 0.0
  %v1152 = vmax.f32 %v800, 0.0
  %v1153 = vmax.f32 %v803, 0.0
  %v1154 = vmax.f32 %v805, 0.0
  %v1155 = vmax.f32 %v808, 0.0
  %v1156 = vmax.f32 %v810, 0.0
  %v1157 = vmax.f32 %v813, 0.0
  %v1158 = vmax.f32 %v815, 0.0
  %v1159 = vmax.f32 %v818, 0.0
  %v1160 = vmax.f32 %v820, 0.0
  %v1161 = vmax.f32 %v823, 0.0
  %v1162 = vmax.f32 %v825, 0.0
  %v1163 = vmax.f32 %v828, 0.0
  %v1164 = vmax.f32 %v830, 0.0
  %v1165 = vmax.f32 %v833, 0.0
  %v1166 = vmax.f32 %v835, 0.0
  %v1167 = vmax.f32 %v838, 0.0
  %v1168 = vmax.f32 %v840, 0.0
  %v1169 = vmax.f32 %v843, 0.0
  %v1170 = vmax.f32 %v845, 0.0
  %v1171 = vmax.f32 %v848, 0.0
  %v1172 = vmax.f32 %v850, 0.0
  %v1173 = vmax.f32 %v853, 0.0
  %v1174 = vmax.f32 %v855, 0.0
  %v1175 = vmax.f32 %v858, 0.0
  %v1176 = vmax.f32 %v860, 0.0
  %v1177 = vmax.f32 %v863, 0.0
  %v1178 = vmax.f32 %v865, 0.0
  %v1179 = vmax.f32 %v868, 0.0
  %v1180 = vmax.f32 %v870, 0.0
  %v1181 = vmax.f32 %v873, 0.0
  %v1182 = vmax.f32 %v875, 0.0
  %v1183 = vmax.f32 %v878, 0.0
  %v1184 = vmax.f32 %v880, 0.0
  %v1185 = vmax.f32 %v883, 0.0
  %v1186 = vmax.f32 %v885, 0.0
  %v1187 = vmax.f32 %v888, 0.0
  %v1188 = vmax.f32 %v890, 0.0
  %v1189 = vmax.f32 %v893, 0.0
  %v1190 = vmax.f32 %v895, 0.0
  %v1191 = vmax.f32 %v898, 0.0
  %v1192 = vmax.f32 %v900, 0.0
  %v1193 = vmax.f32 %v903, 0.0
  %v1194 = vmax.f32 %v905, 0.0
  %v1195 = vmax.f32 %v908, 0.0
  %v1196 = vmax.f32 %v910, 0.0
  %v1197 = vmax.f32 %v913, 0.0
  %v1198 = vmax.f32 %v915, 0.0
  %v1199 = vmax.f32 %v918, 0.0
  %v1200 = vmax.f32 %v920, 0.0
  %v1201 = vmax.f32 %v923, 0.0
  %v1202 = vmax.f32 %v925, 0.0
  %v1203 = vmax.f32 %v928, 0.0
  %v1204 = vmax.f32 %v930, 0.0
  %v1205 = vmax.f32 %v933, 0.0
  %v1206 = vmax.f32 %v935, 0.0
  %v1207 = vmax.f32 %v938, 0.0
  %v1208 = vmax.f32 %v940, 0.0
  %v1209 = vmax.f32 %v943, 0.0
  %v1210 = vmax.f32 %v945, 0.0
  %v1211 = vmax.f32 %v948, 0.0
  %v1212 = vmax.f32 %v950, 0.0
  %v1213 = vmax.f32 %v953, 0.0
  %v1214 = vmax.f32 %v955, 0.0
  %v1215 = vmax.f32 %v958, 0.0
  %v1216 = vmax.f32 %v960, 0.0
  %v1217 = vmax.f32 %v963, 0.0
  %v1218 = vmax.f32 %v965, 0.0
  %v1219 = vmax.f32 %v968, 0.0
  %v1220 = vmax.f32 %v970, 0.0
  %v1221 = vmax.f32 %v973, 0.0
  %v1222 = vmax.f32 %v975, 0.0
  %v1223 = vmax.f32 %v978, 0.0
  %v1224 = vmax.f32 %v980, 0.0
  %v1225 = vmax.f32 %v983, 0.0
  %v1226 = vmax.f32 %v985, 0.0
  %v1227 = vmax.f32 %v988, 0.0
  %v1228 = vmax.f32 %v990, 0.0
  %v1229 = vmax.f32 %v993, 0.0
  %v1230 = vmax.f32 %v995, 0.0
  %v1231 = vmax.f32 %v998, 0.0
  %v1232 = vmax.f32 %v1000, 0.0
  %v1233 = vmax.f32 %v1003, 0.0
  %v1234 = vmax.f32 %v1005, 0.0
  %v1235 = vmax.f32 %v1008, 0.0
  %v1236 = vmax.f32 %v1010, 0.0
  %v1237 = vmax.f32 %v1013, 0.0
  %v1238 = vmax.f32 %v1015, 0.0
  %v1239 = vmax.f32 %v1018, 0.0
  %v1240 = vmax.f32 %v1020, 0.0
  %v1241 = vmax.f32 %v1023, 0.0
  %v1242 = vmax.f32 %v1025, 0.0
  %v1243 = vmax.f32 %v1028, 0.0
  %v1244 = vmax.f32 %v1030, 0.0
  %v1245 = vmax.f32 %v1033, 0.0
  %v1246 = vmax.f32 %v1035, 0.0
  %v1247 = vmax.f32 %v1038, 0.0
  %v1248 = vmax.f32 %v1040, 0.0
  %v1249 = vmax.f32 %v1043, 0.0
  %v1250 = vmax.f32 %v1045, 0.0
  %v1251 = vmax.f32 %v1048, 0.0
  %v1252 = vmax.f32 %v1050, 0.0
  %v1253 = vmax.f32 %v1053, 0.0
  %v1254 = vmax.f32 %v1055, 0.0
  %v1255 = vmax.f32 %v1058, 0.0
  %v1256 = vmax.f32 %v1060, 0.0
  %v1257 = vmax.f32 %v1063, 0.0
  %v1258 = vmax.f32 %v1065, 0.0
  %v1259 = vmax.f32 %v1068, 0.0
  %v1260 = vmax.f32 %v1070, 0.0
  %v1261 = vmax.f32 %v1073, 0.0
  %v1262 = vmax.f32 %v1075, 0.0
  %v1263 = vmax.f32 %v1078, 0.0
  %v1264 = vmax.f32 %v1080, 0.0
  %v1265 = vmax.f32 %v1083, 0.0
  %v1266 = vmax.f32 %v1085, 0.0
  %v1267 = vmax.f32 %v1088, 0.0
  %v1268 = vmax.f32 %v1090, 0.0
  %v1269 = vmax.f32 %v1093, 0.0
  %v1270 = vmax.f32 %v1095, 0.0
  %v1271 = vmax.f32 %v1098, 0.0
  %v1272 = vmax.f32 %v1100, 0.0
  %v1273 = vmax.f32 %v1103, 0.0
  %v1274 = vmax.f32 %v1105, 0.0
  %v1275 = vmax.f32 %v1108, 0.0
  %v1276 = vmax.f32 %v1110, 0.0
  %v1277 = vmax.f32 %v1113, 0.0
  %v1278 = vmax.f32 %v1115, 0.0
  %v1279 = vmax.f32 %v1118, 0.0
  %v1280 = vmax.f32 %v1120, 0.0
  %v1281 = vmax.f32 %v1123, 0.0
  %v1282 = vmax.f32 %v1125, 0.0
  %v1283 = vmax.f32 %v1128, 0.0
  %v1284 = vmax.f32 %v1130, 0.0
  %v1285 = vmax.f32 %v1133, 0.0
  %v1286 = vmax.f32 %v1135, 0.0
  %v1287 = vmax.f32 %v1138, 0.0
  %v1288 = vmax.f32 %v1140, 0.0
  %v1289 = vmax.f32 %v1143, 0.0
  %v1290 = vmax.f32 %v1145, 0.0
  %v1291 = vpack.c.bf16 %v1148, %v1147
  %v1292 = vpack.c.bf16 %v1150, %v1149
  %v1293 = vpack.c.bf16 %v1152, %v1151
  %v1294 = vpack.c.bf16 %v1154, %v1153
  %v1295 = vpack.c.bf16 %v1156, %v1155
  %v1296 = vpack.c.bf16 %v1158, %v1157
  %v1297 = vpack.c.bf16 %v1160, %v1159
  %v1298 = vpack.c.bf16 %v1162, %v1161
  %v1299 = vpack.c.bf16 %v1164, %v1163
  %v1300 = vpack.c.bf16 %v1166, %v1165
  %v1301 = vpack.c.bf16 %v1168, %v1167
  %v1302 = vpack.c.bf16 %v1170, %v1169
  %v1303 = vpack.c.bf16 %v1172, %v1171
  %v1304 = vpack.c.bf16 %v1174, %v1173
  %v1305 = vpack.c.bf16 %v1176, %v1175
  %v1306 = vpack.c.bf16 %v1178, %v1177
  %v1307 = vpack.c.bf16 %v1180, %v1179
  %v1308 = vpack.c.bf16 %v1182, %v1181
  %v1309 = vpack.c.bf16 %v1184, %v1183
  %v1310 = vpack.c.bf16 %v1186, %v1185
  %v1311 = vpack.c.bf16 %v1188, %v1187
  %v1312 = vpack.c.bf16 %v1190, %v1189
  %v1313 = vpack.c.bf16 %v1192, %v1191
  %v1314 = vpack.c.bf16 %v1194, %v1193
  %v1315 = vpack.c.bf16 %v1196, %v1195
  %v1316 = vpack.c.bf16 %v1198, %v1197
  %v1317 = vpack.c.bf16 %v1200, %v1199
  %v1318 = vpack.c.bf16 %v1202, %v1201
  %v1319 = vpack.c.bf16 %v1204, %v1203
  %v1320 = vpack.c.bf16 %v1206, %v1205
  %v1321 = vpack.c.bf16 %v1208, %v1207
  %v1322 = vpack.c.bf16 %v1210, %v1209
  %v1323 = vpack.c.bf16 %v1212, %v1211
  %v1324 = vpack.c.bf16 %v1214, %v1213
  %v1325 = vpack.c.bf16 %v1216, %v1215
  %v1326 = vpack.c.bf16 %v1218, %v1217
  %v1327 = vpack.c.bf16 %v1220, %v1219
  %v1328 = vpack.c.bf16 %v1222, %v1221
  %v1329 = vpack.c.bf16 %v1224, %v1223
  %v1330 = vpack.c.bf16 %v1226, %v1225
  %v1331 = vpack.c.bf16 %v1228, %v1227
  %v1332 = vpack.c.bf16 %v1230, %v1229
  %v1333 = vpack.c.bf16 %v1232, %v1231
  %v1334 = vpack.c.bf16 %v1234, %v1233
  %v1335 = vpack.c.bf16 %v1236, %v1235
  %v1336 = vpack.c.bf16 %v1238, %v1237
  %v1337 = vpack.c.bf16 %v1240, %v1239
  %v1338 = vpack.c.bf16 %v1242, %v1241
  %v1339 = vpack.c.bf16 %v1244, %v1243
  %v1340 = vpack.c.bf16 %v1246, %v1245
  %v1341 = vpack.c.bf16 %v1248, %v1247
  %v1342 = vpack.c.bf16 %v1250, %v1249
  %v1343 = vpack.c.bf16 %v1252, %v1251
  %v1344 = vpack.c.bf16 %v1254, %v1253
  %v1345 = vpack.c.bf16 %v1256, %v1255
  %v1346 = vpack.c.bf16 %v1258, %v1257
  %v1347 = vpack.c.bf16 %v1260, %v1259
  %v1348 = vpack.c.bf16 %v1262, %v1261
  %v1349 = vpack.c.bf16 %v1264, %v1263
  %v1350 = vpack.c.bf16 %v1266, %v1265
  %v1351 = vpack.c.bf16 %v1268, %v1267
  %v1352 = vpack.c.bf16 %v1270, %v1269
  %v1353 = vpack.c.bf16 %v1272, %v1271
  %v1354 = vpack.c.bf16 %v1274, %v1273
  %v1355 = vpack.c.bf16 %v1276, %v1275
  %v1356 = vpack.c.bf16 %v1278, %v1277
  %v1357 = vpack.c.bf16 %v1280, %v1279
  %v1358 = vpack.c.bf16 %v1282, %v1281
  %v1359 = vpack.c.bf16 %v1284, %v1283
  %v1360 = vpack.c.bf16 %v1286, %v1285
  %v1361 = vpack.c.bf16 %v1288, %v1287
  %v1362 = vpack.c.bf16 %v1290, %v1289
  %v1363 = vld [vmem:[%s4] sm:$0xff]
  %v1364 = vld [vmem:[%s4 + $0x8] sm:$0xff]
  %v1365 = vld [vmem:[%s4 + $0x10] sm:$0xff]
  %v1366 = vld [vmem:[%s4 + $0x18] sm:$0xff]
  %v1367 = vld [vmem:[%s4 + $0x20] sm:$0xff]
  %v1368 = vld [vmem:[%s4 + $0x28] sm:$0xff]
  %v1369 = vld [vmem:[%s4 + $0x30] sm:$0xff]
  %v1370 = vld [vmem:[%s4 + $0x38] sm:$0xff]
  %v1371 = vld [vmem:[%s4 + $0x40] sm:$0xff]
  %v1372 = vld [vmem:[%s4 + $0x48] sm:$0xff]
  %v1373 = vld [vmem:[%s4 + $0x50] sm:$0xff]
  %v1374 = vld [vmem:[%s4 + $0x58] sm:$0xff]
  %v1375 = vld [vmem:[%s4 + $0x60] sm:$0xff]
  %v1376 = vld [vmem:[%s4 + $0x68] sm:$0xff]
  %v1377 = vld [vmem:[%s4 + $0x70] sm:$0xff]
  %v1378 = vld [vmem:[%s4 + $0x78] sm:$0xff]
  %v1379 = vld [vmem:[%s5] sm:$0x3]
  %v1381 = vperm.slane %v1379, 0
  %v1382 = vperm.slane %v1379, 1
  %v1401 = vunpack.c.l.b16 %v1363
  %v1402 = vunpack.c.h.b16 %v1363
  %v1403 = vunpack.c.l.b16 %v1364
  %v1404 = vunpack.c.h.b16 %v1364
  %v1405 = vunpack.c.l.b16 %v1365
  %v1406 = vunpack.c.h.b16 %v1365
  %v1407 = vunpack.c.l.b16 %v1366
  %v1408 = vunpack.c.h.b16 %v1366
  %v1409 = vunpack.c.l.b16 %v1367
  %v1410 = vunpack.c.h.b16 %v1367
  %v1411 = vunpack.c.l.b16 %v1368
  %v1412 = vunpack.c.h.b16 %v1368
  %v1413 = vunpack.c.l.b16 %v1369
  %v1414 = vunpack.c.h.b16 %v1369
  %v1415 = vunpack.c.l.b16 %v1370
  %v1416 = vunpack.c.h.b16 %v1370
  %v1417 = vunpack.c.l.b16 %v1371
  %v1418 = vunpack.c.h.b16 %v1371
  %v1419 = vunpack.c.l.b16 %v1372
  %v1420 = vunpack.c.h.b16 %v1372
  %v1421 = vunpack.c.l.b16 %v1373
  %v1422 = vunpack.c.h.b16 %v1373
  %v1423 = vunpack.c.l.b16 %v1374
  %v1424 = vunpack.c.h.b16 %v1374
  %v1425 = vunpack.c.l.b16 %v1375
  %v1426 = vunpack.c.h.b16 %v1375
  %v1427 = vunpack.c.l.b16 %v1376
  %v1428 = vunpack.c.h.b16 %v1376
  %v1429 = vunpack.c.l.b16 %v1377
  %v1430 = vunpack.c.h.b16 %v1377
  %v1431 = vunpack.c.l.b16 %v1378
  %v1432 = vunpack.c.h.b16 %v1378
  %v1433 = vpack.c.b16 %v1403, %v1401
  %v1434 = vpack.c.b16 %v1404, %v1402
  %v1435 = vpack.c.b16 %v1407, %v1405
  %v1436 = vpack.c.b16 %v1408, %v1406
  %v1437 = vpack.c.b16 %v1411, %v1409
  %v1438 = vpack.c.b16 %v1412, %v1410
  %v1439 = vpack.c.b16 %v1415, %v1413
  %v1440 = vpack.c.b16 %v1416, %v1414
  %v1441 = vpack.c.b16 %v1419, %v1417
  %v1442 = vpack.c.b16 %v1420, %v1418
  %v1443 = vpack.c.b16 %v1423, %v1421
  %v1444 = vpack.c.b16 %v1424, %v1422
  %v1445 = vpack.c.b16 %v1427, %v1425
  %v1446 = vpack.c.b16 %v1428, %v1426
  %v1447 = vpack.c.b16 %v1431, %v1429
  %v1448 = vpack.c.b16 %v1432, %v1430
  %1465 = vmatpush.bf16.msra.mxu0 %v1447
  %1466 = vmatpush.bf16.msra.mxu0 %v1445
  %1467 = vmatpush.bf16.msra.mxu0 %v1443
  %1468 = vmatpush.bf16.msra.mxu0 %v1441
  %1469 = vmatpush.bf16.msra.mxu0 %v1439
  %1470 = vmatpush.bf16.msra.mxu0 %v1437
  %1471 = vmatpush.bf16.msra.mxu0 %v1435
  %1472 = vmatpush.bf16.msra.mxu0 %v1433
  %1473 = vmatmul.bf16.gmra.mxu0 %v1291
  %v1474 = vpop.f32.mrf.mxu0
  %v1475 = vadd.f32 %v1381, %v1474
  %v1476 = vpop.f32.mrf.mxu0
  %v1477 = vadd.f32 %v1381, %v1476
  %1478 = vmatmul.bf16.gmra.mxu0 %v1292
  %v1479 = vpop.f32.mrf.mxu0
  %v1480 = vadd.f32 %v1381, %v1479
  %v1481 = vpop.f32.mrf.mxu0
  %v1482 = vadd.f32 %v1381, %v1481
  %1483 = vmatmul.bf16.gmra.mxu0 %v1293
  %v1484 = vpop.f32.mrf.mxu0
  %v1485 = vadd.f32 %v1381, %v1484
  %v1486 = vpop.f32.mrf.mxu0
  %v1487 = vadd.f32 %v1381, %v1486
  %1488 = vmatmul.bf16.gmra.mxu0 %v1294
  %v1489 = vpop.f32.mrf.mxu0
  %v1490 = vadd.f32 %v1381, %v1489
  %v1491 = vpop.f32.mrf.mxu0
  %v1492 = vadd.f32 %v1381, %v1491
  %1493 = vmatmul.bf16.gmra.mxu0 %v1295
  %v1494 = vpop.f32.mrf.mxu0
  %v1495 = vadd.f32 %v1381, %v1494
  %v1496 = vpop.f32.mrf.mxu0
  %v1497 = vadd.f32 %v1381, %v1496
  %1498 = vmatmul.bf16.gmra.mxu0 %v1296
  %v1499 = vpop.f32.mrf.mxu0
  %v1500 = vadd.f32 %v1381, %v1499
  %v1501 = vpop.f32.mrf.mxu0
  %v1502 = vadd.f32 %v1381, %v1501
  %1503 = vmatmul.bf16.gmra.mxu0 %v1297
  %v1504 = vpop.f32.mrf.mxu0
  %v1505 = vadd.f32 %v1381, %v1504
  %v1506 = vpop.f32.mrf.mxu0
  %v1507 = vadd.f32 %v1381, %v1506
  %1508 = vmatmul.bf16.gmra.mxu0 %v1298
  %v1509 = vpop.f32.mrf.mxu0
  %v1510 = vadd.f32 %v1381, %v1509
  %v1511 = vpop.f32.mrf.mxu0
  %v1512 = vadd.f32 %v1381, %v1511
  %1513 = vmatmul.bf16.gmra.mxu0 %v1299
  %v1514 = vpop.f32.mrf.mxu0
  %v1515 = vadd.f32 %v1381, %v1514
  %v1516 = vpop.f32.mrf.mxu0
  %v1517 = vadd.f32 %v1381, %v1516
  %1518 = vmatmul.bf16.gmra.mxu0 %v1300
  %v1519 = vpop.f32.mrf.mxu0
  %v1520 = vadd.f32 %v1381, %v1519
  %v1521 = vpop.f32.mrf.mxu0
  %v1522 = vadd.f32 %v1381, %v1521
  %1523 = vmatmul.bf16.gmra.mxu0 %v1301
  %v1524 = vpop.f32.mrf.mxu0
  %v1525 = vadd.f32 %v1381, %v1524
  %v1526 = vpop.f32.mrf.mxu0
  %v1527 = vadd.f32 %v1381, %v1526
  %1528 = vmatmul.bf16.gmra.mxu0 %v1302
  %v1529 = vpop.f32.mrf.mxu0
  %v1530 = vadd.f32 %v1381, %v1529
  %v1531 = vpop.f32.mrf.mxu0
  %v1532 = vadd.f32 %v1381, %v1531
  %1533 = vmatmul.bf16.gmra.mxu0 %v1303
  %v1534 = vpop.f32.mrf.mxu0
  %v1535 = vadd.f32 %v1381, %v1534
  %v1536 = vpop.f32.mrf.mxu0
  %v1537 = vadd.f32 %v1381, %v1536
  %1538 = vmatmul.bf16.gmra.mxu0 %v1304
  %v1539 = vpop.f32.mrf.mxu0
  %v1540 = vadd.f32 %v1381, %v1539
  %v1541 = vpop.f32.mrf.mxu0
  %v1542 = vadd.f32 %v1381, %v1541
  %1543 = vmatmul.bf16.gmra.mxu0 %v1305
  %v1544 = vpop.f32.mrf.mxu0
  %v1545 = vadd.f32 %v1381, %v1544
  %v1546 = vpop.f32.mrf.mxu0
  %v1547 = vadd.f32 %v1381, %v1546
  %1548 = vmatmul.bf16.gmra.mxu0 %v1306
  %v1549 = vpop.f32.mrf.mxu0
  %v1550 = vadd.f32 %v1381, %v1549
  %v1551 = vpop.f32.mrf.mxu0
  %v1552 = vadd.f32 %v1381, %v1551
  %1553 = vmatmul.bf16.gmra.mxu0 %v1307
  %v1554 = vpop.f32.mrf.mxu0
  %v1555 = vadd.f32 %v1381, %v1554
  %v1556 = vpop.f32.mrf.mxu0
  %v1557 = vadd.f32 %v1381, %v1556
  %1558 = vmatmul.bf16.gmra.mxu0 %v1308
  %v1559 = vpop.f32.mrf.mxu0
  %v1560 = vadd.f32 %v1381, %v1559
  %v1561 = vpop.f32.mrf.mxu0
  %v1562 = vadd.f32 %v1381, %v1561
  %1563 = vmatmul.bf16.gmra.mxu0 %v1309
  %v1564 = vpop.f32.mrf.mxu0
  %v1565 = vadd.f32 %v1381, %v1564
  %v1566 = vpop.f32.mrf.mxu0
  %v1567 = vadd.f32 %v1381, %v1566
  %1568 = vmatmul.bf16.gmra.mxu0 %v1310
  %v1569 = vpop.f32.mrf.mxu0
  %v1570 = vadd.f32 %v1381, %v1569
  %v1571 = vpop.f32.mrf.mxu0
  %v1572 = vadd.f32 %v1381, %v1571
  %1573 = vmatmul.bf16.gmra.mxu0 %v1311
  %v1574 = vpop.f32.mrf.mxu0
  %v1575 = vadd.f32 %v1381, %v1574
  %v1576 = vpop.f32.mrf.mxu0
  %v1577 = vadd.f32 %v1381, %v1576
  %1578 = vmatmul.bf16.gmra.mxu0 %v1312
  %v1579 = vpop.f32.mrf.mxu0
  %v1580 = vadd.f32 %v1381, %v1579
  %v1581 = vpop.f32.mrf.mxu0
  %v1582 = vadd.f32 %v1381, %v1581
  %1583 = vmatmul.bf16.gmra.mxu0 %v1313
  %v1584 = vpop.f32.mrf.mxu0
  %v1585 = vadd.f32 %v1381, %v1584
  %v1586 = vpop.f32.mrf.mxu0
  %v1587 = vadd.f32 %v1381, %v1586
  %1588 = vmatmul.bf16.gmra.mxu0 %v1314
  %v1589 = vpop.f32.mrf.mxu0
  %v1590 = vadd.f32 %v1381, %v1589
  %v1591 = vpop.f32.mrf.mxu0
  %v1592 = vadd.f32 %v1381, %v1591
  %1593 = vmatmul.bf16.gmra.mxu0 %v1315
  %v1594 = vpop.f32.mrf.mxu0
  %v1595 = vadd.f32 %v1381, %v1594
  %v1596 = vpop.f32.mrf.mxu0
  %v1597 = vadd.f32 %v1381, %v1596
  %1598 = vmatmul.bf16.gmra.mxu0 %v1316
  %v1599 = vpop.f32.mrf.mxu0
  %v1600 = vadd.f32 %v1381, %v1599
  %v1601 = vpop.f32.mrf.mxu0
  %v1602 = vadd.f32 %v1381, %v1601
  %1603 = vmatmul.bf16.gmra.mxu0 %v1317
  %v1604 = vpop.f32.mrf.mxu0
  %v1605 = vadd.f32 %v1381, %v1604
  %v1606 = vpop.f32.mrf.mxu0
  %v1607 = vadd.f32 %v1381, %v1606
  %1608 = vmatmul.bf16.gmra.mxu0 %v1318
  %v1609 = vpop.f32.mrf.mxu0
  %v1610 = vadd.f32 %v1381, %v1609
  %v1611 = vpop.f32.mrf.mxu0
  %v1612 = vadd.f32 %v1381, %v1611
  %1613 = vmatmul.bf16.gmra.mxu0 %v1319
  %v1614 = vpop.f32.mrf.mxu0
  %v1615 = vadd.f32 %v1381, %v1614
  %v1616 = vpop.f32.mrf.mxu0
  %v1617 = vadd.f32 %v1381, %v1616
  %1618 = vmatmul.bf16.gmra.mxu0 %v1320
  %v1619 = vpop.f32.mrf.mxu0
  %v1620 = vadd.f32 %v1381, %v1619
  %v1621 = vpop.f32.mrf.mxu0
  %v1622 = vadd.f32 %v1381, %v1621
  %1623 = vmatmul.bf16.gmra.mxu0 %v1321
  %v1624 = vpop.f32.mrf.mxu0
  %v1625 = vadd.f32 %v1381, %v1624
  %v1626 = vpop.f32.mrf.mxu0
  %v1627 = vadd.f32 %v1381, %v1626
  %1628 = vmatmul.bf16.gmra.mxu0 %v1322
  %v1629 = vpop.f32.mrf.mxu0
  %v1630 = vadd.f32 %v1381, %v1629
  %v1631 = vpop.f32.mrf.mxu0
  %v1632 = vadd.f32 %v1381, %v1631
  %1633 = vmatmul.bf16.gmra.mxu0 %v1323
  %v1634 = vpop.f32.mrf.mxu0
  %v1635 = vadd.f32 %v1381, %v1634
  %v1636 = vpop.f32.mrf.mxu0
  %v1637 = vadd.f32 %v1381, %v1636
  %1638 = vmatmul.bf16.gmra.mxu0 %v1324
  %v1639 = vpop.f32.mrf.mxu0
  %v1640 = vadd.f32 %v1381, %v1639
  %v1641 = vpop.f32.mrf.mxu0
  %v1642 = vadd.f32 %v1381, %v1641
  %1643 = vmatmul.bf16.gmra.mxu0 %v1325
  %v1644 = vpop.f32.mrf.mxu0
  %v1645 = vadd.f32 %v1381, %v1644
  %v1646 = vpop.f32.mrf.mxu0
  %v1647 = vadd.f32 %v1381, %v1646
  %1648 = vmatmul.bf16.gmra.mxu0 %v1326
  %v1649 = vpop.f32.mrf.mxu0
  %v1650 = vadd.f32 %v1381, %v1649
  %v1651 = vpop.f32.mrf.mxu0
  %v1652 = vadd.f32 %v1381, %v1651
  %1653 = vmatmul.bf16.gmra.mxu0 %v1327
  %v1654 = vpop.f32.mrf.mxu0
  %v1655 = vadd.f32 %v1381, %v1654
  %v1656 = vpop.f32.mrf.mxu0
  %v1657 = vadd.f32 %v1381, %v1656
  %1658 = vmatmul.bf16.gmra.mxu0 %v1328
  %v1659 = vpop.f32.mrf.mxu0
  %v1660 = vadd.f32 %v1381, %v1659
  %v1661 = vpop.f32.mrf.mxu0
  %v1662 = vadd.f32 %v1381, %v1661
  %1663 = vmatmul.bf16.gmra.mxu0 %v1329
  %v1664 = vpop.f32.mrf.mxu0
  %v1665 = vadd.f32 %v1381, %v1664
  %v1666 = vpop.f32.mrf.mxu0
  %v1667 = vadd.f32 %v1381, %v1666
  %1668 = vmatmul.bf16.gmra.mxu0 %v1330
  %v1669 = vpop.f32.mrf.mxu0
  %v1670 = vadd.f32 %v1381, %v1669
  %v1671 = vpop.f32.mrf.mxu0
  %v1672 = vadd.f32 %v1381, %v1671
  %1673 = vmatmul.bf16.gmra.mxu0 %v1331
  %v1674 = vpop.f32.mrf.mxu0
  %v1675 = vadd.f32 %v1381, %v1674
  %v1676 = vpop.f32.mrf.mxu0
  %v1677 = vadd.f32 %v1381, %v1676
  %1678 = vmatmul.bf16.gmra.mxu0 %v1332
  %v1679 = vpop.f32.mrf.mxu0
  %v1680 = vadd.f32 %v1381, %v1679
  %v1681 = vpop.f32.mrf.mxu0
  %v1682 = vadd.f32 %v1381, %v1681
  %1683 = vmatmul.bf16.gmra.mxu0 %v1333
  %v1684 = vpop.f32.mrf.mxu0
  %v1685 = vadd.f32 %v1381, %v1684
  %v1686 = vpop.f32.mrf.mxu0
  %v1687 = vadd.f32 %v1381, %v1686
  %1688 = vmatmul.bf16.gmra.mxu0 %v1334
  %v1689 = vpop.f32.mrf.mxu0
  %v1690 = vadd.f32 %v1381, %v1689
  %v1691 = vpop.f32.mrf.mxu0
  %v1692 = vadd.f32 %v1381, %v1691
  %1693 = vmatmul.bf16.gmra.mxu0 %v1335
  %v1694 = vpop.f32.mrf.mxu0
  %v1695 = vadd.f32 %v1381, %v1694
  %v1696 = vpop.f32.mrf.mxu0
  %v1697 = vadd.f32 %v1381, %v1696
  %1698 = vmatmul.bf16.gmra.mxu0 %v1336
  %v1699 = vpop.f32.mrf.mxu0
  %v1700 = vadd.f32 %v1381, %v1699
  %v1701 = vpop.f32.mrf.mxu0
  %v1702 = vadd.f32 %v1381, %v1701
  %1703 = vmatmul.bf16.gmra.mxu0 %v1337
  %v1704 = vpop.f32.mrf.mxu0
  %v1705 = vadd.f32 %v1381, %v1704
  %v1706 = vpop.f32.mrf.mxu0
  %v1707 = vadd.f32 %v1381, %v1706
  %1708 = vmatmul.bf16.gmra.mxu0 %v1338
  %v1709 = vpop.f32.mrf.mxu0
  %v1710 = vadd.f32 %v1381, %v1709
  %v1711 = vpop.f32.mrf.mxu0
  %v1712 = vadd.f32 %v1381, %v1711
  %1713 = vmatmul.bf16.gmra.mxu0 %v1339
  %v1714 = vpop.f32.mrf.mxu0
  %v1715 = vadd.f32 %v1381, %v1714
  %v1716 = vpop.f32.mrf.mxu0
  %v1717 = vadd.f32 %v1381, %v1716
  %1718 = vmatmul.bf16.gmra.mxu0 %v1340
  %v1719 = vpop.f32.mrf.mxu0
  %v1720 = vadd.f32 %v1381, %v1719
  %v1721 = vpop.f32.mrf.mxu0
  %v1722 = vadd.f32 %v1381, %v1721
  %1723 = vmatmul.bf16.gmra.mxu0 %v1341
  %v1724 = vpop.f32.mrf.mxu0
  %v1725 = vadd.f32 %v1381, %v1724
  %v1726 = vpop.f32.mrf.mxu0
  %v1727 = vadd.f32 %v1381, %v1726
  %1728 = vmatmul.bf16.gmra.mxu0 %v1342
  %v1729 = vpop.f32.mrf.mxu0
  %v1730 = vadd.f32 %v1381, %v1729
  %v1731 = vpop.f32.mrf.mxu0
  %v1732 = vadd.f32 %v1381, %v1731
  %1733 = vmatmul.bf16.gmra.mxu0 %v1343
  %v1734 = vpop.f32.mrf.mxu0
  %v1735 = vadd.f32 %v1381, %v1734
  %v1736 = vpop.f32.mrf.mxu0
  %v1737 = vadd.f32 %v1381, %v1736
  %1738 = vmatmul.bf16.gmra.mxu0 %v1344
  %v1739 = vpop.f32.mrf.mxu0
  %v1740 = vadd.f32 %v1381, %v1739
  %v1741 = vpop.f32.mrf.mxu0
  %v1742 = vadd.f32 %v1381, %v1741
  %1743 = vmatmul.bf16.gmra.mxu0 %v1345
  %v1744 = vpop.f32.mrf.mxu0
  %v1745 = vadd.f32 %v1381, %v1744
  %v1746 = vpop.f32.mrf.mxu0
  %v1747 = vadd.f32 %v1381, %v1746
  %1748 = vmatmul.bf16.gmra.mxu0 %v1346
  %v1749 = vpop.f32.mrf.mxu0
  %v1750 = vadd.f32 %v1381, %v1749
  %v1751 = vpop.f32.mrf.mxu0
  %v1752 = vadd.f32 %v1381, %v1751
  %1753 = vmatmul.bf16.gmra.mxu0 %v1347
  %v1754 = vpop.f32.mrf.mxu0
  %v1755 = vadd.f32 %v1381, %v1754
  %v1756 = vpop.f32.mrf.mxu0
  %v1757 = vadd.f32 %v1381, %v1756
  %1758 = vmatmul.bf16.gmra.mxu0 %v1348
  %v1759 = vpop.f32.mrf.mxu0
  %v1760 = vadd.f32 %v1381, %v1759
  %v1761 = vpop.f32.mrf.mxu0
  %v1762 = vadd.f32 %v1381, %v1761
  %1763 = vmatmul.bf16.gmra.mxu0 %v1349
  %v1764 = vpop.f32.mrf.mxu0
  %v1765 = vadd.f32 %v1381, %v1764
  %v1766 = vpop.f32.mrf.mxu0
  %v1767 = vadd.f32 %v1381, %v1766
  %1768 = vmatmul.bf16.gmra.mxu0 %v1350
  %v1769 = vpop.f32.mrf.mxu0
  %v1770 = vadd.f32 %v1381, %v1769
  %v1771 = vpop.f32.mrf.mxu0
  %v1772 = vadd.f32 %v1381, %v1771
  %1773 = vmatmul.bf16.gmra.mxu0 %v1351
  %v1774 = vpop.f32.mrf.mxu0
  %v1775 = vadd.f32 %v1381, %v1774
  %v1776 = vpop.f32.mrf.mxu0
  %v1777 = vadd.f32 %v1381, %v1776
  %1778 = vmatmul.bf16.gmra.mxu0 %v1352
  %v1779 = vpop.f32.mrf.mxu0
  %v1780 = vadd.f32 %v1381, %v1779
  %v1781 = vpop.f32.mrf.mxu0
  %v1782 = vadd.f32 %v1381, %v1781
  %1783 = vmatmul.bf16.gmra.mxu0 %v1353
  %v1784 = vpop.f32.mrf.mxu0
  %v1785 = vadd.f32 %v1381, %v1784
  %v1786 = vpop.f32.mrf.mxu0
  %v1787 = vadd.f32 %v1381, %v1786
  %1788 = vmatmul.bf16.gmra.mxu0 %v1354
  %v1789 = vpop.f32.mrf.mxu0
  %v1790 = vadd.f32 %v1381, %v1789
  %v1791 = vpop.f32.mrf.mxu0
  %v1792 = vadd.f32 %v1381, %v1791
  %1793 = vmatmul.bf16.gmra.mxu0 %v1355
  %v1794 = vpop.f32.mrf.mxu0
  %v1795 = vadd.f32 %v1381, %v1794
  %v1796 = vpop.f32.mrf.mxu0
  %v1797 = vadd.f32 %v1381, %v1796
  %1798 = vmatmul.bf16.gmra.mxu0 %v1356
  %v1799 = vpop.f32.mrf.mxu0
  %v1800 = vadd.f32 %v1381, %v1799
  %v1801 = vpop.f32.mrf.mxu0
  %v1802 = vadd.f32 %v1381, %v1801
  %1803 = vmatmul.bf16.gmra.mxu0 %v1357
  %v1804 = vpop.f32.mrf.mxu0
  %v1805 = vadd.f32 %v1381, %v1804
  %v1806 = vpop.f32.mrf.mxu0
  %v1807 = vadd.f32 %v1381, %v1806
  %1808 = vmatmul.bf16.gmra.mxu0 %v1358
  %v1809 = vpop.f32.mrf.mxu0
  %v1810 = vadd.f32 %v1381, %v1809
  %v1811 = vpop.f32.mrf.mxu0
  %v1812 = vadd.f32 %v1381, %v1811
  %1813 = vmatmul.bf16.gmra.mxu0 %v1359
  %v1814 = vpop.f32.mrf.mxu0
  %v1815 = vadd.f32 %v1381, %v1814
  %v1816 = vpop.f32.mrf.mxu0
  %v1817 = vadd.f32 %v1381, %v1816
  %1818 = vmatmul.bf16.gmra.mxu0 %v1360
  %v1819 = vpop.f32.mrf.mxu0
  %v1820 = vadd.f32 %v1381, %v1819
  %v1821 = vpop.f32.mrf.mxu0
  %v1822 = vadd.f32 %v1381, %v1821
  %1823 = vmatmul.bf16.gmra.mxu0 %v1361
  %v1824 = vpop.f32.mrf.mxu0
  %v1825 = vadd.f32 %v1381, %v1824
  %v1826 = vpop.f32.mrf.mxu0
  %v1827 = vadd.f32 %v1381, %v1826
  %1828 = vmatmul.bf16.gmra.mxu0 %v1362
  %v1829 = vpop.f32.mrf.mxu0
  %v1830 = vadd.f32 %v1381, %v1829
  %v1831 = vpop.f32.mrf.mxu0
  %v1832 = vadd.f32 %v1381, %v1831
  %1833 = vdwg.mxu0
  %1834 = vmatpush.bf16.msra.mxu0 %v1448
  %1835 = vmatpush.bf16.msra.mxu0 %v1446
  %1836 = vmatpush.bf16.msra.mxu0 %v1444
  %1837 = vmatpush.bf16.msra.mxu0 %v1442
  %1838 = vmatpush.bf16.msra.mxu0 %v1440
  %1839 = vmatpush.bf16.msra.mxu0 %v1438
  %1840 = vmatpush.bf16.msra.mxu0 %v1436
  %1841 = vmatpush.bf16.msra.mxu0 %v1434
  %1842 = vmatmul.bf16.gmra.mxu0 %v1291
  %v1843 = vpop.f32.mrf.mxu0
  %v1844 = vadd.f32 %v1382, %v1843
  %v1845 = vpop.f32.mrf.mxu0
  %v1846 = vadd.f32 %v1382, %v1845
  %1847 = vmatmul.bf16.gmra.mxu0 %v1292
  %v1848 = vpop.f32.mrf.mxu0
  %v1849 = vadd.f32 %v1382, %v1848
  %v1850 = vpop.f32.mrf.mxu0
  %v1851 = vadd.f32 %v1382, %v1850
  %1852 = vmatmul.bf16.gmra.mxu0 %v1293
  %v1853 = vpop.f32.mrf.mxu0
  %v1854 = vadd.f32 %v1382, %v1853
  %v1855 = vpop.f32.mrf.mxu0
  %v1856 = vadd.f32 %v1382, %v1855
  %1857 = vmatmul.bf16.gmra.mxu0 %v1294
  %v1858 = vpop.f32.mrf.mxu0
  %v1859 = vadd.f32 %v1382, %v1858
  %v1860 = vpop.f32.mrf.mxu0
  %v1861 = vadd.f32 %v1382, %v1860
  %1862 = vmatmul.bf16.gmra.mxu0 %v1295
  %v1863 = vpop.f32.mrf.mxu0
  %v1864 = vadd.f32 %v1382, %v1863
  %v1865 = vpop.f32.mrf.mxu0
  %v1866 = vadd.f32 %v1382, %v1865
  %1867 = vmatmul.bf16.gmra.mxu0 %v1296
  %v1868 = vpop.f32.mrf.mxu0
  %v1869 = vadd.f32 %v1382, %v1868
  %v1870 = vpop.f32.mrf.mxu0
  %v1871 = vadd.f32 %v1382, %v1870
  %1872 = vmatmul.bf16.gmra.mxu0 %v1297
  %v1873 = vpop.f32.mrf.mxu0
  %v1874 = vadd.f32 %v1382, %v1873
  %v1875 = vpop.f32.mrf.mxu0
  %v1876 = vadd.f32 %v1382, %v1875
  %1877 = vmatmul.bf16.gmra.mxu0 %v1298
  %v1878 = vpop.f32.mrf.mxu0
  %v1879 = vadd.f32 %v1382, %v1878
  %v1880 = vpop.f32.mrf.mxu0
  %v1881 = vadd.f32 %v1382, %v1880
  %1882 = vmatmul.bf16.gmra.mxu0 %v1299
  %v1883 = vpop.f32.mrf.mxu0
  %v1884 = vadd.f32 %v1382, %v1883
  %v1885 = vpop.f32.mrf.mxu0
  %v1886 = vadd.f32 %v1382, %v1885
  %1887 = vmatmul.bf16.gmra.mxu0 %v1300
  %v1888 = vpop.f32.mrf.mxu0
  %v1889 = vadd.f32 %v1382, %v1888
  %v1890 = vpop.f32.mrf.mxu0
  %v1891 = vadd.f32 %v1382, %v1890
  %1892 = vmatmul.bf16.gmra.mxu0 %v1301
  %v1893 = vpop.f32.mrf.mxu0
  %v1894 = vadd.f32 %v1382, %v1893
  %v1895 = vpop.f32.mrf.mxu0
  %v1896 = vadd.f32 %v1382, %v1895
  %1897 = vmatmul.bf16.gmra.mxu0 %v1302
  %v1898 = vpop.f32.mrf.mxu0
  %v1899 = vadd.f32 %v1382, %v1898
  %v1900 = vpop.f32.mrf.mxu0
  %v1901 = vadd.f32 %v1382, %v1900
  %1902 = vmatmul.bf16.gmra.mxu0 %v1303
  %v1903 = vpop.f32.mrf.mxu0
  %v1904 = vadd.f32 %v1382, %v1903
  %v1905 = vpop.f32.mrf.mxu0
  %v1906 = vadd.f32 %v1382, %v1905
  %1907 = vmatmul.bf16.gmra.mxu0 %v1304
  %v1908 = vpop.f32.mrf.mxu0
  %v1909 = vadd.f32 %v1382, %v1908
  %v1910 = vpop.f32.mrf.mxu0
  %v1911 = vadd.f32 %v1382, %v1910
  %1912 = vmatmul.bf16.gmra.mxu0 %v1305
  %v1913 = vpop.f32.mrf.mxu0
  %v1914 = vadd.f32 %v1382, %v1913
  %v1915 = vpop.f32.mrf.mxu0
  %v1916 = vadd.f32 %v1382, %v1915
  %1917 = vmatmul.bf16.gmra.mxu0 %v1306
  %v1918 = vpop.f32.mrf.mxu0
  %v1919 = vadd.f32 %v1382, %v1918
  %v1920 = vpop.f32.mrf.mxu0
  %v1921 = vadd.f32 %v1382, %v1920
  %1922 = vmatmul.bf16.gmra.mxu0 %v1307
  %v1923 = vpop.f32.mrf.mxu0
  %v1924 = vadd.f32 %v1382, %v1923
  %v1925 = vpop.f32.mrf.mxu0
  %v1926 = vadd.f32 %v1382, %v1925
  %1927 = vmatmul.bf16.gmra.mxu0 %v1308
  %v1928 = vpop.f32.mrf.mxu0
  %v1929 = vadd.f32 %v1382, %v1928
  %v1930 = vpop.f32.mrf.mxu0
  %v1931 = vadd.f32 %v1382, %v1930
  %1932 = vmatmul.bf16.gmra.mxu0 %v1309
  %v1933 = vpop.f32.mrf.mxu0
  %v1934 = vadd.f32 %v1382, %v1933
  %v1935 = vpop.f32.mrf.mxu0
  %v1936 = vadd.f32 %v1382, %v1935
  %1937 = vmatmul.bf16.gmra.mxu0 %v1310
  %v1938 = vpop.f32.mrf.mxu0
  %v1939 = vadd.f32 %v1382, %v1938
  %v1940 = vpop.f32.mrf.mxu0
  %v1941 = vadd.f32 %v1382, %v1940
  %1942 = vmatmul.bf16.gmra.mxu0 %v1311
  %v1943 = vpop.f32.mrf.mxu0
  %v1944 = vadd.f32 %v1382, %v1943
  %v1945 = vpop.f32.mrf.mxu0
  %v1946 = vadd.f32 %v1382, %v1945
  %1947 = vmatmul.bf16.gmra.mxu0 %v1312
  %v1948 = vpop.f32.mrf.mxu0
  %v1949 = vadd.f32 %v1382, %v1948
  %v1950 = vpop.f32.mrf.mxu0
  %v1951 = vadd.f32 %v1382, %v1950
  %1952 = vmatmul.bf16.gmra.mxu0 %v1313
  %v1953 = vpop.f32.mrf.mxu0
  %v1954 = vadd.f32 %v1382, %v1953
  %v1955 = vpop.f32.mrf.mxu0
  %v1956 = vadd.f32 %v1382, %v1955
  %1957 = vmatmul.bf16.gmra.mxu0 %v1314
  %v1958 = vpop.f32.mrf.mxu0
  %v1959 = vadd.f32 %v1382, %v1958
  %v1960 = vpop.f32.mrf.mxu0
  %v1961 = vadd.f32 %v1382, %v1960
  %1962 = vmatmul.bf16.gmra.mxu0 %v1315
  %v1963 = vpop.f32.mrf.mxu0
  %v1964 = vadd.f32 %v1382, %v1963
  %v1965 = vpop.f32.mrf.mxu0
  %v1966 = vadd.f32 %v1382, %v1965
  %1967 = vmatmul.bf16.gmra.mxu0 %v1316
  %v1968 = vpop.f32.mrf.mxu0
  %v1969 = vadd.f32 %v1382, %v1968
  %v1970 = vpop.f32.mrf.mxu0
  %v1971 = vadd.f32 %v1382, %v1970
  %1972 = vmatmul.bf16.gmra.mxu0 %v1317
  %v1973 = vpop.f32.mrf.mxu0
  %v1974 = vadd.f32 %v1382, %v1973
  %v1975 = vpop.f32.mrf.mxu0
  %v1976 = vadd.f32 %v1382, %v1975
  %1977 = vmatmul.bf16.gmra.mxu0 %v1318
  %v1978 = vpop.f32.mrf.mxu0
  %v1979 = vadd.f32 %v1382, %v1978
  %v1980 = vpop.f32.mrf.mxu0
  %v1981 = vadd.f32 %v1382, %v1980
  %1982 = vmatmul.bf16.gmra.mxu0 %v1319
  %v1983 = vpop.f32.mrf.mxu0
  %v1984 = vadd.f32 %v1382, %v1983
  %v1985 = vpop.f32.mrf.mxu0
  %v1986 = vadd.f32 %v1382, %v1985
  %1987 = vmatmul.bf16.gmra.mxu0 %v1320
  %v1988 = vpop.f32.mrf.mxu0
  %v1989 = vadd.f32 %v1382, %v1988
  %v1990 = vpop.f32.mrf.mxu0
  %v1991 = vadd.f32 %v1382, %v1990
  %1992 = vmatmul.bf16.gmra.mxu0 %v1321
  %v1993 = vpop.f32.mrf.mxu0
  %v1994 = vadd.f32 %v1382, %v1993
  %v1995 = vpop.f32.mrf.mxu0
  %v1996 = vadd.f32 %v1382, %v1995
  %1997 = vmatmul.bf16.gmra.mxu0 %v1322
  %v1998 = vpop.f32.mrf.mxu0
  %v1999 = vadd.f32 %v1382, %v1998
  %v2000 = vpop.f32.mrf.mxu0
  %v2001 = vadd.f32 %v1382, %v2000
  %2002 = vmatmul.bf16.gmra.mxu0 %v1323
  %v2003 = vpop.f32.mrf.mxu0
  %v2004 = vadd.f32 %v1382, %v2003
  %v2005 = vpop.f32.mrf.mxu0
  %v2006 = vadd.f32 %v1382, %v2005
  %2007 = vmatmul.bf16.gmra.mxu0 %v1324
  %v2008 = vpop.f32.mrf.mxu0
  %v2009 = vadd.f32 %v1382, %v2008
  %v2010 = vpop.f32.mrf.mxu0
  %v2011 = vadd.f32 %v1382, %v2010
  %2012 = vmatmul.bf16.gmra.mxu0 %v1325
  %v2013 = vpop.f32.mrf.mxu0
  %v2014 = vadd.f32 %v1382, %v2013
  %v2015 = vpop.f32.mrf.mxu0
  %v2016 = vadd.f32 %v1382, %v2015
  %2017 = vmatmul.bf16.gmra.mxu0 %v1326
  %v2018 = vpop.f32.mrf.mxu0
  %v2019 = vadd.f32 %v1382, %v2018
  %v2020 = vpop.f32.mrf.mxu0
  %v2021 = vadd.f32 %v1382, %v2020
  %2022 = vmatmul.bf16.gmra.mxu0 %v1327
  %v2023 = vpop.f32.mrf.mxu0
  %v2024 = vadd.f32 %v1382, %v2023
  %v2025 = vpop.f32.mrf.mxu0
  %v2026 = vadd.f32 %v1382, %v2025
  %2027 = vmatmul.bf16.gmra.mxu0 %v1328
  %v2028 = vpop.f32.mrf.mxu0
  %v2029 = vadd.f32 %v1382, %v2028
  %v2030 = vpop.f32.mrf.mxu0
  %v2031 = vadd.f32 %v1382, %v2030
  %2032 = vmatmul.bf16.gmra.mxu0 %v1329
  %v2033 = vpop.f32.mrf.mxu0
  %v2034 = vadd.f32 %v1382, %v2033
  %v2035 = vpop.f32.mrf.mxu0
  %v2036 = vadd.f32 %v1382, %v2035
  %2037 = vmatmul.bf16.gmra.mxu0 %v1330
  %v2038 = vpop.f32.mrf.mxu0
  %v2039 = vadd.f32 %v1382, %v2038
  %v2040 = vpop.f32.mrf.mxu0
  %v2041 = vadd.f32 %v1382, %v2040
  %2042 = vmatmul.bf16.gmra.mxu0 %v1331
  %v2043 = vpop.f32.mrf.mxu0
  %v2044 = vadd.f32 %v1382, %v2043
  %v2045 = vpop.f32.mrf.mxu0
  %v2046 = vadd.f32 %v1382, %v2045
  %2047 = vmatmul.bf16.gmra.mxu0 %v1332
  %v2048 = vpop.f32.mrf.mxu0
  %v2049 = vadd.f32 %v1382, %v2048
  %v2050 = vpop.f32.mrf.mxu0
  %v2051 = vadd.f32 %v1382, %v2050
  %2052 = vmatmul.bf16.gmra.mxu0 %v1333
  %v2053 = vpop.f32.mrf.mxu0
  %v2054 = vadd.f32 %v1382, %v2053
  %v2055 = vpop.f32.mrf.mxu0
  %v2056 = vadd.f32 %v1382, %v2055
  %2057 = vmatmul.bf16.gmra.mxu0 %v1334
  %v2058 = vpop.f32.mrf.mxu0
  %v2059 = vadd.f32 %v1382, %v2058
  %v2060 = vpop.f32.mrf.mxu0
  %v2061 = vadd.f32 %v1382, %v2060
  %2062 = vmatmul.bf16.gmra.mxu0 %v1335
  %v2063 = vpop.f32.mrf.mxu0
  %v2064 = vadd.f32 %v1382, %v2063
  %v2065 = vpop.f32.mrf.mxu0
  %v2066 = vadd.f32 %v1382, %v2065
  %2067 = vmatmul.bf16.gmra.mxu0 %v1336
  %v2068 = vpop.f32.mrf.mxu0
  %v2069 = vadd.f32 %v1382, %v2068
  %v2070 = vpop.f32.mrf.mxu0
  %v2071 = vadd.f32 %v1382, %v2070
  %2072 = vmatmul.bf16.gmra.mxu0 %v1337
  %v2073 = vpop.f32.mrf.mxu0
  %v2074 = vadd.f32 %v1382, %v2073
  %v2075 = vpop.f32.mrf.mxu0
  %v2076 = vadd.f32 %v1382, %v2075
  %2077 = vmatmul.bf16.gmra.mxu0 %v1338
  %v2078 = vpop.f32.mrf.mxu0
  %v2079 = vadd.f32 %v1382, %v2078
  %v2080 = vpop.f32.mrf.mxu0
  %v2081 = vadd.f32 %v1382, %v2080
  %2082 = vmatmul.bf16.gmra.mxu0 %v1339
  %v2083 = vpop.f32.mrf.mxu0
  %v2084 = vadd.f32 %v1382, %v2083
  %v2085 = vpop.f32.mrf.mxu0
  %v2086 = vadd.f32 %v1382, %v2085
  %2087 = vmatmul.bf16.gmra.mxu0 %v1340
  %v2088 = vpop.f32.mrf.mxu0
  %v2089 = vadd.f32 %v1382, %v2088
  %v2090 = vpop.f32.mrf.mxu0
  %v2091 = vadd.f32 %v1382, %v2090
  %2092 = vmatmul.bf16.gmra.mxu0 %v1341
  %v2093 = vpop.f32.mrf.mxu0
  %v2094 = vadd.f32 %v1382, %v2093
  %v2095 = vpop.f32.mrf.mxu0
  %v2096 = vadd.f32 %v1382, %v2095
  %2097 = vmatmul.bf16.gmra.mxu0 %v1342
  %v2098 = vpop.f32.mrf.mxu0
  %v2099 = vadd.f32 %v1382, %v2098
  %v2100 = vpop.f32.mrf.mxu0
  %v2101 = vadd.f32 %v1382, %v2100
  %2102 = vmatmul.bf16.gmra.mxu0 %v1343
  %v2103 = vpop.f32.mrf.mxu0
  %v2104 = vadd.f32 %v1382, %v2103
  %v2105 = vpop.f32.mrf.mxu0
  %v2106 = vadd.f32 %v1382, %v2105
  %2107 = vmatmul.bf16.gmra.mxu0 %v1344
  %v2108 = vpop.f32.mrf.mxu0
  %v2109 = vadd.f32 %v1382, %v2108
  %v2110 = vpop.f32.mrf.mxu0
  %v2111 = vadd.f32 %v1382, %v2110
  %2112 = vmatmul.bf16.gmra.mxu0 %v1345
  %v2113 = vpop.f32.mrf.mxu0
  %v2114 = vadd.f32 %v1382, %v2113
  %v2115 = vpop.f32.mrf.mxu0
  %v2116 = vadd.f32 %v1382, %v2115
  %2117 = vmatmul.bf16.gmra.mxu0 %v1346
  %v2118 = vpop.f32.mrf.mxu0
  %v2119 = vadd.f32 %v1382, %v2118
  %v2120 = vpop.f32.mrf.mxu0
  %v2121 = vadd.f32 %v1382, %v2120
  %2122 = vmatmul.bf16.gmra.mxu0 %v1347
  %v2123 = vpop.f32.mrf.mxu0
  %v2124 = vadd.f32 %v1382, %v2123
  %v2125 = vpop.f32.mrf.mxu0
  %v2126 = vadd.f32 %v1382, %v2125
  %2127 = vmatmul.bf16.gmra.mxu0 %v1348
  %v2128 = vpop.f32.mrf.mxu0
  %v2129 = vadd.f32 %v1382, %v2128
  %v2130 = vpop.f32.mrf.mxu0
  %v2131 = vadd.f32 %v1382, %v2130
  %2132 = vmatmul.bf16.gmra.mxu0 %v1349
  %v2133 = vpop.f32.mrf.mxu0
  %v2134 = vadd.f32 %v1382, %v2133
  %v2135 = vpop.f32.mrf.mxu0
  %v2136 = vadd.f32 %v1382, %v2135
  %2137 = vmatmul.bf16.gmra.mxu0 %v1350
  %v2138 = vpop.f32.mrf.mxu0
  %v2139 = vadd.f32 %v1382, %v2138
  %v2140 = vpop.f32.mrf.mxu0
  %v2141 = vadd.f32 %v1382, %v2140
  %2142 = vmatmul.bf16.gmra.mxu0 %v1351
  %v2143 = vpop.f32.mrf.mxu0
  %v2144 = vadd.f32 %v1382, %v2143
  %v2145 = vpop.f32.mrf.mxu0
  %v2146 = vadd.f32 %v1382, %v2145
  %2147 = vmatmul.bf16.gmra.mxu0 %v1352
  %v2148 = vpop.f32.mrf.mxu0
  %v2149 = vadd.f32 %v1382, %v2148
  %v2150 = vpop.f32.mrf.mxu0
  %v2151 = vadd.f32 %v1382, %v2150
  %2152 = vmatmul.bf16.gmra.mxu0 %v1353
  %v2153 = vpop.f32.mrf.mxu0
  %v2154 = vadd.f32 %v1382, %v2153
  %v2155 = vpop.f32.mrf.mxu0
  %v2156 = vadd.f32 %v1382, %v2155
  %2157 = vmatmul.bf16.gmra.mxu0 %v1354
  %v2158 = vpop.f32.mrf.mxu0
  %v2159 = vadd.f32 %v1382, %v2158
  %v2160 = vpop.f32.mrf.mxu0
  %v2161 = vadd.f32 %v1382, %v2160
  %2162 = vmatmul.bf16.gmra.mxu0 %v1355
  %v2163 = vpop.f32.mrf.mxu0
  %v2164 = vadd.f32 %v1382, %v2163
  %v2165 = vpop.f32.mrf.mxu0
  %v2166 = vadd.f32 %v1382, %v2165
  %2167 = vmatmul.bf16.gmra.mxu0 %v1356
  %v2168 = vpop.f32.mrf.mxu0
  %v2169 = vadd.f32 %v1382, %v2168
  %v2170 = vpop.f32.mrf.mxu0
  %v2171 = vadd.f32 %v1382, %v2170
  %2172 = vmatmul.bf16.gmra.mxu0 %v1357
  %v2173 = vpop.f32.mrf.mxu0
  %v2174 = vadd.f32 %v1382, %v2173
  %v2175 = vpop.f32.mrf.mxu0
  %v2176 = vadd.f32 %v1382, %v2175
  %2177 = vmatmul.bf16.gmra.mxu0 %v1358
  %v2178 = vpop.f32.mrf.mxu0
  %v2179 = vadd.f32 %v1382, %v2178
  %v2180 = vpop.f32.mrf.mxu0
  %v2181 = vadd.f32 %v1382, %v2180
  %2182 = vmatmul.bf16.gmra.mxu0 %v1359
  %v2183 = vpop.f32.mrf.mxu0
  %v2184 = vadd.f32 %v1382, %v2183
  %v2185 = vpop.f32.mrf.mxu0
  %v2186 = vadd.f32 %v1382, %v2185
  %2187 = vmatmul.bf16.gmra.mxu0 %v1360
  %v2188 = vpop.f32.mrf.mxu0
  %v2189 = vadd.f32 %v1382, %v2188
  %v2190 = vpop.f32.mrf.mxu0
  %v2191 = vadd.f32 %v1382, %v2190
  %2192 = vmatmul.bf16.gmra.mxu0 %v1361
  %v2193 = vpop.f32.mrf.mxu0
  %v2194 = vadd.f32 %v1382, %v2193
  %v2195 = vpop.f32.mrf.mxu0
  %v2196 = vadd.f32 %v1382, %v2195
  %2197 = vmatmul.bf16.gmra.mxu0 %v1362
  %v2198 = vpop.f32.mrf.mxu0
  %v2199 = vadd.f32 %v1382, %v2198
  %v2200 = vpop.f32.mrf.mxu0
  %v2201 = vadd.f32 %v1382, %v2200
  %2202 = vdwg.mxu0
  %v2203 = vmax.f32 %v1475, 0.0
  %v2204 = vmax.f32 %v1844, 0.0
  %v2205 = vmax.f32 %v1477, 0.0
  %v2206 = vmax.f32 %v1846, 0.0
  %v2207 = vmax.f32 %v1480, 0.0
  %v2208 = vmax.f32 %v1849, 0.0
  %v2209 = vmax.f32 %v1482, 0.0
  %v2210 = vmax.f32 %v1851, 0.0
  %v2211 = vmax.f32 %v1485, 0.0
  %v2212 = vmax.f32 %v1854, 0.0
  %v2213 = vmax.f32 %v1487, 0.0
  %v2214 = vmax.f32 %v1856, 0.0
  %v2215 = vmax.f32 %v1490, 0.0
  %v2216 = vmax.f32 %v1859, 0.0
  %v2217 = vmax.f32 %v1492, 0.0
  %v2218 = vmax.f32 %v1861, 0.0
  %v2219 = vmax.f32 %v1495, 0.0
  %v2220 = vmax.f32 %v1864, 0.0
  %v2221 = vmax.f32 %v1497, 0.0
  %v2222 = vmax.f32 %v1866, 0.0
  %v2223 = vmax.f32 %v1500, 0.0
  %v2224 = vmax.f32 %v1869, 0.0
  %v2225 = vmax.f32 %v1502, 0.0
  %v2226 = vmax.f32 %v1871, 0.0
  %v2227 = vmax.f32 %v1505, 0.0
  %v2228 = vmax.f32 %v1874, 0.0
  %v2229 = vmax.f32 %v1507, 0.0
  %v2230 = vmax.f32 %v1876, 0.0
  %v2231 = vmax.f32 %v1510, 0.0
  %v2232 = vmax.f32 %v1879, 0.0
  %v2233 = vmax.f32 %v1512, 0.0
  %v2234 = vmax.f32 %v1881, 0.0
  %v2235 = vmax.f32 %v1515, 0.0
  %v2236 = vmax.f32 %v1884, 0.0
  %v2237 = vmax.f32 %v1517, 0.0
  %v2238 = vmax.f32 %v1886, 0.0
  %v2239 = vmax.f32 %v1520, 0.0
  %v2240 = vmax.f32 %v1889, 0.0
  %v2241 = vmax.f32 %v1522, 0.0
  %v2242 = vmax.f32 %v1891, 0.0
  %v2243 = vmax.f32 %v1525, 0.0
  %v2244 = vmax.f32 %v1894, 0.0
  %v2245 = vmax.f32 %v1527, 0.0
  %v2246 = vmax.f32 %v1896, 0.0
  %v2247 = vmax.f32 %v1530, 0.0
  %v2248 = vmax.f32 %v1899, 0.0
  %v2249 = vmax.f32 %v1532, 0.0
  %v2250 = vmax.f32 %v1901, 0.0
  %v2251 = vmax.f32 %v1535, 0.0
  %v2252 = vmax.f32 %v1904, 0.0
  %v2253 = vmax.f32 %v1537, 0.0
  %v2254 = vmax.f32 %v1906, 0.0
  %v2255 = vmax.f32 %v1540, 0.0
  %v2256 = vmax.f32 %v1909, 0.0
  %v2257 = vmax.f32 %v1542, 0.0
  %v2258 = vmax.f32 %v1911, 0.0
  %v2259 = vmax.f32 %v1545, 0.0
  %v2260 = vmax.f32 %v1914, 0.0
  %v2261 = vmax.f32 %v1547, 0.0
  %v2262 = vmax.f32 %v1916, 0.0
  %v2263 = vmax.f32 %v1550, 0.0
  %v2264 = vmax.f32 %v1919, 0.0
  %v2265 = vmax.f32 %v1552, 0.0
  %v2266 = vmax.f32 %v1921, 0.0
  %v2267 = vmax.f32 %v1555, 0.0
  %v2268 = vmax.f32 %v1924, 0.0
  %v2269 = vmax.f32 %v1557, 0.0
  %v2270 = vmax.f32 %v1926, 0.0
  %v2271 = vmax.f32 %v1560, 0.0
  %v2272 = vmax.f32 %v1929, 0.0
  %v2273 = vmax.f32 %v1562, 0.0
  %v2274 = vmax.f32 %v1931, 0.0
  %v2275 = vmax.f32 %v1565, 0.0
  %v2276 = vmax.f32 %v1934, 0.0
  %v2277 = vmax.f32 %v1567, 0.0
  %v2278 = vmax.f32 %v1936, 0.0
  %v2279 = vmax.f32 %v1570, 0.0
  %v2280 = vmax.f32 %v1939, 0.0
  %v2281 = vmax.f32 %v1572, 0.0
  %v2282 = vmax.f32 %v1941, 0.0
  %v2283 = vmax.f32 %v1575, 0.0
  %v2284 = vmax.f32 %v1944, 0.0
  %v2285 = vmax.f32 %v1577, 0.0
  %v2286 = vmax.f32 %v1946, 0.0
  %v2287 = vmax.f32 %v1580, 0.0
  %v2288 = vmax.f32 %v1949, 0.0
  %v2289 = vmax.f32 %v1582, 0.0
  %v2290 = vmax.f32 %v1951, 0.0
  %v2291 = vmax.f32 %v1585, 0.0
  %v2292 = vmax.f32 %v1954, 0.0
  %v2293 = vmax.f32 %v1587, 0.0
  %v2294 = vmax.f32 %v1956, 0.0
  %v2295 = vmax.f32 %v1590, 0.0
  %v2296 = vmax.f32 %v1959, 0.0
  %v2297 = vmax.f32 %v1592, 0.0
  %v2298 = vmax.f32 %v1961, 0.0
  %v2299 = vmax.f32 %v1595, 0.0
  %v2300 = vmax.f32 %v1964, 0.0
  %v2301 = vmax.f32 %v1597, 0.0
  %v2302 = vmax.f32 %v1966, 0.0
  %v2303 = vmax.f32 %v1600, 0.0
  %v2304 = vmax.f32 %v1969, 0.0
  %v2305 = vmax.f32 %v1602, 0.0
  %v2306 = vmax.f32 %v1971, 0.0
  %v2307 = vmax.f32 %v1605, 0.0
  %v2308 = vmax.f32 %v1974, 0.0
  %v2309 = vmax.f32 %v1607, 0.0
  %v2310 = vmax.f32 %v1976, 0.0
  %v2311 = vmax.f32 %v1610, 0.0
  %v2312 = vmax.f32 %v1979, 0.0
  %v2313 = vmax.f32 %v1612, 0.0
  %v2314 = vmax.f32 %v1981, 0.0
  %v2315 = vmax.f32 %v1615, 0.0
  %v2316 = vmax.f32 %v1984, 0.0
  %v2317 = vmax.f32 %v1617, 0.0
  %v2318 = vmax.f32 %v1986, 0.0
  %v2319 = vmax.f32 %v1620, 0.0
  %v2320 = vmax.f32 %v1989, 0.0
  %v2321 = vmax.f32 %v1622, 0.0
  %v2322 = vmax.f32 %v1991, 0.0
  %v2323 = vmax.f32 %v1625, 0.0
  %v2324 = vmax.f32 %v1994, 0.0
  %v2325 = vmax.f32 %v1627, 0.0
  %v2326 = vmax.f32 %v1996, 0.0
  %v2327 = vmax.f32 %v1630, 0.0
  %v2328 = vmax.f32 %v1999, 0.0
  %v2329 = vmax.f32 %v1632, 0.0
  %v2330 = vmax.f32 %v2001, 0.0
  %v2331 = vmax.f32 %v1635, 0.0
  %v2332 = vmax.f32 %v2004, 0.0
  %v2333 = vmax.f32 %v1637, 0.0
  %v2334 = vmax.f32 %v2006, 0.0
  %v2335 = vmax.f32 %v1640, 0.0
  %v2336 = vmax.f32 %v2009, 0.0
  %v2337 = vmax.f32 %v1642, 0.0
  %v2338 = vmax.f32 %v2011, 0.0
  %v2339 = vmax.f32 %v1645, 0.0
  %v2340 = vmax.f32 %v2014, 0.0
  %v2341 = vmax.f32 %v1647, 0.0
  %v2342 = vmax.f32 %v2016, 0.0
  %v2343 = vmax.f32 %v1650, 0.0
  %v2344 = vmax.f32 %v2019, 0.0
  %v2345 = vmax.f32 %v1652, 0.0
  %v2346 = vmax.f32 %v2021, 0.0
  %v2347 = vmax.f32 %v1655, 0.0
  %v2348 = vmax.f32 %v2024, 0.0
  %v2349 = vmax.f32 %v1657, 0.0
  %v2350 = vmax.f32 %v2026, 0.0
  %v2351 = vmax.f32 %v1660, 0.0
  %v2352 = vmax.f32 %v2029, 0.0
  %v2353 = vmax.f32 %v1662, 0.0
  %v2354 = vmax.f32 %v2031, 0.0
  %v2355 = vmax.f32 %v1665, 0.0
  %v2356 = vmax.f32 %v2034, 0.0
  %v2357 = vmax.f32 %v1667, 0.0
  %v2358 = vmax.f32 %v2036, 0.0
  %v2359 = vmax.f32 %v1670, 0.0
  %v2360 = vmax.f32 %v2039, 0.0
  %v2361 = vmax.f32 %v1672, 0.0
  %v2362 = vmax.f32 %v2041, 0.0
  %v2363 = vmax.f32 %v1675, 0.0
  %v2364 = vmax.f32 %v2044, 0.0
  %v2365 = vmax.f32 %v1677, 0.0
  %v2366 = vmax.f32 %v2046, 0.0
  %v2367 = vmax.f32 %v1680, 0.0
  %v2368 = vmax.f32 %v2049, 0.0
  %v2369 = vmax.f32 %v1682, 0.0
  %v2370 = vmax.f32 %v2051, 0.0
  %v2371 = vmax.f32 %v1685, 0.0
  %v2372 = vmax.f32 %v2054, 0.0
  %v2373 = vmax.f32 %v1687, 0.0
  %v2374 = vmax.f32 %v2056, 0.0
  %v2375 = vmax.f32 %v1690, 0.0
  %v2376 = vmax.f32 %v2059, 0.0
  %v2377 = vmax.f32 %v1692, 0.0
  %v2378 = vmax.f32 %v2061, 0.0
  %v2379 = vmax.f32 %v1695, 0.0
  %v2380 = vmax.f32 %v2064, 0.0
  %v2381 = vmax.f32 %v1697, 0.0
  %v2382 = vmax.f32 %v2066, 0.0
  %v2383 = vmax.f32 %v1700, 0.0
  %v2384 = vmax.f32 %v2069, 0.0
  %v2385 = vmax.f32 %v1702, 0.0
  %v2386 = vmax.f32 %v2071, 0.0
  %v2387 = vmax.f32 %v1705, 0.0
  %v2388 = vmax.f32 %v2074, 0.0
  %v2389 = vmax.f32 %v1707, 0.0
  %v2390 = vmax.f32 %v2076, 0.0
  %v2391 = vmax.f32 %v1710, 0.0
  %v2392 = vmax.f32 %v2079, 0.0
  %v2393 = vmax.f32 %v1712, 0.0
  %v2394 = vmax.f32 %v2081, 0.0
  %v2395 = vmax.f32 %v1715, 0.0
  %v2396 = vmax.f32 %v2084, 0.0
  %v2397 = vmax.f32 %v1717, 0.0
  %v2398 = vmax.f32 %v2086, 0.0
  %v2399 = vmax.f32 %v1720, 0.0
  %v2400 = vmax.f32 %v2089, 0.0
  %v2401 = vmax.f32 %v1722, 0.0
  %v2402 = vmax.f32 %v2091, 0.0
  %v2403 = vmax.f32 %v1725, 0.0
  %v2404 = vmax.f32 %v2094, 0.0
  %v2405 = vmax.f32 %v1727, 0.0
  %v2406 = vmax.f32 %v2096, 0.0
  %v2407 = vmax.f32 %v1730, 0.0
  %v2408 = vmax.f32 %v2099, 0.0
  %v2409 = vmax.f32 %v1732, 0.0
  %v2410 = vmax.f32 %v2101, 0.0
  %v2411 = vmax.f32 %v1735, 0.0
  %v2412 = vmax.f32 %v2104, 0.0
  %v2413 = vmax.f32 %v1737, 0.0
  %v2414 = vmax.f32 %v2106, 0.0
  %v2415 = vmax.f32 %v1740, 0.0
  %v2416 = vmax.f32 %v2109, 0.0
  %v2417 = vmax.f32 %v1742, 0.0
  %v2418 = vmax.f32 %v2111, 0.0
  %v2419 = vmax.f32 %v1745, 0.0
  %v2420 = vmax.f32 %v2114, 0.0
  %v2421 = vmax.f32 %v1747, 0.0
  %v2422 = vmax.f32 %v2116, 0.0
  %v2423 = vmax.f32 %v1750, 0.0
  %v2424 = vmax.f32 %v2119, 0.0
  %v2425 = vmax.f32 %v1752, 0.0
  %v2426 = vmax.f32 %v2121, 0.0
  %v2427 = vmax.f32 %v1755, 0.0
  %v2428 = vmax.f32 %v2124, 0.0
  %v2429 = vmax.f32 %v1757, 0.0
  %v2430 = vmax.f32 %v2126, 0.0
  %v2431 = vmax.f32 %v1760, 0.0
  %v2432 = vmax.f32 %v2129, 0.0
  %v2433 = vmax.f32 %v1762, 0.0
  %v2434 = vmax.f32 %v2131, 0.0
  %v2435 = vmax.f32 %v1765, 0.0
  %v2436 = vmax.f32 %v2134, 0.0
  %v2437 = vmax.f32 %v1767, 0.0
  %v2438 = vmax.f32 %v2136, 0.0
  %v2439 = vmax.f32 %v1770, 0.0
  %v2440 = vmax.f32 %v2139, 0.0
  %v2441 = vmax.f32 %v1772, 0.0
  %v2442 = vmax.f32 %v2141, 0.0
  %v2443 = vmax.f32 %v1775, 0.0
  %v2444 = vmax.f32 %v2144, 0.0
  %v2445 = vmax.f32 %v1777, 0.0
  %v2446 = vmax.f32 %v2146, 0.0
  %v2447 = vmax.f32 %v1780, 0.0
  %v2448 = vmax.f32 %v2149, 0.0
  %v2449 = vmax.f32 %v1782, 0.0
  %v2450 = vmax.f32 %v2151, 0.0
  %v2451 = vmax.f32 %v1785, 0.0
  %v2452 = vmax.f32 %v2154, 0.0
  %v2453 = vmax.f32 %v1787, 0.0
  %v2454 = vmax.f32 %v2156, 0.0
  %v2455 = vmax.f32 %v1790, 0.0
  %v2456 = vmax.f32 %v2159, 0.0
  %v2457 = vmax.f32 %v1792, 0.0
  %v2458 = vmax.f32 %v2161, 0.0
  %v2459 = vmax.f32 %v1795, 0.0
  %v2460 = vmax.f32 %v2164, 0.0
  %v2461 = vmax.f32 %v1797, 0.0
  %v2462 = vmax.f32 %v2166, 0.0
  %v2463 = vmax.f32 %v1800, 0.0
  %v2464 = vmax.f32 %v2169, 0.0
  %v2465 = vmax.f32 %v1802, 0.0
  %v2466 = vmax.f32 %v2171, 0.0
  %v2467 = vmax.f32 %v1805, 0.0
  %v2468 = vmax.f32 %v2174, 0.0
  %v2469 = vmax.f32 %v1807, 0.0
  %v2470 = vmax.f32 %v2176, 0.0
  %v2471 = vmax.f32 %v1810, 0.0
  %v2472 = vmax.f32 %v2179, 0.0
  %v2473 = vmax.f32 %v1812, 0.0
  %v2474 = vmax.f32 %v2181, 0.0
  %v2475 = vmax.f32 %v1815, 0.0
  %v2476 = vmax.f32 %v2184, 0.0
  %v2477 = vmax.f32 %v1817, 0.0
  %v2478 = vmax.f32 %v2186, 0.0
  %v2479 = vmax.f32 %v1820, 0.0
  %v2480 = vmax.f32 %v2189, 0.0
  %v2481 = vmax.f32 %v1822, 0.0
  %v2482 = vmax.f32 %v2191, 0.0
  %v2483 = vmax.f32 %v1825, 0.0
  %v2484 = vmax.f32 %v2194, 0.0
  %v2485 = vmax.f32 %v1827, 0.0
  %v2486 = vmax.f32 %v2196, 0.0
  %v2487 = vmax.f32 %v1830, 0.0
  %v2488 = vmax.f32 %v2199, 0.0
  %v2489 = vmax.f32 %v1832, 0.0
  %v2490 = vmax.f32 %v2201, 0.0
  %v2491 = vpack.c.bf16 %v2204, %v2203
  %v2492 = vpack.c.bf16 %v2206, %v2205
  %v2493 = vpack.c.bf16 %v2208, %v2207
  %v2494 = vpack.c.bf16 %v2210, %v2209
  %v2495 = vpack.c.bf16 %v2212, %v2211
  %v2496 = vpack.c.bf16 %v2214, %v2213
  %v2497 = vpack.c.bf16 %v2216, %v2215
  %v2498 = vpack.c.bf16 %v2218, %v2217
  %v2499 = vpack.c.bf16 %v2220, %v2219
  %v2500 = vpack.c.bf16 %v2222, %v2221
  %v2501 = vpack.c.bf16 %v2224, %v2223
  %v2502 = vpack.c.bf16 %v2226, %v2225
  %v2503 = vpack.c.bf16 %v2228, %v2227
  %v2504 = vpack.c.bf16 %v2230, %v2229
  %v2505 = vpack.c.bf16 %v2232, %v2231
  %v2506 = vpack.c.bf16 %v2234, %v2233
  %v2507 = vpack.c.bf16 %v2236, %v2235
  %v2508 = vpack.c.bf16 %v2238, %v2237
  %v2509 = vpack.c.bf16 %v2240, %v2239
  %v2510 = vpack.c.bf16 %v2242, %v2241
  %v2511 = vpack.c.bf16 %v2244, %v2243
  %v2512 = vpack.c.bf16 %v2246, %v2245
  %v2513 = vpack.c.bf16 %v2248, %v2247
  %v2514 = vpack.c.bf16 %v2250, %v2249
  %v2515 = vpack.c.bf16 %v2252, %v2251
  %v2516 = vpack.c.bf16 %v2254, %v2253
  %v2517 = vpack.c.bf16 %v2256, %v2255
  %v2518 = vpack.c.bf16 %v2258, %v2257
  %v2519 = vpack.c.bf16 %v2260, %v2259
  %v2520 = vpack.c.bf16 %v2262, %v2261
  %v2521 = vpack.c.bf16 %v2264, %v2263
  %v2522 = vpack.c.bf16 %v2266, %v2265
  %v2523 = vpack.c.bf16 %v2268, %v2267
  %v2524 = vpack.c.bf16 %v2270, %v2269
  %v2525 = vpack.c.bf16 %v2272, %v2271
  %v2526 = vpack.c.bf16 %v2274, %v2273
  %v2527 = vpack.c.bf16 %v2276, %v2275
  %v2528 = vpack.c.bf16 %v2278, %v2277
  %v2529 = vpack.c.bf16 %v2280, %v2279
  %v2530 = vpack.c.bf16 %v2282, %v2281
  %v2531 = vpack.c.bf16 %v2284, %v2283
  %v2532 = vpack.c.bf16 %v2286, %v2285
  %v2533 = vpack.c.bf16 %v2288, %v2287
  %v2534 = vpack.c.bf16 %v2290, %v2289
  %v2535 = vpack.c.bf16 %v2292, %v2291
  %v2536 = vpack.c.bf16 %v2294, %v2293
  %v2537 = vpack.c.bf16 %v2296, %v2295
  %v2538 = vpack.c.bf16 %v2298, %v2297
  %v2539 = vpack.c.bf16 %v2300, %v2299
  %v2540 = vpack.c.bf16 %v2302, %v2301
  %v2541 = vpack.c.bf16 %v2304, %v2303
  %v2542 = vpack.c.bf16 %v2306, %v2305
  %v2543 = vpack.c.bf16 %v2308, %v2307
  %v2544 = vpack.c.bf16 %v2310, %v2309
  %v2545 = vpack.c.bf16 %v2312, %v2311
  %v2546 = vpack.c.bf16 %v2314, %v2313
  %v2547 = vpack.c.bf16 %v2316, %v2315
  %v2548 = vpack.c.bf16 %v2318, %v2317
  %v2549 = vpack.c.bf16 %v2320, %v2319
  %v2550 = vpack.c.bf16 %v2322, %v2321
  %v2551 = vpack.c.bf16 %v2324, %v2323
  %v2552 = vpack.c.bf16 %v2326, %v2325
  %v2553 = vpack.c.bf16 %v2328, %v2327
  %v2554 = vpack.c.bf16 %v2330, %v2329
  %v2555 = vpack.c.bf16 %v2332, %v2331
  %v2556 = vpack.c.bf16 %v2334, %v2333
  %v2557 = vpack.c.bf16 %v2336, %v2335
  %v2558 = vpack.c.bf16 %v2338, %v2337
  %v2559 = vpack.c.bf16 %v2340, %v2339
  %v2560 = vpack.c.bf16 %v2342, %v2341
  %v2561 = vpack.c.bf16 %v2344, %v2343
  %v2562 = vpack.c.bf16 %v2346, %v2345
  %v2563 = vpack.c.bf16 %v2348, %v2347
  %v2564 = vpack.c.bf16 %v2350, %v2349
  %v2565 = vpack.c.bf16 %v2352, %v2351
  %v2566 = vpack.c.bf16 %v2354, %v2353
  %v2567 = vpack.c.bf16 %v2356, %v2355
  %v2568 = vpack.c.bf16 %v2358, %v2357
  %v2569 = vpack.c.bf16 %v2360, %v2359
  %v2570 = vpack.c.bf16 %v2362, %v2361
  %v2571 = vpack.c.bf16 %v2364, %v2363
  %v2572 = vpack.c.bf16 %v2366, %v2365
  %v2573 = vpack.c.bf16 %v2368, %v2367
  %v2574 = vpack.c.bf16 %v2370, %v2369
  %v2575 = vpack.c.bf16 %v2372, %v2371
  %v2576 = vpack.c.bf16 %v2374, %v2373
  %v2577 = vpack.c.bf16 %v2376, %v2375
  %v2578 = vpack.c.bf16 %v2378, %v2377
  %v2579 = vpack.c.bf16 %v2380, %v2379
  %v2580 = vpack.c.bf16 %v2382, %v2381
  %v2581 = vpack.c.bf16 %v2384, %v2383
  %v2582 = vpack.c.bf16 %v2386, %v2385
  %v2583 = vpack.c.bf16 %v2388, %v2387
  %v2584 = vpack.c.bf16 %v2390, %v2389
  %v2585 = vpack.c.bf16 %v2392, %v2391
  %v2586 = vpack.c.bf16 %v2394, %v2393
  %v2587 = vpack.c.bf16 %v2396, %v2395
  %v2588 = vpack.c.bf16 %v2398, %v2397
  %v2589 = vpack.c.bf16 %v2400, %v2399
  %v2590 = vpack.c.bf16 %v2402, %v2401
  %v2591 = vpack.c.bf16 %v2404, %v2403
  %v2592 = vpack.c.bf16 %v2406, %v2405
  %v2593 = vpack.c.bf16 %v2408, %v2407
  %v2594 = vpack.c.bf16 %v2410, %v2409
  %v2595 = vpack.c.bf16 %v2412, %v2411
  %v2596 = vpack.c.bf16 %v2414, %v2413
  %v2597 = vpack.c.bf16 %v2416, %v2415
  %v2598 = vpack.c.bf16 %v2418, %v2417
  %v2599 = vpack.c.bf16 %v2420, %v2419
  %v2600 = vpack.c.bf16 %v2422, %v2421
  %v2601 = vpack.c.bf16 %v2424, %v2423
  %v2602 = vpack.c.bf16 %v2426, %v2425
  %v2603 = vpack.c.bf16 %v2428, %v2427
  %v2604 = vpack.c.bf16 %v2430, %v2429
  %v2605 = vpack.c.bf16 %v2432, %v2431
  %v2606 = vpack.c.bf16 %v2434, %v2433
  %v2607 = vpack.c.bf16 %v2436, %v2435
  %v2608 = vpack.c.bf16 %v2438, %v2437
  %v2609 = vpack.c.bf16 %v2440, %v2439
  %v2610 = vpack.c.bf16 %v2442, %v2441
  %v2611 = vpack.c.bf16 %v2444, %v2443
  %v2612 = vpack.c.bf16 %v2446, %v2445
  %v2613 = vpack.c.bf16 %v2448, %v2447
  %v2614 = vpack.c.bf16 %v2450, %v2449
  %v2615 = vpack.c.bf16 %v2452, %v2451
  %v2616 = vpack.c.bf16 %v2454, %v2453
  %v2617 = vpack.c.bf16 %v2456, %v2455
  %v2618 = vpack.c.bf16 %v2458, %v2457
  %v2619 = vpack.c.bf16 %v2460, %v2459
  %v2620 = vpack.c.bf16 %v2462, %v2461
  %v2621 = vpack.c.bf16 %v2464, %v2463
  %v2622 = vpack.c.bf16 %v2466, %v2465
  %v2623 = vpack.c.bf16 %v2468, %v2467
  %v2624 = vpack.c.bf16 %v2470, %v2469
  %v2625 = vpack.c.bf16 %v2472, %v2471
  %v2626 = vpack.c.bf16 %v2474, %v2473
  %v2627 = vpack.c.bf16 %v2476, %v2475
  %v2628 = vpack.c.bf16 %v2478, %v2477
  %v2629 = vpack.c.bf16 %v2480, %v2479
  %v2630 = vpack.c.bf16 %v2482, %v2481
  %v2631 = vpack.c.bf16 %v2484, %v2483
  %v2632 = vpack.c.bf16 %v2486, %v2485
  %v2633 = vpack.c.bf16 %v2488, %v2487
  %v2634 = vpack.c.bf16 %v2490, %v2489
  %v2635 = vld [vmem:[%s6] sm:$0xf]
  %v2636 = vld [vmem:[%s6 + $0x8] sm:$0xf]
  %v2637 = vld [vmem:[%s6 + $0x10] sm:$0xf]
  %v2638 = vld [vmem:[%s6 + $0x18] sm:$0xf]
  %v2639 = vld [vmem:[%s6 + $0x20] sm:$0xf]
  %v2640 = vld [vmem:[%s6 + $0x28] sm:$0xf]
  %v2641 = vld [vmem:[%s6 + $0x30] sm:$0xf]
  %v2642 = vld [vmem:[%s6 + $0x38] sm:$0xf]
  %v2643 = vld [vmem:[%s6 + $0x40] sm:$0xf]
  %v2644 = vld [vmem:[%s6 + $0x48] sm:$0xf]
  %v2645 = vld [vmem:[%s6 + $0x50] sm:$0xf]
  %v2646 = vld [vmem:[%s6 + $0x58] sm:$0xf]
  %v2647 = vld [vmem:[%s6 + $0x60] sm:$0xf]
  %v2648 = vld [vmem:[%s6 + $0x68] sm:$0xf]
  %v2649 = vld [vmem:[%s6 + $0x70] sm:$0xf]
  %v2650 = vld [vmem:[%s6 + $0x78] sm:$0xf]
  %v2795 = vunpack.c.l.b16 %v2491
  %v2796 = vunpack.c.l.b16 %v2492
  %v2797 = vunpack.c.l.b16 %v2493
  %v2798 = vunpack.c.l.b16 %v2494
  %v2799 = vunpack.c.l.b16 %v2495
  %v2800 = vunpack.c.l.b16 %v2496
  %v2801 = vunpack.c.l.b16 %v2497
  %v2802 = vunpack.c.l.b16 %v2498
  %v2803 = vunpack.c.l.b16 %v2499
  %v2804 = vunpack.c.l.b16 %v2500
  %v2805 = vunpack.c.l.b16 %v2501
  %v2806 = vunpack.c.l.b16 %v2502
  %v2807 = vunpack.c.l.b16 %v2503
  %v2808 = vunpack.c.l.b16 %v2504
  %v2809 = vunpack.c.l.b16 %v2505
  %v2810 = vunpack.c.l.b16 %v2506
  %v2811 = vunpack.c.l.b16 %v2507
  %v2812 = vunpack.c.l.b16 %v2508
  %v2813 = vunpack.c.l.b16 %v2509
  %v2814 = vunpack.c.l.b16 %v2510
  %v2815 = vunpack.c.l.b16 %v2511
  %v2816 = vunpack.c.l.b16 %v2512
  %v2817 = vunpack.c.l.b16 %v2513
  %v2818 = vunpack.c.l.b16 %v2514
  %v2819 = vunpack.c.l.b16 %v2515
  %v2820 = vunpack.c.l.b16 %v2516
  %v2821 = vunpack.c.l.b16 %v2517
  %v2822 = vunpack.c.l.b16 %v2518
  %v2823 = vunpack.c.l.b16 %v2519
  %v2824 = vunpack.c.l.b16 %v2520
  %v2825 = vunpack.c.l.b16 %v2521
  %v2826 = vunpack.c.l.b16 %v2522
  %v2827 = vunpack.c.l.b16 %v2523
  %v2828 = vunpack.c.l.b16 %v2524
  %v2829 = vunpack.c.l.b16 %v2525
  %v2830 = vunpack.c.l.b16 %v2526
  %v2831 = vunpack.c.l.b16 %v2527
  %v2832 = vunpack.c.l.b16 %v2528
  %v2833 = vunpack.c.l.b16 %v2529
  %v2834 = vunpack.c.l.b16 %v2530
  %v2835 = vunpack.c.l.b16 %v2531
  %v2836 = vunpack.c.l.b16 %v2532
  %v2837 = vunpack.c.l.b16 %v2533
  %v2838 = vunpack.c.l.b16 %v2534
  %v2839 = vunpack.c.l.b16 %v2535
  %v2840 = vunpack.c.l.b16 %v2536
  %v2841 = vunpack.c.l.b16 %v2537
  %v2842 = vunpack.c.l.b16 %v2538
  %v2843 = vunpack.c.l.b16 %v2539
  %v2844 = vunpack.c.l.b16 %v2540
  %v2845 = vunpack.c.l.b16 %v2541
  %v2846 = vunpack.c.l.b16 %v2542
  %v2847 = vunpack.c.l.b16 %v2543
  %v2848 = vunpack.c.l.b16 %v2544
  %v2849 = vunpack.c.l.b16 %v2545
  %v2850 = vunpack.c.l.b16 %v2546
  %v2851 = vunpack.c.l.b16 %v2547
  %v2852 = vunpack.c.l.b16 %v2548
  %v2853 = vunpack.c.l.b16 %v2549
  %v2854 = vunpack.c.l.b16 %v2550
  %v2855 = vunpack.c.l.b16 %v2551
  %v2856 = vunpack.c.l.b16 %v2552
  %v2857 = vunpack.c.l.b16 %v2553
  %v2858 = vunpack.c.l.b16 %v2554
  %v2859 = vunpack.c.l.b16 %v2555
  %v2860 = vunpack.c.l.b16 %v2556
  %v2861 = vunpack.c.l.b16 %v2557
  %v2862 = vunpack.c.l.b16 %v2558
  %v2863 = vunpack.c.l.b16 %v2559
  %v2864 = vunpack.c.l.b16 %v2560
  %v2865 = vunpack.c.l.b16 %v2561
  %v2866 = vunpack.c.l.b16 %v2562
  %v2867 = vunpack.c.l.b16 %v2563
  %v2868 = vunpack.c.l.b16 %v2564
  %v2869 = vunpack.c.l.b16 %v2565
  %v2870 = vunpack.c.l.b16 %v2566
  %v2871 = vunpack.c.l.b16 %v2567
  %v2872 = vunpack.c.l.b16 %v2568
  %v2873 = vunpack.c.l.b16 %v2569
  %v2874 = vunpack.c.l.b16 %v2570
  %v2875 = vunpack.c.l.b16 %v2571
  %v2876 = vunpack.c.l.b16 %v2572
  %v2877 = vunpack.c.l.b16 %v2573
  %v2878 = vunpack.c.l.b16 %v2574
  %v2879 = vunpack.c.l.b16 %v2575
  %v2880 = vunpack.c.l.b16 %v2576
  %v2881 = vunpack.c.l.b16 %v2577
  %v2882 = vunpack.c.l.b16 %v2578
  %v2883 = vunpack.c.l.b16 %v2579
  %v2884 = vunpack.c.l.b16 %v2580
  %v2885 = vunpack.c.l.b16 %v2581
  %v2886 = vunpack.c.l.b16 %v2582
  %v2887 = vunpack.c.l.b16 %v2583
  %v2888 = vunpack.c.l.b16 %v2584
  %v2889 = vunpack.c.l.b16 %v2585
  %v2890 = vunpack.c.l.b16 %v2586
  %v2891 = vunpack.c.l.b16 %v2587
  %v2892 = vunpack.c.l.b16 %v2588
  %v2893 = vunpack.c.l.b16 %v2589
  %v2894 = vunpack.c.l.b16 %v2590
  %v2895 = vunpack.c.l.b16 %v2591
  %v2896 = vunpack.c.l.b16 %v2592
  %v2897 = vunpack.c.l.b16 %v2593
  %v2898 = vunpack.c.l.b16 %v2594
  %v2899 = vunpack.c.l.b16 %v2595
  %v2900 = vunpack.c.l.b16 %v2596
  %v2901 = vunpack.c.l.b16 %v2597
  %v2902 = vunpack.c.l.b16 %v2598
  %v2903 = vunpack.c.l.b16 %v2599
  %v2904 = vunpack.c.l.b16 %v2600
  %v2905 = vunpack.c.l.b16 %v2601
  %v2906 = vunpack.c.l.b16 %v2602
  %v2907 = vunpack.c.l.b16 %v2603
  %v2908 = vunpack.c.l.b16 %v2604
  %v2909 = vunpack.c.l.b16 %v2605
  %v2910 = vunpack.c.l.b16 %v2606
  %v2911 = vunpack.c.l.b16 %v2607
  %v2912 = vunpack.c.l.b16 %v2608
  %v2913 = vunpack.c.l.b16 %v2609
  %v2914 = vunpack.c.l.b16 %v2610
  %v2915 = vunpack.c.l.b16 %v2611
  %v2916 = vunpack.c.l.b16 %v2612
  %v2917 = vunpack.c.l.b16 %v2613
  %v2918 = vunpack.c.l.b16 %v2614
  %v2919 = vunpack.c.l.b16 %v2615
  %v2920 = vunpack.c.l.b16 %v2616
  %v2921 = vunpack.c.l.b16 %v2617
  %v2922 = vunpack.c.l.b16 %v2618
  %v2923 = vunpack.c.l.b16 %v2619
  %v2924 = vunpack.c.l.b16 %v2620
  %v2925 = vunpack.c.l.b16 %v2621
  %v2926 = vunpack.c.l.b16 %v2622
  %v2927 = vunpack.c.l.b16 %v2623
  %v2928 = vunpack.c.l.b16 %v2624
  %v2929 = vunpack.c.l.b16 %v2625
  %v2930 = vunpack.c.l.b16 %v2626
  %v2931 = vunpack.c.l.b16 %v2627
  %v2932 = vunpack.c.l.b16 %v2628
  %v2933 = vunpack.c.l.b16 %v2629
  %v2934 = vunpack.c.l.b16 %v2630
  %v2935 = vunpack.c.l.b16 %v2631
  %v2936 = vunpack.c.l.b16 %v2632
  %v2937 = vunpack.c.l.b16 %v2633
  %v2938 = vunpack.c.l.b16 %v2634
  %v2939 = vpack.c.b16 %v2796, %v2795
  %v2940 = vpack.c.b16 %v2798, %v2797
  %v2941 = vpack.c.b16 %v2800, %v2799
  %v2942 = vpack.c.b16 %v2802, %v2801
  %v2943 = vpack.c.b16 %v2804, %v2803
  %v2944 = vpack.c.b16 %v2806, %v2805
  %v2945 = vpack.c.b16 %v2808, %v2807
  %v2946 = vpack.c.b16 %v2810, %v2809
  %v2947 = vpack.c.b16 %v2812, %v2811
  %v2948 = vpack.c.b16 %v2814, %v2813
  %v2949 = vpack.c.b16 %v2816, %v2815
  %v2950 = vpack.c.b16 %v2818, %v2817
  %v2951 = vpack.c.b16 %v2820, %v2819
  %v2952 = vpack.c.b16 %v2822, %v2821
  %v2953 = vpack.c.b16 %v2824, %v2823
  %v2954 = vpack.c.b16 %v2826, %v2825
  %v2955 = vpack.c.b16 %v2828, %v2827
  %v2956 = vpack.c.b16 %v2830, %v2829
  %v2957 = vpack.c.b16 %v2832, %v2831
  %v2958 = vpack.c.b16 %v2834, %v2833
  %v2959 = vpack.c.b16 %v2836, %v2835
  %v2960 = vpack.c.b16 %v2838, %v2837
  %v2961 = vpack.c.b16 %v2840, %v2839
  %v2962 = vpack.c.b16 %v2842, %v2841
  %v2963 = vpack.c.b16 %v2844, %v2843
  %v2964 = vpack.c.b16 %v2846, %v2845
  %v2965 = vpack.c.b16 %v2848, %v2847
  %v2966 = vpack.c.b16 %v2850, %v2849
  %v2967 = vpack.c.b16 %v2852, %v2851
  %v2968 = vpack.c.b16 %v2854, %v2853
  %v2969 = vpack.c.b16 %v2856, %v2855
  %v2970 = vpack.c.b16 %v2858, %v2857
  %v2971 = vpack.c.b16 %v2860, %v2859
  %v2972 = vpack.c.b16 %v2862, %v2861
  %v2973 = vpack.c.b16 %v2864, %v2863
  %v2974 = vpack.c.b16 %v2866, %v2865
  %v2975 = vpack.c.b16 %v2868, %v2867
  %v2976 = vpack.c.b16 %v2870, %v2869
  %v2977 = vpack.c.b16 %v2872, %v2871
  %v2978 = vpack.c.b16 %v2874, %v2873
  %v2979 = vpack.c.b16 %v2876, %v2875
  %v2980 = vpack.c.b16 %v2878, %v2877
  %v2981 = vpack.c.b16 %v2880, %v2879
  %v2982 = vpack.c.b16 %v2882, %v2881
  %v2983 = vpack.c.b16 %v2884, %v2883
  %v2984 = vpack.c.b16 %v2886, %v2885
  %v2985 = vpack.c.b16 %v2888, %v2887
  %v2986 = vpack.c.b16 %v2890, %v2889
  %v2987 = vpack.c.b16 %v2892, %v2891
  %v2988 = vpack.c.b16 %v2894, %v2893
  %v2989 = vpack.c.b16 %v2896, %v2895
  %v2990 = vpack.c.b16 %v2898, %v2897
  %v2991 = vpack.c.b16 %v2900, %v2899
  %v2992 = vpack.c.b16 %v2902, %v2901
  %v2993 = vpack.c.b16 %v2904, %v2903
  %v2994 = vpack.c.b16 %v2906, %v2905
  %v2995 = vpack.c.b16 %v2908, %v2907
  %v2996 = vpack.c.b16 %v2910, %v2909
  %v2997 = vpack.c.b16 %v2912, %v2911
  %v2998 = vpack.c.b16 %v2914, %v2913
  %v2999 = vpack.c.b16 %v2916, %v2915
  %v3000 = vpack.c.b16 %v2918, %v2917
  %v3001 = vpack.c.b16 %v2920, %v2919
  %v3002 = vpack.c.b16 %v2922, %v2921
  %v3003 = vpack.c.b16 %v2924, %v2923
  %v3004 = vpack.c.b16 %v2926, %v2925
  %v3005 = vpack.c.b16 %v2928, %v2927
  %v3006 = vpack.c.b16 %v2930, %v2929
  %v3007 = vpack.c.b16 %v2932, %v2931
  %v3008 = vpack.c.b16 %v2934, %v2933
  %v3009 = vpack.c.b16 %v2936, %v2935
  %v3010 = vpack.c.b16 %v2938, %v2937
  %v3099 = vunpack.c.l.b16 %v2635
  %v3100 = vunpack.c.l.b16 %v2636
  %v3101 = vunpack.c.l.b16 %v2637
  %v3102 = vunpack.c.l.b16 %v2638
  %v3103 = vunpack.c.l.b16 %v2639
  %v3104 = vunpack.c.l.b16 %v2640
  %v3105 = vunpack.c.l.b16 %v2641
  %v3106 = vunpack.c.l.b16 %v2642
  %v3107 = vunpack.c.l.b16 %v2643
  %v3108 = vunpack.c.l.b16 %v2644
  %v3109 = vunpack.c.l.b16 %v2645
  %v3110 = vunpack.c.l.b16 %v2646
  %v3111 = vunpack.c.l.b16 %v2647
  %v3112 = vunpack.c.l.b16 %v2648
  %v3113 = vunpack.c.l.b16 %v2649
  %v3114 = vunpack.c.l.b16 %v2650
  %v3115 = vpack.c.b16 %v3100, %v3099
  %v3116 = vpack.c.b16 %v3102, %v3101
  %v3117 = vpack.c.b16 %v3104, %v3103
  %v3118 = vpack.c.b16 %v3106, %v3105
  %v3119 = vpack.c.b16 %v3108, %v3107
  %v3120 = vpack.c.b16 %v3110, %v3109
  %v3121 = vpack.c.b16 %v3112, %v3111
  %v3122 = vpack.c.b16 %v3114, %v3113
  %3131 = vmatpush.bf16.msra.mxu0 %v3122
  %3132 = vmatpush.bf16.msra.mxu0 %v3121
  %3133 = vmatpush.bf16.msra.mxu0 %v3120
  %3134 = vmatpush.bf16.msra.mxu0 %v3119
  %3135 = vmatpush.bf16.msra.mxu0 %v3118
  %3136 = vmatpush.bf16.msra.mxu0 %v3117
  %3137 = vmatpush.bf16.msra.mxu0 %v3116
  %3138 = vmatpush.bf16.msra.mxu0 %v3115
  %3139 = vmatmul.bf16.gmra.mxu0 %v2939
  %v3140 = vpop.f32.mrf.mxu0
  %v3141 = vadd.f32 0.0, %v3140
  %v3142 = vpop.f32.mrf.mxu0
  %v3143 = vadd.f32 0.0, %v3142
  %3144 = vmatmul.bf16.gmra.mxu0 %v2940
  %v3145 = vpop.f32.mrf.mxu0
  %v3146 = vadd.f32 0.0, %v3145
  %v3147 = vpop.f32.mrf.mxu0
  %v3148 = vadd.f32 0.0, %v3147
  %3149 = vmatmul.bf16.gmra.mxu0 %v2941
  %v3150 = vpop.f32.mrf.mxu0
  %v3151 = vadd.f32 0.0, %v3150
  %v3152 = vpop.f32.mrf.mxu0
  %v3153 = vadd.f32 0.0, %v3152
  %3154 = vmatmul.bf16.gmra.mxu0 %v2942
  %v3155 = vpop.f32.mrf.mxu0
  %v3156 = vadd.f32 0.0, %v3155
  %v3157 = vpop.f32.mrf.mxu0
  %v3158 = vadd.f32 0.0, %v3157
  %3159 = vmatmul.bf16.gmra.mxu0 %v2943
  %v3160 = vpop.f32.mrf.mxu0
  %v3161 = vadd.f32 0.0, %v3160
  %v3162 = vpop.f32.mrf.mxu0
  %v3163 = vadd.f32 0.0, %v3162
  %3164 = vmatmul.bf16.gmra.mxu0 %v2944
  %v3165 = vpop.f32.mrf.mxu0
  %v3166 = vadd.f32 0.0, %v3165
  %v3167 = vpop.f32.mrf.mxu0
  %v3168 = vadd.f32 0.0, %v3167
  %3169 = vmatmul.bf16.gmra.mxu0 %v2945
  %v3170 = vpop.f32.mrf.mxu0
  %v3171 = vadd.f32 0.0, %v3170
  %v3172 = vpop.f32.mrf.mxu0
  %v3173 = vadd.f32 0.0, %v3172
  %3174 = vmatmul.bf16.gmra.mxu0 %v2946
  %v3175 = vpop.f32.mrf.mxu0
  %v3176 = vadd.f32 0.0, %v3175
  %v3177 = vpop.f32.mrf.mxu0
  %v3178 = vadd.f32 0.0, %v3177
  %3179 = vmatmul.bf16.gmra.mxu0 %v2947
  %v3180 = vpop.f32.mrf.mxu0
  %v3181 = vadd.f32 0.0, %v3180
  %v3182 = vpop.f32.mrf.mxu0
  %v3183 = vadd.f32 0.0, %v3182
  %3184 = vmatmul.bf16.gmra.mxu0 %v2948
  %v3185 = vpop.f32.mrf.mxu0
  %v3186 = vadd.f32 0.0, %v3185
  %v3187 = vpop.f32.mrf.mxu0
  %v3188 = vadd.f32 0.0, %v3187
  %3189 = vmatmul.bf16.gmra.mxu0 %v2949
  %v3190 = vpop.f32.mrf.mxu0
  %v3191 = vadd.f32 0.0, %v3190
  %v3192 = vpop.f32.mrf.mxu0
  %v3193 = vadd.f32 0.0, %v3192
  %3194 = vmatmul.bf16.gmra.mxu0 %v2950
  %v3195 = vpop.f32.mrf.mxu0
  %v3196 = vadd.f32 0.0, %v3195
  %v3197 = vpop.f32.mrf.mxu0
  %v3198 = vadd.f32 0.0, %v3197
  %3199 = vmatmul.bf16.gmra.mxu0 %v2951
  %v3200 = vpop.f32.mrf.mxu0
  %v3201 = vadd.f32 0.0, %v3200
  %v3202 = vpop.f32.mrf.mxu0
  %v3203 = vadd.f32 0.0, %v3202
  %3204 = vmatmul.bf16.gmra.mxu0 %v2952
  %v3205 = vpop.f32.mrf.mxu0
  %v3206 = vadd.f32 0.0, %v3205
  %v3207 = vpop.f32.mrf.mxu0
  %v3208 = vadd.f32 0.0, %v3207
  %3209 = vmatmul.bf16.gmra.mxu0 %v2953
  %v3210 = vpop.f32.mrf.mxu0
  %v3211 = vadd.f32 0.0, %v3210
  %v3212 = vpop.f32.mrf.mxu0
  %v3213 = vadd.f32 0.0, %v3212
  %3214 = vmatmul.bf16.gmra.mxu0 %v2954
  %v3215 = vpop.f32.mrf.mxu0
  %v3216 = vadd.f32 0.0, %v3215
  %v3217 = vpop.f32.mrf.mxu0
  %v3218 = vadd.f32 0.0, %v3217
  %3219 = vmatmul.bf16.gmra.mxu0 %v2955
  %v3220 = vpop.f32.mrf.mxu0
  %v3221 = vadd.f32 0.0, %v3220
  %v3222 = vpop.f32.mrf.mxu0
  %v3223 = vadd.f32 0.0, %v3222
  %3224 = vmatmul.bf16.gmra.mxu0 %v2956
  %v3225 = vpop.f32.mrf.mxu0
  %v3226 = vadd.f32 0.0, %v3225
  %v3227 = vpop.f32.mrf.mxu0
  %v3228 = vadd.f32 0.0, %v3227
  %3229 = vmatmul.bf16.gmra.mxu0 %v2957
  %v3230 = vpop.f32.mrf.mxu0
  %v3231 = vadd.f32 0.0, %v3230
  %v3232 = vpop.f32.mrf.mxu0
  %v3233 = vadd.f32 0.0, %v3232
  %3234 = vmatmul.bf16.gmra.mxu0 %v2958
  %v3235 = vpop.f32.mrf.mxu0
  %v3236 = vadd.f32 0.0, %v3235
  %v3237 = vpop.f32.mrf.mxu0
  %v3238 = vadd.f32 0.0, %v3237
  %3239 = vmatmul.bf16.gmra.mxu0 %v2959
  %v3240 = vpop.f32.mrf.mxu0
  %v3241 = vadd.f32 0.0, %v3240
  %v3242 = vpop.f32.mrf.mxu0
  %v3243 = vadd.f32 0.0, %v3242
  %3244 = vmatmul.bf16.gmra.mxu0 %v2960
  %v3245 = vpop.f32.mrf.mxu0
  %v3246 = vadd.f32 0.0, %v3245
  %v3247 = vpop.f32.mrf.mxu0
  %v3248 = vadd.f32 0.0, %v3247
  %3249 = vmatmul.bf16.gmra.mxu0 %v2961
  %v3250 = vpop.f32.mrf.mxu0
  %v3251 = vadd.f32 0.0, %v3250
  %v3252 = vpop.f32.mrf.mxu0
  %v3253 = vadd.f32 0.0, %v3252
  %3254 = vmatmul.bf16.gmra.mxu0 %v2962
  %v3255 = vpop.f32.mrf.mxu0
  %v3256 = vadd.f32 0.0, %v3255
  %v3257 = vpop.f32.mrf.mxu0
  %v3258 = vadd.f32 0.0, %v3257
  %3259 = vmatmul.bf16.gmra.mxu0 %v2963
  %v3260 = vpop.f32.mrf.mxu0
  %v3261 = vadd.f32 0.0, %v3260
  %v3262 = vpop.f32.mrf.mxu0
  %v3263 = vadd.f32 0.0, %v3262
  %3264 = vmatmul.bf16.gmra.mxu0 %v2964
  %v3265 = vpop.f32.mrf.mxu0
  %v3266 = vadd.f32 0.0, %v3265
  %v3267 = vpop.f32.mrf.mxu0
  %v3268 = vadd.f32 0.0, %v3267
  %3269 = vmatmul.bf16.gmra.mxu0 %v2965
  %v3270 = vpop.f32.mrf.mxu0
  %v3271 = vadd.f32 0.0, %v3270
  %v3272 = vpop.f32.mrf.mxu0
  %v3273 = vadd.f32 0.0, %v3272
  %3274 = vmatmul.bf16.gmra.mxu0 %v2966
  %v3275 = vpop.f32.mrf.mxu0
  %v3276 = vadd.f32 0.0, %v3275
  %v3277 = vpop.f32.mrf.mxu0
  %v3278 = vadd.f32 0.0, %v3277
  %3279 = vmatmul.bf16.gmra.mxu0 %v2967
  %v3280 = vpop.f32.mrf.mxu0
  %v3281 = vadd.f32 0.0, %v3280
  %v3282 = vpop.f32.mrf.mxu0
  %v3283 = vadd.f32 0.0, %v3282
  %3284 = vmatmul.bf16.gmra.mxu0 %v2968
  %v3285 = vpop.f32.mrf.mxu0
  %v3286 = vadd.f32 0.0, %v3285
  %v3287 = vpop.f32.mrf.mxu0
  %v3288 = vadd.f32 0.0, %v3287
  %3289 = vmatmul.bf16.gmra.mxu0 %v2969
  %v3290 = vpop.f32.mrf.mxu0
  %v3291 = vadd.f32 0.0, %v3290
  %v3292 = vpop.f32.mrf.mxu0
  %v3293 = vadd.f32 0.0, %v3292
  %3294 = vmatmul.bf16.gmra.mxu0 %v2970
  %v3295 = vpop.f32.mrf.mxu0
  %v3296 = vadd.f32 0.0, %v3295
  %v3297 = vpop.f32.mrf.mxu0
  %v3298 = vadd.f32 0.0, %v3297
  %3299 = vmatmul.bf16.gmra.mxu0 %v2971
  %v3300 = vpop.f32.mrf.mxu0
  %v3301 = vadd.f32 0.0, %v3300
  %v3302 = vpop.f32.mrf.mxu0
  %v3303 = vadd.f32 0.0, %v3302
  %3304 = vmatmul.bf16.gmra.mxu0 %v2972
  %v3305 = vpop.f32.mrf.mxu0
  %v3306 = vadd.f32 0.0, %v3305
  %v3307 = vpop.f32.mrf.mxu0
  %v3308 = vadd.f32 0.0, %v3307
  %3309 = vmatmul.bf16.gmra.mxu0 %v2973
  %v3310 = vpop.f32.mrf.mxu0
  %v3311 = vadd.f32 0.0, %v3310
  %v3312 = vpop.f32.mrf.mxu0
  %v3313 = vadd.f32 0.0, %v3312
  %3314 = vmatmul.bf16.gmra.mxu0 %v2974
  %v3315 = vpop.f32.mrf.mxu0
  %v3316 = vadd.f32 0.0, %v3315
  %v3317 = vpop.f32.mrf.mxu0
  %v3318 = vadd.f32 0.0, %v3317
  %3319 = vmatmul.bf16.gmra.mxu0 %v2975
  %v3320 = vpop.f32.mrf.mxu0
  %v3321 = vadd.f32 0.0, %v3320
  %v3322 = vpop.f32.mrf.mxu0
  %v3323 = vadd.f32 0.0, %v3322
  %3324 = vmatmul.bf16.gmra.mxu0 %v2976
  %v3325 = vpop.f32.mrf.mxu0
  %v3326 = vadd.f32 0.0, %v3325
  %v3327 = vpop.f32.mrf.mxu0
  %v3328 = vadd.f32 0.0, %v3327
  %3329 = vmatmul.bf16.gmra.mxu0 %v2977
  %v3330 = vpop.f32.mrf.mxu0
  %v3331 = vadd.f32 0.0, %v3330
  %v3332 = vpop.f32.mrf.mxu0
  %v3333 = vadd.f32 0.0, %v3332
  %3334 = vmatmul.bf16.gmra.mxu0 %v2978
  %v3335 = vpop.f32.mrf.mxu0
  %v3336 = vadd.f32 0.0, %v3335
  %v3337 = vpop.f32.mrf.mxu0
  %v3338 = vadd.f32 0.0, %v3337
  %3339 = vmatmul.bf16.gmra.mxu0 %v2979
  %v3340 = vpop.f32.mrf.mxu0
  %v3341 = vadd.f32 0.0, %v3340
  %v3342 = vpop.f32.mrf.mxu0
  %v3343 = vadd.f32 0.0, %v3342
  %3344 = vmatmul.bf16.gmra.mxu0 %v2980
  %v3345 = vpop.f32.mrf.mxu0
  %v3346 = vadd.f32 0.0, %v3345
  %v3347 = vpop.f32.mrf.mxu0
  %v3348 = vadd.f32 0.0, %v3347
  %3349 = vmatmul.bf16.gmra.mxu0 %v2981
  %v3350 = vpop.f32.mrf.mxu0
  %v3351 = vadd.f32 0.0, %v3350
  %v3352 = vpop.f32.mrf.mxu0
  %v3353 = vadd.f32 0.0, %v3352
  %3354 = vmatmul.bf16.gmra.mxu0 %v2982
  %v3355 = vpop.f32.mrf.mxu0
  %v3356 = vadd.f32 0.0, %v3355
  %v3357 = vpop.f32.mrf.mxu0
  %v3358 = vadd.f32 0.0, %v3357
  %3359 = vmatmul.bf16.gmra.mxu0 %v2983
  %v3360 = vpop.f32.mrf.mxu0
  %v3361 = vadd.f32 0.0, %v3360
  %v3362 = vpop.f32.mrf.mxu0
  %v3363 = vadd.f32 0.0, %v3362
  %3364 = vmatmul.bf16.gmra.mxu0 %v2984
  %v3365 = vpop.f32.mrf.mxu0
  %v3366 = vadd.f32 0.0, %v3365
  %v3367 = vpop.f32.mrf.mxu0
  %v3368 = vadd.f32 0.0, %v3367
  %3369 = vmatmul.bf16.gmra.mxu0 %v2985
  %v3370 = vpop.f32.mrf.mxu0
  %v3371 = vadd.f32 0.0, %v3370
  %v3372 = vpop.f32.mrf.mxu0
  %v3373 = vadd.f32 0.0, %v3372
  %3374 = vmatmul.bf16.gmra.mxu0 %v2986
  %v3375 = vpop.f32.mrf.mxu0
  %v3376 = vadd.f32 0.0, %v3375
  %v3377 = vpop.f32.mrf.mxu0
  %v3378 = vadd.f32 0.0, %v3377
  %3379 = vmatmul.bf16.gmra.mxu0 %v2987
  %v3380 = vpop.f32.mrf.mxu0
  %v3381 = vadd.f32 0.0, %v3380
  %v3382 = vpop.f32.mrf.mxu0
  %v3383 = vadd.f32 0.0, %v3382
  %3384 = vmatmul.bf16.gmra.mxu0 %v2988
  %v3385 = vpop.f32.mrf.mxu0
  %v3386 = vadd.f32 0.0, %v3385
  %v3387 = vpop.f32.mrf.mxu0
  %v3388 = vadd.f32 0.0, %v3387
  %3389 = vmatmul.bf16.gmra.mxu0 %v2989
  %v3390 = vpop.f32.mrf.mxu0
  %v3391 = vadd.f32 0.0, %v3390
  %v3392 = vpop.f32.mrf.mxu0
  %v3393 = vadd.f32 0.0, %v3392
  %3394 = vmatmul.bf16.gmra.mxu0 %v2990
  %v3395 = vpop.f32.mrf.mxu0
  %v3396 = vadd.f32 0.0, %v3395
  %v3397 = vpop.f32.mrf.mxu0
  %v3398 = vadd.f32 0.0, %v3397
  %3399 = vmatmul.bf16.gmra.mxu0 %v2991
  %v3400 = vpop.f32.mrf.mxu0
  %v3401 = vadd.f32 0.0, %v3400
  %v3402 = vpop.f32.mrf.mxu0
  %v3403 = vadd.f32 0.0, %v3402
  %3404 = vmatmul.bf16.gmra.mxu0 %v2992
  %v3405 = vpop.f32.mrf.mxu0
  %v3406 = vadd.f32 0.0, %v3405
  %v3407 = vpop.f32.mrf.mxu0
  %v3408 = vadd.f32 0.0, %v3407
  %3409 = vmatmul.bf16.gmra.mxu0 %v2993
  %v3410 = vpop.f32.mrf.mxu0
  %v3411 = vadd.f32 0.0, %v3410
  %v3412 = vpop.f32.mrf.mxu0
  %v3413 = vadd.f32 0.0, %v3412
  %3414 = vmatmul.bf16.gmra.mxu0 %v2994
  %v3415 = vpop.f32.mrf.mxu0
  %v3416 = vadd.f32 0.0, %v3415
  %v3417 = vpop.f32.mrf.mxu0
  %v3418 = vadd.f32 0.0, %v3417
  %3419 = vmatmul.bf16.gmra.mxu0 %v2995
  %v3420 = vpop.f32.mrf.mxu0
  %v3421 = vadd.f32 0.0, %v3420
  %v3422 = vpop.f32.mrf.mxu0
  %v3423 = vadd.f32 0.0, %v3422
  %3424 = vmatmul.bf16.gmra.mxu0 %v2996
  %v3425 = vpop.f32.mrf.mxu0
  %v3426 = vadd.f32 0.0, %v3425
  %v3427 = vpop.f32.mrf.mxu0
  %v3428 = vadd.f32 0.0, %v3427
  %3429 = vmatmul.bf16.gmra.mxu0 %v2997
  %v3430 = vpop.f32.mrf.mxu0
  %v3431 = vadd.f32 0.0, %v3430
  %v3432 = vpop.f32.mrf.mxu0
  %v3433 = vadd.f32 0.0, %v3432
  %3434 = vmatmul.bf16.gmra.mxu0 %v2998
  %v3435 = vpop.f32.mrf.mxu0
  %v3436 = vadd.f32 0.0, %v3435
  %v3437 = vpop.f32.mrf.mxu0
  %v3438 = vadd.f32 0.0, %v3437
  %3439 = vmatmul.bf16.gmra.mxu0 %v2999
  %v3440 = vpop.f32.mrf.mxu0
  %v3441 = vadd.f32 0.0, %v3440
  %v3442 = vpop.f32.mrf.mxu0
  %v3443 = vadd.f32 0.0, %v3442
  %3444 = vmatmul.bf16.gmra.mxu0 %v3000
  %v3445 = vpop.f32.mrf.mxu0
  %v3446 = vadd.f32 0.0, %v3445
  %v3447 = vpop.f32.mrf.mxu0
  %v3448 = vadd.f32 0.0, %v3447
  %3449 = vmatmul.bf16.gmra.mxu0 %v3001
  %v3450 = vpop.f32.mrf.mxu0
  %v3451 = vadd.f32 0.0, %v3450
  %v3452 = vpop.f32.mrf.mxu0
  %v3453 = vadd.f32 0.0, %v3452
  %3454 = vmatmul.bf16.gmra.mxu0 %v3002
  %v3455 = vpop.f32.mrf.mxu0
  %v3456 = vadd.f32 0.0, %v3455
  %v3457 = vpop.f32.mrf.mxu0
  %v3458 = vadd.f32 0.0, %v3457
  %3459 = vmatmul.bf16.gmra.mxu0 %v3003
  %v3460 = vpop.f32.mrf.mxu0
  %v3461 = vadd.f32 0.0, %v3460
  %v3462 = vpop.f32.mrf.mxu0
  %v3463 = vadd.f32 0.0, %v3462
  %3464 = vmatmul.bf16.gmra.mxu0 %v3004
  %v3465 = vpop.f32.mrf.mxu0
  %v3466 = vadd.f32 0.0, %v3465
  %v3467 = vpop.f32.mrf.mxu0
  %v3468 = vadd.f32 0.0, %v3467
  %3469 = vmatmul.bf16.gmra.mxu0 %v3005
  %v3470 = vpop.f32.mrf.mxu0
  %v3471 = vadd.f32 0.0, %v3470
  %v3472 = vpop.f32.mrf.mxu0
  %v3473 = vadd.f32 0.0, %v3472
  %3474 = vmatmul.bf16.gmra.mxu0 %v3006
  %v3475 = vpop.f32.mrf.mxu0
  %v3476 = vadd.f32 0.0, %v3475
  %v3477 = vpop.f32.mrf.mxu0
  %v3478 = vadd.f32 0.0, %v3477
  %3479 = vmatmul.bf16.gmra.mxu0 %v3007
  %v3480 = vpop.f32.mrf.mxu0
  %v3481 = vadd.f32 0.0, %v3480
  %v3482 = vpop.f32.mrf.mxu0
  %v3483 = vadd.f32 0.0, %v3482
  %3484 = vmatmul.bf16.gmra.mxu0 %v3008
  %v3485 = vpop.f32.mrf.mxu0
  %v3486 = vadd.f32 0.0, %v3485
  %v3487 = vpop.f32.mrf.mxu0
  %v3488 = vadd.f32 0.0, %v3487
  %3489 = vmatmul.bf16.gmra.mxu0 %v3009
  %v3490 = vpop.f32.mrf.mxu0
  %v3491 = vadd.f32 0.0, %v3490
  %v3492 = vpop.f32.mrf.mxu0
  %v3493 = vadd.f32 0.0, %v3492
  %3494 = vmatmul.bf16.gmra.mxu0 %v3010
  %v3495 = vpop.f32.mrf.mxu0
  %v3496 = vadd.f32 0.0, %v3495
  %v3497 = vpop.f32.mrf.mxu0
  %v3498 = vadd.f32 0.0, %v3497
  %3499 = vdwg.mxu0
  %v3500 = vld [vmem:[%s6 + $0x84] sm:$0xf]
  %v3501 = vld [vmem:[%s6 + $0x8c] sm:$0xf]
  %v3502 = vld [vmem:[%s6 + $0x94] sm:$0xf]
  %v3503 = vld [vmem:[%s6 + $0x9c] sm:$0xf]
  %v3504 = vld [vmem:[%s6 + $0xa4] sm:$0xf]
  %v3505 = vld [vmem:[%s6 + $0xac] sm:$0xf]
  %v3506 = vld [vmem:[%s6 + $0xb4] sm:$0xf]
  %v3507 = vld [vmem:[%s6 + $0xbc] sm:$0xf]
  %v3508 = vld [vmem:[%s6 + $0xc4] sm:$0xf]
  %v3509 = vld [vmem:[%s6 + $0xcc] sm:$0xf]
  %v3510 = vld [vmem:[%s6 + $0xd4] sm:$0xf]
  %v3511 = vld [vmem:[%s6 + $0xdc] sm:$0xf]
  %v3512 = vld [vmem:[%s6 + $0xe4] sm:$0xf]
  %v3513 = vld [vmem:[%s6 + $0xec] sm:$0xf]
  %v3514 = vld [vmem:[%s6 + $0xf4] sm:$0xf]
  %v3515 = vld [vmem:[%s6 + $0xfc] sm:$0xf]
  %v3516 = vunpack.c.h.b16 %v2491
  %v3517 = vunpack.c.h.b16 %v2492
  %v3518 = vunpack.c.h.b16 %v2493
  %v3519 = vunpack.c.h.b16 %v2494
  %v3520 = vunpack.c.h.b16 %v2495
  %v3521 = vunpack.c.h.b16 %v2496
  %v3522 = vunpack.c.h.b16 %v2497
  %v3523 = vunpack.c.h.b16 %v2498
  %v3524 = vunpack.c.h.b16 %v2499
  %v3525 = vunpack.c.h.b16 %v2500
  %v3526 = vunpack.c.h.b16 %v2501
  %v3527 = vunpack.c.h.b16 %v2502
  %v3528 = vunpack.c.h.b16 %v2503
  %v3529 = vunpack.c.h.b16 %v2504
  %v3530 = vunpack.c.h.b16 %v2505
  %v3531 = vunpack.c.h.b16 %v2506
  %v3532 = vunpack.c.h.b16 %v2507
  %v3533 = vunpack.c.h.b16 %v2508
  %v3534 = vunpack.c.h.b16 %v2509
  %v3535 = vunpack.c.h.b16 %v2510
  %v3536 = vunpack.c.h.b16 %v2511
  %v3537 = vunpack.c.h.b16 %v2512
  %v3538 = vunpack.c.h.b16 %v2513
  %v3539 = vunpack.c.h.b16 %v2514
  %v3540 = vunpack.c.h.b16 %v2515
  %v3541 = vunpack.c.h.b16 %v2516
  %v3542 = vunpack.c.h.b16 %v2517
  %v3543 = vunpack.c.h.b16 %v2518
  %v3544 = vunpack.c.h.b16 %v2519
  %v3545 = vunpack.c.h.b16 %v2520
  %v3546 = vunpack.c.h.b16 %v2521
  %v3547 = vunpack.c.h.b16 %v2522
  %v3548 = vunpack.c.h.b16 %v2523
  %v3549 = vunpack.c.h.b16 %v2524
  %v3550 = vunpack.c.h.b16 %v2525
  %v3551 = vunpack.c.h.b16 %v2526
  %v3552 = vunpack.c.h.b16 %v2527
  %v3553 = vunpack.c.h.b16 %v2528
  %v3554 = vunpack.c.h.b16 %v2529
  %v3555 = vunpack.c.h.b16 %v2530
  %v3556 = vunpack.c.h.b16 %v2531
  %v3557 = vunpack.c.h.b16 %v2532
  %v3558 = vunpack.c.h.b16 %v2533
  %v3559 = vunpack.c.h.b16 %v2534
  %v3560 = vunpack.c.h.b16 %v2535
  %v3561 = vunpack.c.h.b16 %v2536
  %v3562 = vunpack.c.h.b16 %v2537
  %v3563 = vunpack.c.h.b16 %v2538
  %v3564 = vunpack.c.h.b16 %v2539
  %v3565 = vunpack.c.h.b16 %v2540
  %v3566 = vunpack.c.h.b16 %v2541
  %v3567 = vunpack.c.h.b16 %v2542
  %v3568 = vunpack.c.h.b16 %v2543
  %v3569 = vunpack.c.h.b16 %v2544
  %v3570 = vunpack.c.h.b16 %v2545
  %v3571 = vunpack.c.h.b16 %v2546
  %v3572 = vunpack.c.h.b16 %v2547
  %v3573 = vunpack.c.h.b16 %v2548
  %v3574 = vunpack.c.h.b16 %v2549
  %v3575 = vunpack.c.h.b16 %v2550
  %v3576 = vunpack.c.h.b16 %v2551
  %v3577 = vunpack.c.h.b16 %v2552
  %v3578 = vunpack.c.h.b16 %v2553
  %v3579 = vunpack.c.h.b16 %v2554
  %v3580 = vunpack.c.h.b16 %v2555
  %v3581 = vunpack.c.h.b16 %v2556
  %v3582 = vunpack.c.h.b16 %v2557
  %v3583 = vunpack.c.h.b16 %v2558
  %v3584 = vunpack.c.h.b16 %v2559
  %v3585 = vunpack.c.h.b16 %v2560
  %v3586 = vunpack.c.h.b16 %v2561
  %v3587 = vunpack.c.h.b16 %v2562
  %v3588 = vunpack.c.h.b16 %v2563
  %v3589 = vunpack.c.h.b16 %v2564
  %v3590 = vunpack.c.h.b16 %v2565
  %v3591 = vunpack.c.h.b16 %v2566
  %v3592 = vunpack.c.h.b16 %v2567
  %v3593 = vunpack.c.h.b16 %v2568
  %v3594 = vunpack.c.h.b16 %v2569
  %v3595 = vunpack.c.h.b16 %v2570
  %v3596 = vunpack.c.h.b16 %v2571
  %v3597 = vunpack.c.h.b16 %v2572
  %v3598 = vunpack.c.h.b16 %v2573
  %v3599 = vunpack.c.h.b16 %v2574
  %v3600 = vunpack.c.h.b16 %v2575
  %v3601 = vunpack.c.h.b16 %v2576
  %v3602 = vunpack.c.h.b16 %v2577
  %v3603 = vunpack.c.h.b16 %v2578
  %v3604 = vunpack.c.h.b16 %v2579
  %v3605 = vunpack.c.h.b16 %v2580
  %v3606 = vunpack.c.h.b16 %v2581
  %v3607 = vunpack.c.h.b16 %v2582
  %v3608 = vunpack.c.h.b16 %v2583
  %v3609 = vunpack.c.h.b16 %v2584
  %v3610 = vunpack.c.h.b16 %v2585
  %v3611 = vunpack.c.h.b16 %v2586
  %v3612 = vunpack.c.h.b16 %v2587
  %v3613 = vunpack.c.h.b16 %v2588
  %v3614 = vunpack.c.h.b16 %v2589
  %v3615 = vunpack.c.h.b16 %v2590
  %v3616 = vunpack.c.h.b16 %v2591
  %v3617 = vunpack.c.h.b16 %v2592
  %v3618 = vunpack.c.h.b16 %v2593
  %v3619 = vunpack.c.h.b16 %v2594
  %v3620 = vunpack.c.h.b16 %v2595
  %v3621 = vunpack.c.h.b16 %v2596
  %v3622 = vunpack.c.h.b16 %v2597
  %v3623 = vunpack.c.h.b16 %v2598
  %v3624 = vunpack.c.h.b16 %v2599
  %v3625 = vunpack.c.h.b16 %v2600
  %v3626 = vunpack.c.h.b16 %v2601
  %v3627 = vunpack.c.h.b16 %v2602
  %v3628 = vunpack.c.h.b16 %v2603
  %v3629 = vunpack.c.h.b16 %v2604
  %v3630 = vunpack.c.h.b16 %v2605
  %v3631 = vunpack.c.h.b16 %v2606
  %v3632 = vunpack.c.h.b16 %v2607
  %v3633 = vunpack.c.h.b16 %v2608
  %v3634 = vunpack.c.h.b16 %v2609
  %v3635 = vunpack.c.h.b16 %v2610
  %v3636 = vunpack.c.h.b16 %v2611
  %v3637 = vunpack.c.h.b16 %v2612
  %v3638 = vunpack.c.h.b16 %v2613
  %v3639 = vunpack.c.h.b16 %v2614
  %v3640 = vunpack.c.h.b16 %v2615
  %v3641 = vunpack.c.h.b16 %v2616
  %v3642 = vunpack.c.h.b16 %v2617
  %v3643 = vunpack.c.h.b16 %v2618
  %v3644 = vunpack.c.h.b16 %v2619
  %v3645 = vunpack.c.h.b16 %v2620
  %v3646 = vunpack.c.h.b16 %v2621
  %v3647 = vunpack.c.h.b16 %v2622
  %v3648 = vunpack.c.h.b16 %v2623
  %v3649 = vunpack.c.h.b16 %v2624
  %v3650 = vunpack.c.h.b16 %v2625
  %v3651 = vunpack.c.h.b16 %v2626
  %v3652 = vunpack.c.h.b16 %v2627
  %v3653 = vunpack.c.h.b16 %v2628
  %v3654 = vunpack.c.h.b16 %v2629
  %v3655 = vunpack.c.h.b16 %v2630
  %v3656 = vunpack.c.h.b16 %v2631
  %v3657 = vunpack.c.h.b16 %v2632
  %v3658 = vunpack.c.h.b16 %v2633
  %v3659 = vunpack.c.h.b16 %v2634
  %v3660 = vpack.c.b16 %v3517, %v3516
  %v3661 = vpack.c.b16 %v3519, %v3518
  %v3662 = vpack.c.b16 %v3521, %v3520
  %v3663 = vpack.c.b16 %v3523, %v3522
  %v3664 = vpack.c.b16 %v3525, %v3524
  %v3665 = vpack.c.b16 %v3527, %v3526
  %v3666 = vpack.c.b16 %v3529, %v3528
  %v3667 = vpack.c.b16 %v3531, %v3530
  %v3668 = vpack.c.b16 %v3533, %v3532
  %v3669 = vpack.c.b16 %v3535, %v3534
  %v3670 = vpack.c.b16 %v3537, %v3536
  %v3671 = vpack.c.b16 %v3539, %v3538
  %v3672 = vpack.c.b16 %v3541, %v3540
  %v3673 = vpack.c.b16 %v3543, %v3542
  %v3674 = vpack.c.b16 %v3545, %v3544
  %v3675 = vpack.c.b16 %v3547, %v3546
  %v3676 = vpack.c.b16 %v3549, %v3548
  %v3677 = vpack.c.b16 %v3551, %v3550
  %v3678 = vpack.c.b16 %v3553, %v3552
  %v3679 = vpack.c.b16 %v3555, %v3554
  %v3680 = vpack.c.b16 %v3557, %v3556
  %v3681 = vpack.c.b16 %v3559, %v3558
  %v3682 = vpack.c.b16 %v3561, %v3560
  %v3683 = vpack.c.b16 %v3563, %v3562
  %v3684 = vpack.c.b16 %v3565, %v3564
  %v3685 = vpack.c.b16 %v3567, %v3566
  %v3686 = vpack.c.b16 %v3569, %v3568
  %v3687 = vpack.c.b16 %v3571, %v3570
  %v3688 = vpack.c.b16 %v3573, %v3572
  %v3689 = vpack.c.b16 %v3575, %v3574
  %v3690 = vpack.c.b16 %v3577, %v3576
  %v3691 = vpack.c.b16 %v3579, %v3578
  %v3692 = vpack.c.b16 %v3581, %v3580
  %v3693 = vpack.c.b16 %v3583, %v3582
  %v3694 = vpack.c.b16 %v3585, %v3584
  %v3695 = vpack.c.b16 %v3587, %v3586
  %v3696 = vpack.c.b16 %v3589, %v3588
  %v3697 = vpack.c.b16 %v3591, %v3590
  %v3698 = vpack.c.b16 %v3593, %v3592
  %v3699 = vpack.c.b16 %v3595, %v3594
  %v3700 = vpack.c.b16 %v3597, %v3596
  %v3701 = vpack.c.b16 %v3599, %v3598
  %v3702 = vpack.c.b16 %v3601, %v3600
  %v3703 = vpack.c.b16 %v3603, %v3602
  %v3704 = vpack.c.b16 %v3605, %v3604
  %v3705 = vpack.c.b16 %v3607, %v3606
  %v3706 = vpack.c.b16 %v3609, %v3608
  %v3707 = vpack.c.b16 %v3611, %v3610
  %v3708 = vpack.c.b16 %v3613, %v3612
  %v3709 = vpack.c.b16 %v3615, %v3614
  %v3710 = vpack.c.b16 %v3617, %v3616
  %v3711 = vpack.c.b16 %v3619, %v3618
  %v3712 = vpack.c.b16 %v3621, %v3620
  %v3713 = vpack.c.b16 %v3623, %v3622
  %v3714 = vpack.c.b16 %v3625, %v3624
  %v3715 = vpack.c.b16 %v3627, %v3626
  %v3716 = vpack.c.b16 %v3629, %v3628
  %v3717 = vpack.c.b16 %v3631, %v3630
  %v3718 = vpack.c.b16 %v3633, %v3632
  %v3719 = vpack.c.b16 %v3635, %v3634
  %v3720 = vpack.c.b16 %v3637, %v3636
  %v3721 = vpack.c.b16 %v3639, %v3638
  %v3722 = vpack.c.b16 %v3641, %v3640
  %v3723 = vpack.c.b16 %v3643, %v3642
  %v3724 = vpack.c.b16 %v3645, %v3644
  %v3725 = vpack.c.b16 %v3647, %v3646
  %v3726 = vpack.c.b16 %v3649, %v3648
  %v3727 = vpack.c.b16 %v3651, %v3650
  %v3728 = vpack.c.b16 %v3653, %v3652
  %v3729 = vpack.c.b16 %v3655, %v3654
  %v3730 = vpack.c.b16 %v3657, %v3656
  %v3731 = vpack.c.b16 %v3659, %v3658
  %v3820 = vunpack.c.l.b16 %v3500
  %v3821 = vunpack.c.l.b16 %v3501
  %v3822 = vunpack.c.l.b16 %v3502
  %v3823 = vunpack.c.l.b16 %v3503
  %v3824 = vunpack.c.l.b16 %v3504
  %v3825 = vunpack.c.l.b16 %v3505
  %v3826 = vunpack.c.l.b16 %v3506
  %v3827 = vunpack.c.l.b16 %v3507
  %v3828 = vunpack.c.l.b16 %v3508
  %v3829 = vunpack.c.l.b16 %v3509
  %v3830 = vunpack.c.l.b16 %v3510
  %v3831 = vunpack.c.l.b16 %v3511
  %v3832 = vunpack.c.l.b16 %v3512
  %v3833 = vunpack.c.l.b16 %v3513
  %v3834 = vunpack.c.l.b16 %v3514
  %v3835 = vunpack.c.l.b16 %v3515
  %v3836 = vpack.c.b16 %v3821, %v3820
  %v3837 = vpack.c.b16 %v3823, %v3822
  %v3838 = vpack.c.b16 %v3825, %v3824
  %v3839 = vpack.c.b16 %v3827, %v3826
  %v3840 = vpack.c.b16 %v3829, %v3828
  %v3841 = vpack.c.b16 %v3831, %v3830
  %v3842 = vpack.c.b16 %v3833, %v3832
  %v3843 = vpack.c.b16 %v3835, %v3834
  %3852 = vmatpush.bf16.msra.mxu0 %v3843
  %3853 = vmatpush.bf16.msra.mxu0 %v3842
  %3854 = vmatpush.bf16.msra.mxu0 %v3841
  %3855 = vmatpush.bf16.msra.mxu0 %v3840
  %3856 = vmatpush.bf16.msra.mxu0 %v3839
  %3857 = vmatpush.bf16.msra.mxu0 %v3838
  %3858 = vmatpush.bf16.msra.mxu0 %v3837
  %3859 = vmatpush.bf16.msra.mxu0 %v3836
  %3860 = vmatmul.bf16.gmra.mxu0 %v3660
  %v3861 = vpop.f32.mrf.mxu0
  %v3862 = vadd.f32 0.0, %v3861
  %v3863 = vpop.f32.mrf.mxu0
  %v3864 = vadd.f32 0.0, %v3863
  %3865 = vmatmul.bf16.gmra.mxu0 %v3661
  %v3866 = vpop.f32.mrf.mxu0
  %v3867 = vadd.f32 0.0, %v3866
  %v3868 = vpop.f32.mrf.mxu0
  %v3869 = vadd.f32 0.0, %v3868
  %3870 = vmatmul.bf16.gmra.mxu0 %v3662
  %v3871 = vpop.f32.mrf.mxu0
  %v3872 = vadd.f32 0.0, %v3871
  %v3873 = vpop.f32.mrf.mxu0
  %v3874 = vadd.f32 0.0, %v3873
  %3875 = vmatmul.bf16.gmra.mxu0 %v3663
  %v3876 = vpop.f32.mrf.mxu0
  %v3877 = vadd.f32 0.0, %v3876
  %v3878 = vpop.f32.mrf.mxu0
  %v3879 = vadd.f32 0.0, %v3878
  %3880 = vmatmul.bf16.gmra.mxu0 %v3664
  %v3881 = vpop.f32.mrf.mxu0
  %v3882 = vadd.f32 0.0, %v3881
  %v3883 = vpop.f32.mrf.mxu0
  %v3884 = vadd.f32 0.0, %v3883
  %3885 = vmatmul.bf16.gmra.mxu0 %v3665
  %v3886 = vpop.f32.mrf.mxu0
  %v3887 = vadd.f32 0.0, %v3886
  %v3888 = vpop.f32.mrf.mxu0
  %v3889 = vadd.f32 0.0, %v3888
  %3890 = vmatmul.bf16.gmra.mxu0 %v3666
  %v3891 = vpop.f32.mrf.mxu0
  %v3892 = vadd.f32 0.0, %v3891
  %v3893 = vpop.f32.mrf.mxu0
  %v3894 = vadd.f32 0.0, %v3893
  %3895 = vmatmul.bf16.gmra.mxu0 %v3667
  %v3896 = vpop.f32.mrf.mxu0
  %v3897 = vadd.f32 0.0, %v3896
  %v3898 = vpop.f32.mrf.mxu0
  %v3899 = vadd.f32 0.0, %v3898
  %3900 = vmatmul.bf16.gmra.mxu0 %v3668
  %v3901 = vpop.f32.mrf.mxu0
  %v3902 = vadd.f32 0.0, %v3901
  %v3903 = vpop.f32.mrf.mxu0
  %v3904 = vadd.f32 0.0, %v3903
  %3905 = vmatmul.bf16.gmra.mxu0 %v3669
  %v3906 = vpop.f32.mrf.mxu0
  %v3907 = vadd.f32 0.0, %v3906
  %v3908 = vpop.f32.mrf.mxu0
  %v3909 = vadd.f32 0.0, %v3908
  %3910 = vmatmul.bf16.gmra.mxu0 %v3670
  %v3911 = vpop.f32.mrf.mxu0
  %v3912 = vadd.f32 0.0, %v3911
  %v3913 = vpop.f32.mrf.mxu0
  %v3914 = vadd.f32 0.0, %v3913
  %3915 = vmatmul.bf16.gmra.mxu0 %v3671
  %v3916 = vpop.f32.mrf.mxu0
  %v3917 = vadd.f32 0.0, %v3916
  %v3918 = vpop.f32.mrf.mxu0
  %v3919 = vadd.f32 0.0, %v3918
  %3920 = vmatmul.bf16.gmra.mxu0 %v3672
  %v3921 = vpop.f32.mrf.mxu0
  %v3922 = vadd.f32 0.0, %v3921
  %v3923 = vpop.f32.mrf.mxu0
  %v3924 = vadd.f32 0.0, %v3923
  %3925 = vmatmul.bf16.gmra.mxu0 %v3673
  %v3926 = vpop.f32.mrf.mxu0
  %v3927 = vadd.f32 0.0, %v3926
  %v3928 = vpop.f32.mrf.mxu0
  %v3929 = vadd.f32 0.0, %v3928
  %3930 = vmatmul.bf16.gmra.mxu0 %v3674
  %v3931 = vpop.f32.mrf.mxu0
  %v3932 = vadd.f32 0.0, %v3931
  %v3933 = vpop.f32.mrf.mxu0
  %v3934 = vadd.f32 0.0, %v3933
  %3935 = vmatmul.bf16.gmra.mxu0 %v3675
  %v3936 = vpop.f32.mrf.mxu0
  %v3937 = vadd.f32 0.0, %v3936
  %v3938 = vpop.f32.mrf.mxu0
  %v3939 = vadd.f32 0.0, %v3938
  %3940 = vmatmul.bf16.gmra.mxu0 %v3676
  %v3941 = vpop.f32.mrf.mxu0
  %v3942 = vadd.f32 0.0, %v3941
  %v3943 = vpop.f32.mrf.mxu0
  %v3944 = vadd.f32 0.0, %v3943
  %3945 = vmatmul.bf16.gmra.mxu0 %v3677
  %v3946 = vpop.f32.mrf.mxu0
  %v3947 = vadd.f32 0.0, %v3946
  %v3948 = vpop.f32.mrf.mxu0
  %v3949 = vadd.f32 0.0, %v3948
  %3950 = vmatmul.bf16.gmra.mxu0 %v3678
  %v3951 = vpop.f32.mrf.mxu0
  %v3952 = vadd.f32 0.0, %v3951
  %v3953 = vpop.f32.mrf.mxu0
  %v3954 = vadd.f32 0.0, %v3953
  %3955 = vmatmul.bf16.gmra.mxu0 %v3679
  %v3956 = vpop.f32.mrf.mxu0
  %v3957 = vadd.f32 0.0, %v3956
  %v3958 = vpop.f32.mrf.mxu0
  %v3959 = vadd.f32 0.0, %v3958
  %3960 = vmatmul.bf16.gmra.mxu0 %v3680
  %v3961 = vpop.f32.mrf.mxu0
  %v3962 = vadd.f32 0.0, %v3961
  %v3963 = vpop.f32.mrf.mxu0
  %v3964 = vadd.f32 0.0, %v3963
  %3965 = vmatmul.bf16.gmra.mxu0 %v3681
  %v3966 = vpop.f32.mrf.mxu0
  %v3967 = vadd.f32 0.0, %v3966
  %v3968 = vpop.f32.mrf.mxu0
  %v3969 = vadd.f32 0.0, %v3968
  %3970 = vmatmul.bf16.gmra.mxu0 %v3682
  %v3971 = vpop.f32.mrf.mxu0
  %v3972 = vadd.f32 0.0, %v3971
  %v3973 = vpop.f32.mrf.mxu0
  %v3974 = vadd.f32 0.0, %v3973
  %3975 = vmatmul.bf16.gmra.mxu0 %v3683
  %v3976 = vpop.f32.mrf.mxu0
  %v3977 = vadd.f32 0.0, %v3976
  %v3978 = vpop.f32.mrf.mxu0
  %v3979 = vadd.f32 0.0, %v3978
  %3980 = vmatmul.bf16.gmra.mxu0 %v3684
  %v3981 = vpop.f32.mrf.mxu0
  %v3982 = vadd.f32 0.0, %v3981
  %v3983 = vpop.f32.mrf.mxu0
  %v3984 = vadd.f32 0.0, %v3983
  %3985 = vmatmul.bf16.gmra.mxu0 %v3685
  %v3986 = vpop.f32.mrf.mxu0
  %v3987 = vadd.f32 0.0, %v3986
  %v3988 = vpop.f32.mrf.mxu0
  %v3989 = vadd.f32 0.0, %v3988
  %3990 = vmatmul.bf16.gmra.mxu0 %v3686
  %v3991 = vpop.f32.mrf.mxu0
  %v3992 = vadd.f32 0.0, %v3991
  %v3993 = vpop.f32.mrf.mxu0
  %v3994 = vadd.f32 0.0, %v3993
  %3995 = vmatmul.bf16.gmra.mxu0 %v3687
  %v3996 = vpop.f32.mrf.mxu0
  %v3997 = vadd.f32 0.0, %v3996
  %v3998 = vpop.f32.mrf.mxu0
  %v3999 = vadd.f32 0.0, %v3998
  %4000 = vmatmul.bf16.gmra.mxu0 %v3688
  %v4001 = vpop.f32.mrf.mxu0
  %v4002 = vadd.f32 0.0, %v4001
  %v4003 = vpop.f32.mrf.mxu0
  %v4004 = vadd.f32 0.0, %v4003
  %4005 = vmatmul.bf16.gmra.mxu0 %v3689
  %v4006 = vpop.f32.mrf.mxu0
  %v4007 = vadd.f32 0.0, %v4006
  %v4008 = vpop.f32.mrf.mxu0
  %v4009 = vadd.f32 0.0, %v4008
  %4010 = vmatmul.bf16.gmra.mxu0 %v3690
  %v4011 = vpop.f32.mrf.mxu0
  %v4012 = vadd.f32 0.0, %v4011
  %v4013 = vpop.f32.mrf.mxu0
  %v4014 = vadd.f32 0.0, %v4013
  %4015 = vmatmul.bf16.gmra.mxu0 %v3691
  %v4016 = vpop.f32.mrf.mxu0
  %v4017 = vadd.f32 0.0, %v4016
  %v4018 = vpop.f32.mrf.mxu0
  %v4019 = vadd.f32 0.0, %v4018
  %4020 = vmatmul.bf16.gmra.mxu0 %v3692
  %v4021 = vpop.f32.mrf.mxu0
  %v4022 = vadd.f32 0.0, %v4021
  %v4023 = vpop.f32.mrf.mxu0
  %v4024 = vadd.f32 0.0, %v4023
  %4025 = vmatmul.bf16.gmra.mxu0 %v3693
  %v4026 = vpop.f32.mrf.mxu0
  %v4027 = vadd.f32 0.0, %v4026
  %v4028 = vpop.f32.mrf.mxu0
  %v4029 = vadd.f32 0.0, %v4028
  %4030 = vmatmul.bf16.gmra.mxu0 %v3694
  %v4031 = vpop.f32.mrf.mxu0
  %v4032 = vadd.f32 0.0, %v4031
  %v4033 = vpop.f32.mrf.mxu0
  %v4034 = vadd.f32 0.0, %v4033
  %4035 = vmatmul.bf16.gmra.mxu0 %v3695
  %v4036 = vpop.f32.mrf.mxu0
  %v4037 = vadd.f32 0.0, %v4036
  %v4038 = vpop.f32.mrf.mxu0
  %v4039 = vadd.f32 0.0, %v4038
  %4040 = vmatmul.bf16.gmra.mxu0 %v3696
  %v4041 = vpop.f32.mrf.mxu0
  %v4042 = vadd.f32 0.0, %v4041
  %v4043 = vpop.f32.mrf.mxu0
  %v4044 = vadd.f32 0.0, %v4043
  %4045 = vmatmul.bf16.gmra.mxu0 %v3697
  %v4046 = vpop.f32.mrf.mxu0
  %v4047 = vadd.f32 0.0, %v4046
  %v4048 = vpop.f32.mrf.mxu0
  %v4049 = vadd.f32 0.0, %v4048
  %4050 = vmatmul.bf16.gmra.mxu0 %v3698
  %v4051 = vpop.f32.mrf.mxu0
  %v4052 = vadd.f32 0.0, %v4051
  %v4053 = vpop.f32.mrf.mxu0
  %v4054 = vadd.f32 0.0, %v4053
  %4055 = vmatmul.bf16.gmra.mxu0 %v3699
  %v4056 = vpop.f32.mrf.mxu0
  %v4057 = vadd.f32 0.0, %v4056
  %v4058 = vpop.f32.mrf.mxu0
  %v4059 = vadd.f32 0.0, %v4058
  %4060 = vmatmul.bf16.gmra.mxu0 %v3700
  %v4061 = vpop.f32.mrf.mxu0
  %v4062 = vadd.f32 0.0, %v4061
  %v4063 = vpop.f32.mrf.mxu0
  %v4064 = vadd.f32 0.0, %v4063
  %4065 = vmatmul.bf16.gmra.mxu0 %v3701
  %v4066 = vpop.f32.mrf.mxu0
  %v4067 = vadd.f32 0.0, %v4066
  %v4068 = vpop.f32.mrf.mxu0
  %v4069 = vadd.f32 0.0, %v4068
  %4070 = vmatmul.bf16.gmra.mxu0 %v3702
  %v4071 = vpop.f32.mrf.mxu0
  %v4072 = vadd.f32 0.0, %v4071
  %v4073 = vpop.f32.mrf.mxu0
  %v4074 = vadd.f32 0.0, %v4073
  %4075 = vmatmul.bf16.gmra.mxu0 %v3703
  %v4076 = vpop.f32.mrf.mxu0
  %v4077 = vadd.f32 0.0, %v4076
  %v4078 = vpop.f32.mrf.mxu0
  %v4079 = vadd.f32 0.0, %v4078
  %4080 = vmatmul.bf16.gmra.mxu0 %v3704
  %v4081 = vpop.f32.mrf.mxu0
  %v4082 = vadd.f32 0.0, %v4081
  %v4083 = vpop.f32.mrf.mxu0
  %v4084 = vadd.f32 0.0, %v4083
  %4085 = vmatmul.bf16.gmra.mxu0 %v3705
  %v4086 = vpop.f32.mrf.mxu0
  %v4087 = vadd.f32 0.0, %v4086
  %v4088 = vpop.f32.mrf.mxu0
  %v4089 = vadd.f32 0.0, %v4088
  %4090 = vmatmul.bf16.gmra.mxu0 %v3706
  %v4091 = vpop.f32.mrf.mxu0
  %v4092 = vadd.f32 0.0, %v4091
  %v4093 = vpop.f32.mrf.mxu0
  %v4094 = vadd.f32 0.0, %v4093
  %4095 = vmatmul.bf16.gmra.mxu0 %v3707
  %v4096 = vpop.f32.mrf.mxu0
  %v4097 = vadd.f32 0.0, %v4096
  %v4098 = vpop.f32.mrf.mxu0
  %v4099 = vadd.f32 0.0, %v4098
  %4100 = vmatmul.bf16.gmra.mxu0 %v3708
  %v4101 = vpop.f32.mrf.mxu0
  %v4102 = vadd.f32 0.0, %v4101
  %v4103 = vpop.f32.mrf.mxu0
  %v4104 = vadd.f32 0.0, %v4103
  %4105 = vmatmul.bf16.gmra.mxu0 %v3709
  %v4106 = vpop.f32.mrf.mxu0
  %v4107 = vadd.f32 0.0, %v4106
  %v4108 = vpop.f32.mrf.mxu0
  %v4109 = vadd.f32 0.0, %v4108
  %4110 = vmatmul.bf16.gmra.mxu0 %v3710
  %v4111 = vpop.f32.mrf.mxu0
  %v4112 = vadd.f32 0.0, %v4111
  %v4113 = vpop.f32.mrf.mxu0
  %v4114 = vadd.f32 0.0, %v4113
  %4115 = vmatmul.bf16.gmra.mxu0 %v3711
  %v4116 = vpop.f32.mrf.mxu0
  %v4117 = vadd.f32 0.0, %v4116
  %v4118 = vpop.f32.mrf.mxu0
  %v4119 = vadd.f32 0.0, %v4118
  %4120 = vmatmul.bf16.gmra.mxu0 %v3712
  %v4121 = vpop.f32.mrf.mxu0
  %v4122 = vadd.f32 0.0, %v4121
  %v4123 = vpop.f32.mrf.mxu0
  %v4124 = vadd.f32 0.0, %v4123
  %4125 = vmatmul.bf16.gmra.mxu0 %v3713
  %v4126 = vpop.f32.mrf.mxu0
  %v4127 = vadd.f32 0.0, %v4126
  %v4128 = vpop.f32.mrf.mxu0
  %v4129 = vadd.f32 0.0, %v4128
  %4130 = vmatmul.bf16.gmra.mxu0 %v3714
  %v4131 = vpop.f32.mrf.mxu0
  %v4132 = vadd.f32 0.0, %v4131
  %v4133 = vpop.f32.mrf.mxu0
  %v4134 = vadd.f32 0.0, %v4133
  %4135 = vmatmul.bf16.gmra.mxu0 %v3715
  %v4136 = vpop.f32.mrf.mxu0
  %v4137 = vadd.f32 0.0, %v4136
  %v4138 = vpop.f32.mrf.mxu0
  %v4139 = vadd.f32 0.0, %v4138
  %4140 = vmatmul.bf16.gmra.mxu0 %v3716
  %v4141 = vpop.f32.mrf.mxu0
  %v4142 = vadd.f32 0.0, %v4141
  %v4143 = vpop.f32.mrf.mxu0
  %v4144 = vadd.f32 0.0, %v4143
  %4145 = vmatmul.bf16.gmra.mxu0 %v3717
  %v4146 = vpop.f32.mrf.mxu0
  %v4147 = vadd.f32 0.0, %v4146
  %v4148 = vpop.f32.mrf.mxu0
  %v4149 = vadd.f32 0.0, %v4148
  %4150 = vmatmul.bf16.gmra.mxu0 %v3718
  %v4151 = vpop.f32.mrf.mxu0
  %v4152 = vadd.f32 0.0, %v4151
  %v4153 = vpop.f32.mrf.mxu0
  %v4154 = vadd.f32 0.0, %v4153
  %4155 = vmatmul.bf16.gmra.mxu0 %v3719
  %v4156 = vpop.f32.mrf.mxu0
  %v4157 = vadd.f32 0.0, %v4156
  %v4158 = vpop.f32.mrf.mxu0
  %v4159 = vadd.f32 0.0, %v4158
  %4160 = vmatmul.bf16.gmra.mxu0 %v3720
  %v4161 = vpop.f32.mrf.mxu0
  %v4162 = vadd.f32 0.0, %v4161
  %v4163 = vpop.f32.mrf.mxu0
  %v4164 = vadd.f32 0.0, %v4163
  %4165 = vmatmul.bf16.gmra.mxu0 %v3721
  %v4166 = vpop.f32.mrf.mxu0
  %v4167 = vadd.f32 0.0, %v4166
  %v4168 = vpop.f32.mrf.mxu0
  %v4169 = vadd.f32 0.0, %v4168
  %4170 = vmatmul.bf16.gmra.mxu0 %v3722
  %v4171 = vpop.f32.mrf.mxu0
  %v4172 = vadd.f32 0.0, %v4171
  %v4173 = vpop.f32.mrf.mxu0
  %v4174 = vadd.f32 0.0, %v4173
  %4175 = vmatmul.bf16.gmra.mxu0 %v3723
  %v4176 = vpop.f32.mrf.mxu0
  %v4177 = vadd.f32 0.0, %v4176
  %v4178 = vpop.f32.mrf.mxu0
  %v4179 = vadd.f32 0.0, %v4178
  %4180 = vmatmul.bf16.gmra.mxu0 %v3724
  %v4181 = vpop.f32.mrf.mxu0
  %v4182 = vadd.f32 0.0, %v4181
  %v4183 = vpop.f32.mrf.mxu0
  %v4184 = vadd.f32 0.0, %v4183
  %4185 = vmatmul.bf16.gmra.mxu0 %v3725
  %v4186 = vpop.f32.mrf.mxu0
  %v4187 = vadd.f32 0.0, %v4186
  %v4188 = vpop.f32.mrf.mxu0
  %v4189 = vadd.f32 0.0, %v4188
  %4190 = vmatmul.bf16.gmra.mxu0 %v3726
  %v4191 = vpop.f32.mrf.mxu0
  %v4192 = vadd.f32 0.0, %v4191
  %v4193 = vpop.f32.mrf.mxu0
  %v4194 = vadd.f32 0.0, %v4193
  %4195 = vmatmul.bf16.gmra.mxu0 %v3727
  %v4196 = vpop.f32.mrf.mxu0
  %v4197 = vadd.f32 0.0, %v4196
  %v4198 = vpop.f32.mrf.mxu0
  %v4199 = vadd.f32 0.0, %v4198
  %4200 = vmatmul.bf16.gmra.mxu0 %v3728
  %v4201 = vpop.f32.mrf.mxu0
  %v4202 = vadd.f32 0.0, %v4201
  %v4203 = vpop.f32.mrf.mxu0
  %v4204 = vadd.f32 0.0, %v4203
  %4205 = vmatmul.bf16.gmra.mxu0 %v3729
  %v4206 = vpop.f32.mrf.mxu0
  %v4207 = vadd.f32 0.0, %v4206
  %v4208 = vpop.f32.mrf.mxu0
  %v4209 = vadd.f32 0.0, %v4208
  %4210 = vmatmul.bf16.gmra.mxu0 %v3730
  %v4211 = vpop.f32.mrf.mxu0
  %v4212 = vadd.f32 0.0, %v4211
  %v4213 = vpop.f32.mrf.mxu0
  %v4214 = vadd.f32 0.0, %v4213
  %4215 = vmatmul.bf16.gmra.mxu0 %v3731
  %v4216 = vpop.f32.mrf.mxu0
  %v4217 = vadd.f32 0.0, %v4216
  %v4218 = vpop.f32.mrf.mxu0
  %v4219 = vadd.f32 0.0, %v4218
  %4220 = vdwg.mxu0
  %v4221 = vld [vmem:[%s1] sm:$0xff]
  %v4222 = vld [vmem:[%s7] sm:$0x77]
  %v4223 = vld [vmem:[%s8] sm:$0x3]
  %v4225 = vperm.slane %v4223, 0
  %v4226 = vperm.slane %v4223, 1
  %4230 = vst [vmem:[#allocation1] ss:$2 sm:$0xff] %v4222
  %v4231 = vld.sshfl [vmem:[#allocation1] sm:$0xff pattern:$0x75316420]
  %v4232 = vld.sshfl [vmem:[#allocation1 + $0x8] sm:$0xff pattern:$0x75316420]
  %v4234 = vsel %vm554, %v4221, 0
  %vm4236 = vcmask 1042432
  %v4237 = vsel %vm4236, %v4231, 0
  %v4239 = vsel %vm4236, %v4232, 0
  %4241 = vmatpush.msra.mxu0 0.0
  %4242 = vmatpush.msra.mxu0 0.0
  %4243 = vmatpush.msra.mxu0 0.0
  %4244 = vmatpush.msra.mxu0 0.0
  %4245 = vmatpush.msra.mxu0 0.0
  %4246 = vmatpush.msra.mxu0 0.0
  %4247 = vmatpush.msra.mxu0 0.0
  %4248 = vmatpush.msra.mxu0 0.0
  %4249 = vmatpush.msra.mxu0 0.0
  %4250 = vmatpush.msra.mxu0 0.0
  %4251 = vmatpush.msra.mxu0 0.0
  %4252 = vmatpush.msra.mxu0 0.0
  %4253 = vmatpush.msra.mxu0 0.0
  %4254 = vmatpush.msra.mxu0 0.0
  %4255 = vmatpush.msra.mxu0 0.0
  %4256 = vmatpush.msra.mxu0 %v4237
  %4257 = vmatmul.f32.gmra.mxu0 %v4234
  %v4258 = vpop.f32.mrf.mxu0
  %v4259 = vadd.f32 %v4225, %v4258
  %4260 = vdwg.mxu0
  %4261 = vmatpush.msra.mxu0 0.0
  %4262 = vmatpush.msra.mxu0 0.0
  %4263 = vmatpush.msra.mxu0 0.0
  %4264 = vmatpush.msra.mxu0 0.0
  %4265 = vmatpush.msra.mxu0 0.0
  %4266 = vmatpush.msra.mxu0 0.0
  %4267 = vmatpush.msra.mxu0 0.0
  %4268 = vmatpush.msra.mxu0 0.0
  %4269 = vmatpush.msra.mxu0 0.0
  %4270 = vmatpush.msra.mxu0 0.0
  %4271 = vmatpush.msra.mxu0 0.0
  %4272 = vmatpush.msra.mxu0 0.0
  %4273 = vmatpush.msra.mxu0 0.0
  %4274 = vmatpush.msra.mxu0 0.0
  %4275 = vmatpush.msra.mxu0 0.0
  %4276 = vmatpush.msra.mxu0 %v4239
  %4277 = vmatmul.f32.gmra.mxu0 %v4234
  %v4278 = vpop.f32.mrf.mxu0
  %v4279 = vadd.f32 %v4226, %v4278
  %4280 = vdwg.mxu0
  %v4283 = vrot.slane %v4279, 7
  %v4284 = vsel %vm771, %v4259, %v4283
  %vm4285 = vcmask 1041409
  %v4286 = vsel %vm4285, %v4259, %v4283
  %v4287 = vrot.slane %v4286, 1
  %vm4288 = vcmask 1042434
  %v4289 = vsel %vm4288, %v4259, %v4283
  %v4290 = vrot.slane %v4289, 2
  %vm4291 = vcmask 1043459
  %v4292 = vsel %vm4291, %v4259, %v4283
  %v4293 = vrot.slane %v4292, 3
  %vm4294 = vcmask 1044484
  %v4295 = vsel %vm4294, %v4259, %v4283
  %v4296 = vrot.slane %v4295, 4
  %vm4297 = vcmask 1045509
  %v4298 = vsel %vm4297, %v4259, %v4283
  %v4299 = vrot.slane %v4298, 5
  %vm4300 = vcmask 1046534
  %v4301 = vsel %vm4300, %v4259, %v4283
  %v4302 = vrot.slane %v4301, 6
  %vm4303 = vcmask 1046528
  %v4304 = vsel %vm4303, %v4283, %v4259
  %v4305 = vrot.slane %v4304, 7
  %v4306 = vperm.slane %v4284, 0
  %v4307 = vperm.slane %v4284, 1
  %v4308 = vperm.slane %v4287, 0
  %v4309 = vperm.slane %v4287, 1
  %v4310 = vperm.slane %v4290, 0
  %v4311 = vperm.slane %v4290, 1
  %v4312 = vperm.slane %v4293, 0
  %v4313 = vperm.slane %v4293, 1
  %v4314 = vperm.slane %v4296, 0
  %v4315 = vperm.slane %v4296, 1
  %v4316 = vperm.slane %v4299, 0
  %v4317 = vperm.slane %v4299, 1
  %v4318 = vperm.slane %v4302, 0
  %v4319 = vperm.slane %v4302, 1
  %v4320 = vperm.slane %v4305, 0
  %v4321 = vperm.slane %v4305, 1
  %v4338 = vadd.f32 %v3141, %v4306
  %v4339 = vadd.f32 %v3862, %v4307
  %v4340 = vadd.f32 %v3143, %v4306
  %v4341 = vadd.f32 %v3864, %v4307
  %v4342 = vadd.f32 %v3146, %v4306
  %v4343 = vadd.f32 %v3867, %v4307
  %v4344 = vadd.f32 %v3148, %v4306
  %v4345 = vadd.f32 %v3869, %v4307
  %v4346 = vadd.f32 %v3151, %v4306
  %v4347 = vadd.f32 %v3872, %v4307
  %v4348 = vadd.f32 %v3153, %v4306
  %v4349 = vadd.f32 %v3874, %v4307
  %v4350 = vadd.f32 %v3156, %v4306
  %v4351 = vadd.f32 %v3877, %v4307
  %v4352 = vadd.f32 %v3158, %v4306
  %v4353 = vadd.f32 %v3879, %v4307
  %v4354 = vadd.f32 %v3161, %v4306
  %v4355 = vadd.f32 %v3882, %v4307
  %v4356 = vadd.f32 %v3163, %v4306
  %v4357 = vadd.f32 %v3884, %v4307
  %v4358 = vadd.f32 %v3166, %v4306
  %v4359 = vadd.f32 %v3887, %v4307
  %v4360 = vadd.f32 %v3168, %v4306
  %v4361 = vadd.f32 %v3889, %v4307
  %v4362 = vadd.f32 %v3171, %v4306
  %v4363 = vadd.f32 %v3892, %v4307
  %v4364 = vadd.f32 %v3173, %v4306
  %v4365 = vadd.f32 %v3894, %v4307
  %v4366 = vadd.f32 %v3176, %v4306
  %v4367 = vadd.f32 %v3897, %v4307
  %v4368 = vadd.f32 %v3178, %v4306
  %v4369 = vadd.f32 %v3899, %v4307
  %v4370 = vadd.f32 %v3181, %v4306
  %v4371 = vadd.f32 %v3902, %v4307
  %v4372 = vadd.f32 %v3183, %v4306
  %v4373 = vadd.f32 %v3904, %v4307
  %v4374 = vadd.f32 %v3186, %v4308
  %v4375 = vadd.f32 %v3907, %v4309
  %v4376 = vadd.f32 %v3188, %v4308
  %v4377 = vadd.f32 %v3909, %v4309
  %v4378 = vadd.f32 %v3191, %v4308
  %v4379 = vadd.f32 %v3912, %v4309
  %v4380 = vadd.f32 %v3193, %v4308
  %v4381 = vadd.f32 %v3914, %v4309
  %v4382 = vadd.f32 %v3196, %v4308
  %v4383 = vadd.f32 %v3917, %v4309
  %v4384 = vadd.f32 %v3198, %v4308
  %v4385 = vadd.f32 %v3919, %v4309
  %v4386 = vadd.f32 %v3201, %v4308
  %v4387 = vadd.f32 %v3922, %v4309
  %v4388 = vadd.f32 %v3203, %v4308
  %v4389 = vadd.f32 %v3924, %v4309
  %v4390 = vadd.f32 %v3206, %v4308
  %v4391 = vadd.f32 %v3927, %v4309
  %v4392 = vadd.f32 %v3208, %v4308
  %v4393 = vadd.f32 %v3929, %v4309
  %v4394 = vadd.f32 %v3211, %v4308
  %v4395 = vadd.f32 %v3932, %v4309
  %v4396 = vadd.f32 %v3213, %v4308
  %v4397 = vadd.f32 %v3934, %v4309
  %v4398 = vadd.f32 %v3216, %v4308
  %v4399 = vadd.f32 %v3937, %v4309
  %v4400 = vadd.f32 %v3218, %v4308
  %v4401 = vadd.f32 %v3939, %v4309
  %v4402 = vadd.f32 %v3221, %v4308
  %v4403 = vadd.f32 %v3942, %v4309
  %v4404 = vadd.f32 %v3223, %v4308
  %v4405 = vadd.f32 %v3944, %v4309
  %v4406 = vadd.f32 %v3226, %v4308
  %v4407 = vadd.f32 %v3947, %v4309
  %v4408 = vadd.f32 %v3228, %v4308
  %v4409 = vadd.f32 %v3949, %v4309
  %v4410 = vadd.f32 %v3231, %v4310
  %v4411 = vadd.f32 %v3952, %v4311
  %v4412 = vadd.f32 %v3233, %v4310
  %v4413 = vadd.f32 %v3954, %v4311
  %v4414 = vadd.f32 %v3236, %v4310
  %v4415 = vadd.f32 %v3957, %v4311
  %v4416 = vadd.f32 %v3238, %v4310
  %v4417 = vadd.f32 %v3959, %v4311
  %v4418 = vadd.f32 %v3241, %v4310
  %v4419 = vadd.f32 %v3962, %v4311
  %v4420 = vadd.f32 %v3243, %v4310
  %v4421 = vadd.f32 %v3964, %v4311
  %v4422 = vadd.f32 %v3246, %v4310
  %v4423 = vadd.f32 %v3967, %v4311
  %v4424 = vadd.f32 %v3248, %v4310
  %v4425 = vadd.f32 %v3969, %v4311
  %v4426 = vadd.f32 %v3251, %v4310
  %v4427 = vadd.f32 %v3972, %v4311
  %v4428 = vadd.f32 %v3253, %v4310
  %v4429 = vadd.f32 %v3974, %v4311
  %v4430 = vadd.f32 %v3256, %v4310
  %v4431 = vadd.f32 %v3977, %v4311
  %v4432 = vadd.f32 %v3258, %v4310
  %v4433 = vadd.f32 %v3979, %v4311
  %v4434 = vadd.f32 %v3261, %v4310
  %v4435 = vadd.f32 %v3982, %v4311
  %v4436 = vadd.f32 %v3263, %v4310
  %v4437 = vadd.f32 %v3984, %v4311
  %v4438 = vadd.f32 %v3266, %v4310
  %v4439 = vadd.f32 %v3987, %v4311
  %v4440 = vadd.f32 %v3268, %v4310
  %v4441 = vadd.f32 %v3989, %v4311
  %v4442 = vadd.f32 %v3271, %v4310
  %v4443 = vadd.f32 %v3992, %v4311
  %v4444 = vadd.f32 %v3273, %v4310
  %v4445 = vadd.f32 %v3994, %v4311
  %v4446 = vadd.f32 %v3276, %v4312
  %v4447 = vadd.f32 %v3997, %v4313
  %v4448 = vadd.f32 %v3278, %v4312
  %v4449 = vadd.f32 %v3999, %v4313
  %v4450 = vadd.f32 %v3281, %v4312
  %v4451 = vadd.f32 %v4002, %v4313
  %v4452 = vadd.f32 %v3283, %v4312
  %v4453 = vadd.f32 %v4004, %v4313
  %v4454 = vadd.f32 %v3286, %v4312
  %v4455 = vadd.f32 %v4007, %v4313
  %v4456 = vadd.f32 %v3288, %v4312
  %v4457 = vadd.f32 %v4009, %v4313
  %v4458 = vadd.f32 %v3291, %v4312
  %v4459 = vadd.f32 %v4012, %v4313
  %v4460 = vadd.f32 %v3293, %v4312
  %v4461 = vadd.f32 %v4014, %v4313
  %v4462 = vadd.f32 %v3296, %v4312
  %v4463 = vadd.f32 %v4017, %v4313
  %v4464 = vadd.f32 %v3298, %v4312
  %v4465 = vadd.f32 %v4019, %v4313
  %v4466 = vadd.f32 %v3301, %v4312
  %v4467 = vadd.f32 %v4022, %v4313
  %v4468 = vadd.f32 %v3303, %v4312
  %v4469 = vadd.f32 %v4024, %v4313
  %v4470 = vadd.f32 %v3306, %v4312
  %v4471 = vadd.f32 %v4027, %v4313
  %v4472 = vadd.f32 %v3308, %v4312
  %v4473 = vadd.f32 %v4029, %v4313
  %v4474 = vadd.f32 %v3311, %v4312
  %v4475 = vadd.f32 %v4032, %v4313
  %v4476 = vadd.f32 %v3313, %v4312
  %v4477 = vadd.f32 %v4034, %v4313
  %v4478 = vadd.f32 %v3316, %v4312
  %v4479 = vadd.f32 %v4037, %v4313
  %v4480 = vadd.f32 %v3318, %v4312
  %v4481 = vadd.f32 %v4039, %v4313
  %v4482 = vadd.f32 %v3321, %v4314
  %v4483 = vadd.f32 %v4042, %v4315
  %v4484 = vadd.f32 %v3323, %v4314
  %v4485 = vadd.f32 %v4044, %v4315
  %v4486 = vadd.f32 %v3326, %v4314
  %v4487 = vadd.f32 %v4047, %v4315
  %v4488 = vadd.f32 %v3328, %v4314
  %v4489 = vadd.f32 %v4049, %v4315
  %v4490 = vadd.f32 %v3331, %v4314
  %v4491 = vadd.f32 %v4052, %v4315
  %v4492 = vadd.f32 %v3333, %v4314
  %v4493 = vadd.f32 %v4054, %v4315
  %v4494 = vadd.f32 %v3336, %v4314
  %v4495 = vadd.f32 %v4057, %v4315
  %v4496 = vadd.f32 %v3338, %v4314
  %v4497 = vadd.f32 %v4059, %v4315
  %v4498 = vadd.f32 %v3341, %v4314
  %v4499 = vadd.f32 %v4062, %v4315
  %v4500 = vadd.f32 %v3343, %v4314
  %v4501 = vadd.f32 %v4064, %v4315
  %v4502 = vadd.f32 %v3346, %v4314
  %v4503 = vadd.f32 %v4067, %v4315
  %v4504 = vadd.f32 %v3348, %v4314
  %v4505 = vadd.f32 %v4069, %v4315
  %v4506 = vadd.f32 %v3351, %v4314
  %v4507 = vadd.f32 %v4072, %v4315
  %v4508 = vadd.f32 %v3353, %v4314
  %v4509 = vadd.f32 %v4074, %v4315
  %v4510 = vadd.f32 %v3356, %v4314
  %v4511 = vadd.f32 %v4077, %v4315
  %v4512 = vadd.f32 %v3358, %v4314
  %v4513 = vadd.f32 %v4079, %v4315
  %v4514 = vadd.f32 %v3361, %v4314
  %v4515 = vadd.f32 %v4082, %v4315
  %v4516 = vadd.f32 %v3363, %v4314
  %v4517 = vadd.f32 %v4084, %v4315
  %v4518 = vadd.f32 %v3366, %v4316
  %v4519 = vadd.f32 %v4087, %v4317
  %v4520 = vadd.f32 %v3368, %v4316
  %v4521 = vadd.f32 %v4089, %v4317
  %v4522 = vadd.f32 %v3371, %v4316
  %v4523 = vadd.f32 %v4092, %v4317
  %v4524 = vadd.f32 %v3373, %v4316
  %v4525 = vadd.f32 %v4094, %v4317
  %v4526 = vadd.f32 %v3376, %v4316
  %v4527 = vadd.f32 %v4097, %v4317
  %v4528 = vadd.f32 %v3378, %v4316
  %v4529 = vadd.f32 %v4099, %v4317
  %v4530 = vadd.f32 %v3381, %v4316
  %v4531 = vadd.f32 %v4102, %v4317
  %v4532 = vadd.f32 %v3383, %v4316
  %v4533 = vadd.f32 %v4104, %v4317
  %v4534 = vadd.f32 %v3386, %v4316
  %v4535 = vadd.f32 %v4107, %v4317
  %v4536 = vadd.f32 %v3388, %v4316
  %v4537 = vadd.f32 %v4109, %v4317
  %v4538 = vadd.f32 %v3391, %v4316
  %v4539 = vadd.f32 %v4112, %v4317
  %v4540 = vadd.f32 %v3393, %v4316
  %v4541 = vadd.f32 %v4114, %v4317
  %v4542 = vadd.f32 %v3396, %v4316
  %v4543 = vadd.f32 %v4117, %v4317
  %v4544 = vadd.f32 %v3398, %v4316
  %v4545 = vadd.f32 %v4119, %v4317
  %v4546 = vadd.f32 %v3401, %v4316
  %v4547 = vadd.f32 %v4122, %v4317
  %v4548 = vadd.f32 %v3403, %v4316
  %v4549 = vadd.f32 %v4124, %v4317
  %v4550 = vadd.f32 %v3406, %v4316
  %v4551 = vadd.f32 %v4127, %v4317
  %v4552 = vadd.f32 %v3408, %v4316
  %v4553 = vadd.f32 %v4129, %v4317
  %v4554 = vadd.f32 %v3411, %v4318
  %v4555 = vadd.f32 %v4132, %v4319
  %v4556 = vadd.f32 %v3413, %v4318
  %v4557 = vadd.f32 %v4134, %v4319
  %v4558 = vadd.f32 %v3416, %v4318
  %v4559 = vadd.f32 %v4137, %v4319
  %v4560 = vadd.f32 %v3418, %v4318
  %v4561 = vadd.f32 %v4139, %v4319
  %v4562 = vadd.f32 %v3421, %v4318
  %v4563 = vadd.f32 %v4142, %v4319
  %v4564 = vadd.f32 %v3423, %v4318
  %v4565 = vadd.f32 %v4144, %v4319
  %v4566 = vadd.f32 %v3426, %v4318
  %v4567 = vadd.f32 %v4147, %v4319
  %v4568 = vadd.f32 %v3428, %v4318
  %v4569 = vadd.f32 %v4149, %v4319
  %v4570 = vadd.f32 %v3431, %v4318
  %v4571 = vadd.f32 %v4152, %v4319
  %v4572 = vadd.f32 %v3433, %v4318
  %v4573 = vadd.f32 %v4154, %v4319
  %v4574 = vadd.f32 %v3436, %v4318
  %v4575 = vadd.f32 %v4157, %v4319
  %v4576 = vadd.f32 %v3438, %v4318
  %v4577 = vadd.f32 %v4159, %v4319
  %v4578 = vadd.f32 %v3441, %v4318
  %v4579 = vadd.f32 %v4162, %v4319
  %v4580 = vadd.f32 %v3443, %v4318
  %v4581 = vadd.f32 %v4164, %v4319
  %v4582 = vadd.f32 %v3446, %v4318
  %v4583 = vadd.f32 %v4167, %v4319
  %v4584 = vadd.f32 %v3448, %v4318
  %v4585 = vadd.f32 %v4169, %v4319
  %v4586 = vadd.f32 %v3451, %v4318
  %v4587 = vadd.f32 %v4172, %v4319
  %v4588 = vadd.f32 %v3453, %v4318
  %v4589 = vadd.f32 %v4174, %v4319
  %v4590 = vadd.f32 %v3456, %v4320
  %v4591 = vadd.f32 %v4177, %v4321
  %v4592 = vadd.f32 %v3458, %v4320
  %v4593 = vadd.f32 %v4179, %v4321
  %v4594 = vadd.f32 %v3461, %v4320
  %v4595 = vadd.f32 %v4182, %v4321
  %v4596 = vadd.f32 %v3463, %v4320
  %v4597 = vadd.f32 %v4184, %v4321
  %v4598 = vadd.f32 %v3466, %v4320
  %v4599 = vadd.f32 %v4187, %v4321
  %v4600 = vadd.f32 %v3468, %v4320
  %v4601 = vadd.f32 %v4189, %v4321
  %v4602 = vadd.f32 %v3471, %v4320
  %v4603 = vadd.f32 %v4192, %v4321
  %v4604 = vadd.f32 %v3473, %v4320
  %v4605 = vadd.f32 %v4194, %v4321
  %v4606 = vadd.f32 %v3476, %v4320
  %v4607 = vadd.f32 %v4197, %v4321
  %v4608 = vadd.f32 %v3478, %v4320
  %v4609 = vadd.f32 %v4199, %v4321
  %v4610 = vadd.f32 %v3481, %v4320
  %v4611 = vadd.f32 %v4202, %v4321
  %v4612 = vadd.f32 %v3483, %v4320
  %v4613 = vadd.f32 %v4204, %v4321
  %v4614 = vadd.f32 %v3486, %v4320
  %v4615 = vadd.f32 %v4207, %v4321
  %v4616 = vadd.f32 %v3488, %v4320
  %v4617 = vadd.f32 %v4209, %v4321
  %v4618 = vadd.f32 %v3491, %v4320
  %v4619 = vadd.f32 %v4212, %v4321
  %v4620 = vadd.f32 %v3493, %v4320
  %v4621 = vadd.f32 %v4214, %v4321
  %v4622 = vadd.f32 %v3496, %v4320
  %v4623 = vadd.f32 %v4217, %v4321
  %v4624 = vadd.f32 %v3498, %v4320
  %v4625 = vadd.f32 %v4219, %v4321
  %v4626 = vmax.f32 %v4338, 0.0
  %v4627 = vmax.f32 %v4339, 0.0
  %v4628 = vmax.f32 %v4340, 0.0
  %v4629 = vmax.f32 %v4341, 0.0
  %v4630 = vmax.f32 %v4342, 0.0
  %v4631 = vmax.f32 %v4343, 0.0
  %v4632 = vmax.f32 %v4344, 0.0
  %v4633 = vmax.f32 %v4345, 0.0
  %v4634 = vmax.f32 %v4346, 0.0
  %v4635 = vmax.f32 %v4347, 0.0
  %v4636 = vmax.f32 %v4348, 0.0
  %v4637 = vmax.f32 %v4349, 0.0
  %v4638 = vmax.f32 %v4350, 0.0
  %v4639 = vmax.f32 %v4351, 0.0
  %v4640 = vmax.f32 %v4352, 0.0
  %v4641 = vmax.f32 %v4353, 0.0
  %v4642 = vmax.f32 %v4354, 0.0
  %v4643 = vmax.f32 %v4355, 0.0
  %v4644 = vmax.f32 %v4356, 0.0
  %v4645 = vmax.f32 %v4357, 0.0
  %v4646 = vmax.f32 %v4358, 0.0
  %v4647 = vmax.f32 %v4359, 0.0
  %v4648 = vmax.f32 %v4360, 0.0
  %v4649 = vmax.f32 %v4361, 0.0
  %v4650 = vmax.f32 %v4362, 0.0
  %v4651 = vmax.f32 %v4363, 0.0
  %v4652 = vmax.f32 %v4364, 0.0
  %v4653 = vmax.f32 %v4365, 0.0
  %v4654 = vmax.f32 %v4366, 0.0
  %v4655 = vmax.f32 %v4367, 0.0
  %v4656 = vmax.f32 %v4368, 0.0
  %v4657 = vmax.f32 %v4369, 0.0
  %v4658 = vmax.f32 %v4370, 0.0
  %v4659 = vmax.f32 %v4371, 0.0
  %v4660 = vmax.f32 %v4372, 0.0
  %v4661 = vmax.f32 %v4373, 0.0
  %v4662 = vmax.f32 %v4374, 0.0
  %v4663 = vmax.f32 %v4375, 0.0
  %v4664 = vmax.f32 %v4376, 0.0
  %v4665 = vmax.f32 %v4377, 0.0
  %v4666 = vmax.f32 %v4378, 0.0
  %v4667 = vmax.f32 %v4379, 0.0
  %v4668 = vmax.f32 %v4380, 0.0
  %v4669 = vmax.f32 %v4381, 0.0
  %v4670 = vmax.f32 %v4382, 0.0
  %v4671 = vmax.f32 %v4383, 0.0
  %v4672 = vmax.f32 %v4384, 0.0
  %v4673 = vmax.f32 %v4385, 0.0
  %v4674 = vmax.f32 %v4386, 0.0
  %v4675 = vmax.f32 %v4387, 0.0
  %v4676 = vmax.f32 %v4388, 0.0
  %v4677 = vmax.f32 %v4389, 0.0
  %v4678 = vmax.f32 %v4390, 0.0
  %v4679 = vmax.f32 %v4391, 0.0
  %v4680 = vmax.f32 %v4392, 0.0
  %v4681 = vmax.f32 %v4393, 0.0
  %v4682 = vmax.f32 %v4394, 0.0
  %v4683 = vmax.f32 %v4395, 0.0
  %v4684 = vmax.f32 %v4396, 0.0
  %v4685 = vmax.f32 %v4397, 0.0
  %v4686 = vmax.f32 %v4398, 0.0
  %v4687 = vmax.f32 %v4399, 0.0
  %v4688 = vmax.f32 %v4400, 0.0
  %v4689 = vmax.f32 %v4401, 0.0
  %v4690 = vmax.f32 %v4402, 0.0
  %v4691 = vmax.f32 %v4403, 0.0
  %v4692 = vmax.f32 %v4404, 0.0
  %v4693 = vmax.f32 %v4405, 0.0
  %v4694 = vmax.f32 %v4406, 0.0
  %v4695 = vmax.f32 %v4407, 0.0
  %v4696 = vmax.f32 %v4408, 0.0
  %v4697 = vmax.f32 %v4409, 0.0
  %v4698 = vmax.f32 %v4410, 0.0
  %v4699 = vmax.f32 %v4411, 0.0
  %v4700 = vmax.f32 %v4412, 0.0
  %v4701 = vmax.f32 %v4413, 0.0
  %v4702 = vmax.f32 %v4414, 0.0
  %v4703 = vmax.f32 %v4415, 0.0
  %v4704 = vmax.f32 %v4416, 0.0
  %v4705 = vmax.f32 %v4417, 0.0
  %v4706 = vmax.f32 %v4418, 0.0
  %v4707 = vmax.f32 %v4419, 0.0
  %v4708 = vmax.f32 %v4420, 0.0
  %v4709 = vmax.f32 %v4421, 0.0
  %v4710 = vmax.f32 %v4422, 0.0
  %v4711 = vmax.f32 %v4423, 0.0
  %v4712 = vmax.f32 %v4424, 0.0
  %v4713 = vmax.f32 %v4425, 0.0
  %v4714 = vmax.f32 %v4426, 0.0
  %v4715 = vmax.f32 %v4427, 0.0
  %v4716 = vmax.f32 %v4428, 0.0
  %v4717 = vmax.f32 %v4429, 0.0
  %v4718 = vmax.f32 %v4430, 0.0
  %v4719 = vmax.f32 %v4431, 0.0
  %v4720 = vmax.f32 %v4432, 0.0
  %v4721 = vmax.f32 %v4433, 0.0
  %v4722 = vmax.f32 %v4434, 0.0
  %v4723 = vmax.f32 %v4435, 0.0
  %v4724 = vmax.f32 %v4436, 0.0
  %v4725 = vmax.f32 %v4437, 0.0
  %v4726 = vmax.f32 %v4438, 0.0
  %v4727 = vmax.f32 %v4439, 0.0
  %v4728 = vmax.f32 %v4440, 0.0
  %v4729 = vmax.f32 %v4441, 0.0
  %v4730 = vmax.f32 %v4442, 0.0
  %v4731 = vmax.f32 %v4443, 0.0
  %v4732 = vmax.f32 %v4444, 0.0
  %v4733 = vmax.f32 %v4445, 0.0
  %v4734 = vmax.f32 %v4446, 0.0
  %v4735 = vmax.f32 %v4447, 0.0
  %v4736 = vmax.f32 %v4448, 0.0
  %v4737 = vmax.f32 %v4449, 0.0
  %v4738 = vmax.f32 %v4450, 0.0
  %v4739 = vmax.f32 %v4451, 0.0
  %v4740 = vmax.f32 %v4452, 0.0
  %v4741 = vmax.f32 %v4453, 0.0
  %v4742 = vmax.f32 %v4454, 0.0
  %v4743 = vmax.f32 %v4455, 0.0
  %v4744 = vmax.f32 %v4456, 0.0
  %v4745 = vmax.f32 %v4457, 0.0
  %v4746 = vmax.f32 %v4458, 0.0
  %v4747 = vmax.f32 %v4459, 0.0
  %v4748 = vmax.f32 %v4460, 0.0
  %v4749 = vmax.f32 %v4461, 0.0
  %v4750 = vmax.f32 %v4462, 0.0
  %v4751 = vmax.f32 %v4463, 0.0
  %v4752 = vmax.f32 %v4464, 0.0
  %v4753 = vmax.f32 %v4465, 0.0
  %v4754 = vmax.f32 %v4466, 0.0
  %v4755 = vmax.f32 %v4467, 0.0
  %v4756 = vmax.f32 %v4468, 0.0
  %v4757 = vmax.f32 %v4469, 0.0
  %v4758 = vmax.f32 %v4470, 0.0
  %v4759 = vmax.f32 %v4471, 0.0
  %v4760 = vmax.f32 %v4472, 0.0
  %v4761 = vmax.f32 %v4473, 0.0
  %v4762 = vmax.f32 %v4474, 0.0
  %v4763 = vmax.f32 %v4475, 0.0
  %v4764 = vmax.f32 %v4476, 0.0
  %v4765 = vmax.f32 %v4477, 0.0
  %v4766 = vmax.f32 %v4478, 0.0
  %v4767 = vmax.f32 %v4479, 0.0
  %v4768 = vmax.f32 %v4480, 0.0
  %v4769 = vmax.f32 %v4481, 0.0
  %v4770 = vmax.f32 %v4482, 0.0
  %v4771 = vmax.f32 %v4483, 0.0
  %v4772 = vmax.f32 %v4484, 0.0
  %v4773 = vmax.f32 %v4485, 0.0
  %v4774 = vmax.f32 %v4486, 0.0
  %v4775 = vmax.f32 %v4487, 0.0
  %v4776 = vmax.f32 %v4488, 0.0
  %v4777 = vmax.f32 %v4489, 0.0
  %v4778 = vmax.f32 %v4490, 0.0
  %v4779 = vmax.f32 %v4491, 0.0
  %v4780 = vmax.f32 %v4492, 0.0
  %v4781 = vmax.f32 %v4493, 0.0
  %v4782 = vmax.f32 %v4494, 0.0
  %v4783 = vmax.f32 %v4495, 0.0
  %v4784 = vmax.f32 %v4496, 0.0
  %v4785 = vmax.f32 %v4497, 0.0
  %v4786 = vmax.f32 %v4498, 0.0
  %v4787 = vmax.f32 %v4499, 0.0
  %v4788 = vmax.f32 %v4500, 0.0
  %v4789 = vmax.f32 %v4501, 0.0
  %v4790 = vmax.f32 %v4502, 0.0
  %v4791 = vmax.f32 %v4503, 0.0
  %v4792 = vmax.f32 %v4504, 0.0
  %v4793 = vmax.f32 %v4505, 0.0
  %v4794 = vmax.f32 %v4506, 0.0
  %v4795 = vmax.f32 %v4507, 0.0
  %v4796 = vmax.f32 %v4508, 0.0
  %v4797 = vmax.f32 %v4509, 0.0
  %v4798 = vmax.f32 %v4510, 0.0
  %v4799 = vmax.f32 %v4511, 0.0
  %v4800 = vmax.f32 %v4512, 0.0
  %v4801 = vmax.f32 %v4513, 0.0
  %v4802 = vmax.f32 %v4514, 0.0
  %v4803 = vmax.f32 %v4515, 0.0
  %v4804 = vmax.f32 %v4516, 0.0
  %v4805 = vmax.f32 %v4517, 0.0
  %v4806 = vmax.f32 %v4518, 0.0
  %v4807 = vmax.f32 %v4519, 0.0
  %v4808 = vmax.f32 %v4520, 0.0
  %v4809 = vmax.f32 %v4521, 0.0
  %v4810 = vmax.f32 %v4522, 0.0
  %v4811 = vmax.f32 %v4523, 0.0
  %v4812 = vmax.f32 %v4524, 0.0
  %v4813 = vmax.f32 %v4525, 0.0
  %v4814 = vmax.f32 %v4526, 0.0
  %v4815 = vmax.f32 %v4527, 0.0
  %v4816 = vmax.f32 %v4528, 0.0
  %v4817 = vmax.f32 %v4529, 0.0
  %v4818 = vmax.f32 %v4530, 0.0
  %v4819 = vmax.f32 %v4531, 0.0
  %v4820 = vmax.f32 %v4532, 0.0
  %v4821 = vmax.f32 %v4533, 0.0
  %v4822 = vmax.f32 %v4534, 0.0
  %v4823 = vmax.f32 %v4535, 0.0
  %v4824 = vmax.f32 %v4536, 0.0
  %v4825 = vmax.f32 %v4537, 0.0
  %v4826 = vmax.f32 %v4538, 0.0
  %v4827 = vmax.f32 %v4539, 0.0
  %v4828 = vmax.f32 %v4540, 0.0
  %v4829 = vmax.f32 %v4541, 0.0
  %v4830 = vmax.f32 %v4542, 0.0
  %v4831 = vmax.f32 %v4543, 0.0
  %v4832 = vmax.f32 %v4544, 0.0
  %v4833 = vmax.f32 %v4545, 0.0
  %v4834 = vmax.f32 %v4546, 0.0
  %v4835 = vmax.f32 %v4547, 0.0
  %v4836 = vmax.f32 %v4548, 0.0
  %v4837 = vmax.f32 %v4549, 0.0
  %v4838 = vmax.f32 %v4550, 0.0
  %v4839 = vmax.f32 %v4551, 0.0
  %v4840 = vmax.f32 %v4552, 0.0
  %v4841 = vmax.f32 %v4553, 0.0
  %v4842 = vmax.f32 %v4554, 0.0
  %v4843 = vmax.f32 %v4555, 0.0
  %v4844 = vmax.f32 %v4556, 0.0
  %v4845 = vmax.f32 %v4557, 0.0
  %v4846 = vmax.f32 %v4558, 0.0
  %v4847 = vmax.f32 %v4559, 0.0
  %v4848 = vmax.f32 %v4560, 0.0
  %v4849 = vmax.f32 %v4561, 0.0
  %v4850 = vmax.f32 %v4562, 0.0
  %v4851 = vmax.f32 %v4563, 0.0
  %v4852 = vmax.f32 %v4564, 0.0
  %v4853 = vmax.f32 %v4565, 0.0
  %v4854 = vmax.f32 %v4566, 0.0
  %v4855 = vmax.f32 %v4567, 0.0
  %v4856 = vmax.f32 %v4568, 0.0
  %v4857 = vmax.f32 %v4569, 0.0
  %v4858 = vmax.f32 %v4570, 0.0
  %v4859 = vmax.f32 %v4571, 0.0
  %v4860 = vmax.f32 %v4572, 0.0
  %v4861 = vmax.f32 %v4573, 0.0
  %v4862 = vmax.f32 %v4574, 0.0
  %v4863 = vmax.f32 %v4575, 0.0
  %v4864 = vmax.f32 %v4576, 0.0
  %v4865 = vmax.f32 %v4577, 0.0
  %v4866 = vmax.f32 %v4578, 0.0
  %v4867 = vmax.f32 %v4579, 0.0
  %v4868 = vmax.f32 %v4580, 0.0
  %v4869 = vmax.f32 %v4581, 0.0
  %v4870 = vmax.f32 %v4582, 0.0
  %v4871 = vmax.f32 %v4583, 0.0
  %v4872 = vmax.f32 %v4584, 0.0
  %v4873 = vmax.f32 %v4585, 0.0
  %v4874 = vmax.f32 %v4586, 0.0
  %v4875 = vmax.f32 %v4587, 0.0
  %v4876 = vmax.f32 %v4588, 0.0
  %v4877 = vmax.f32 %v4589, 0.0
  %v4878 = vmax.f32 %v4590, 0.0
  %v4879 = vmax.f32 %v4591, 0.0
  %v4880 = vmax.f32 %v4592, 0.0
  %v4881 = vmax.f32 %v4593, 0.0
  %v4882 = vmax.f32 %v4594, 0.0
  %v4883 = vmax.f32 %v4595, 0.0
  %v4884 = vmax.f32 %v4596, 0.0
  %v4885 = vmax.f32 %v4597, 0.0
  %v4886 = vmax.f32 %v4598, 0.0
  %v4887 = vmax.f32 %v4599, 0.0
  %v4888 = vmax.f32 %v4600, 0.0
  %v4889 = vmax.f32 %v4601, 0.0
  %v4890 = vmax.f32 %v4602, 0.0
  %v4891 = vmax.f32 %v4603, 0.0
  %v4892 = vmax.f32 %v4604, 0.0
  %v4893 = vmax.f32 %v4605, 0.0
  %v4894 = vmax.f32 %v4606, 0.0
  %v4895 = vmax.f32 %v4607, 0.0
  %v4896 = vmax.f32 %v4608, 0.0
  %v4897 = vmax.f32 %v4609, 0.0
  %v4898 = vmax.f32 %v4610, 0.0
  %v4899 = vmax.f32 %v4611, 0.0
  %v4900 = vmax.f32 %v4612, 0.0
  %v4901 = vmax.f32 %v4613, 0.0
  %v4902 = vmax.f32 %v4614, 0.0
  %v4903 = vmax.f32 %v4615, 0.0
  %v4904 = vmax.f32 %v4616, 0.0
  %v4905 = vmax.f32 %v4617, 0.0
  %v4906 = vmax.f32 %v4618, 0.0
  %v4907 = vmax.f32 %v4619, 0.0
  %v4908 = vmax.f32 %v4620, 0.0
  %v4909 = vmax.f32 %v4621, 0.0
  %v4910 = vmax.f32 %v4622, 0.0
  %v4911 = vmax.f32 %v4623, 0.0
  %v4912 = vmax.f32 %v4624, 0.0
  %v4913 = vmax.f32 %v4625, 0.0
  %v4914 = vpack.c.bf16 %v4628, %v4626
  %v4915 = vpack.c.bf16 %v4632, %v4630
  %v4916 = vpack.c.bf16 %v4636, %v4634
  %v4917 = vpack.c.bf16 %v4640, %v4638
  %v4918 = vpack.c.bf16 %v4644, %v4642
  %v4919 = vpack.c.bf16 %v4648, %v4646
  %v4920 = vpack.c.bf16 %v4652, %v4650
  %v4921 = vpack.c.bf16 %v4656, %v4654
  %v4922 = vpack.c.bf16 %v4660, %v4658
  %v4923 = vpack.c.bf16 %v4664, %v4662
  %v4924 = vpack.c.bf16 %v4668, %v4666
  %v4925 = vpack.c.bf16 %v4672, %v4670
  %v4926 = vpack.c.bf16 %v4676, %v4674
  %v4927 = vpack.c.bf16 %v4680, %v4678
  %v4928 = vpack.c.bf16 %v4684, %v4682
  %v4929 = vpack.c.bf16 %v4688, %v4686
  %v4930 = vpack.c.bf16 %v4692, %v4690
  %v4931 = vpack.c.bf16 %v4696, %v4694
  %v4932 = vpack.c.bf16 %v4700, %v4698
  %v4933 = vpack.c.bf16 %v4704, %v4702
  %v4934 = vpack.c.bf16 %v4708, %v4706
  %v4935 = vpack.c.bf16 %v4712, %v4710
  %v4936 = vpack.c.bf16 %v4716, %v4714
  %v4937 = vpack.c.bf16 %v4720, %v4718
  %v4938 = vpack.c.bf16 %v4724, %v4722
  %v4939 = vpack.c.bf16 %v4728, %v4726
  %v4940 = vpack.c.bf16 %v4732, %v4730
  %v4941 = vpack.c.bf16 %v4736, %v4734
  %v4942 = vpack.c.bf16 %v4740, %v4738
  %v4943 = vpack.c.bf16 %v4744, %v4742
  %v4944 = vpack.c.bf16 %v4748, %v4746
  %v4945 = vpack.c.bf16 %v4752, %v4750
  %v4946 = vpack.c.bf16 %v4756, %v4754
  %v4947 = vpack.c.bf16 %v4760, %v4758
  %v4948 = vpack.c.bf16 %v4764, %v4762
  %v4949 = vpack.c.bf16 %v4768, %v4766
  %v4950 = vpack.c.bf16 %v4772, %v4770
  %v4951 = vpack.c.bf16 %v4776, %v4774
  %v4952 = vpack.c.bf16 %v4780, %v4778
  %v4953 = vpack.c.bf16 %v4784, %v4782
  %v4954 = vpack.c.bf16 %v4788, %v4786
  %v4955 = vpack.c.bf16 %v4792, %v4790
  %v4956 = vpack.c.bf16 %v4796, %v4794
  %v4957 = vpack.c.bf16 %v4800, %v4798
  %v4958 = vpack.c.bf16 %v4804, %v4802
  %v4959 = vpack.c.bf16 %v4808, %v4806
  %v4960 = vpack.c.bf16 %v4812, %v4810
  %v4961 = vpack.c.bf16 %v4816, %v4814
  %v4962 = vpack.c.bf16 %v4820, %v4818
  %v4963 = vpack.c.bf16 %v4824, %v4822
  %v4964 = vpack.c.bf16 %v4828, %v4826
  %v4965 = vpack.c.bf16 %v4832, %v4830
  %v4966 = vpack.c.bf16 %v4836, %v4834
  %v4967 = vpack.c.bf16 %v4840, %v4838
  %v4968 = vpack.c.bf16 %v4844, %v4842
  %v4969 = vpack.c.bf16 %v4848, %v4846
  %v4970 = vpack.c.bf16 %v4852, %v4850
  %v4971 = vpack.c.bf16 %v4856, %v4854
  %v4972 = vpack.c.bf16 %v4860, %v4858
  %v4973 = vpack.c.bf16 %v4864, %v4862
  %v4974 = vpack.c.bf16 %v4868, %v4866
  %v4975 = vpack.c.bf16 %v4872, %v4870
  %v4976 = vpack.c.bf16 %v4876, %v4874
  %v4977 = vpack.c.bf16 %v4880, %v4878
  %v4978 = vpack.c.bf16 %v4884, %v4882
  %v4979 = vpack.c.bf16 %v4888, %v4886
  %v4980 = vpack.c.bf16 %v4892, %v4890
  %v4981 = vpack.c.bf16 %v4896, %v4894
  %v4982 = vpack.c.bf16 %v4900, %v4898
  %v4983 = vpack.c.bf16 %v4904, %v4902
  %v4984 = vpack.c.bf16 %v4908, %v4906
  %v4985 = vpack.c.bf16 %v4912, %v4910
  %v4986 = vld [vmem:[%s9] sm:$0xf]
  %v4987 = vld [vmem:[%s9 + $0x4] sm:$0xf]
  %v4988 = vld [vmem:[%s9 + $0x8] sm:$0xf]
  %v4989 = vld [vmem:[%s9 + $0xc] sm:$0xf]
  %v4990 = vld [vmem:[%s9 + $0x10] sm:$0xf]
  %v4991 = vld [vmem:[%s9 + $0x14] sm:$0xf]
  %v4992 = vld [vmem:[%s9 + $0x18] sm:$0xf]
  %v4993 = vld [vmem:[%s9 + $0x1c] sm:$0xf]
  %v4994 = vld [vmem:[%s9 + $0x20] sm:$0xf]
  %v4995 = vld [vmem:[%s9 + $0x24] sm:$0xf]
  %v4996 = vld [vmem:[%s9 + $0x28] sm:$0xf]
  %v4997 = vld [vmem:[%s9 + $0x2c] sm:$0xf]
  %v4998 = vld [vmem:[%s9 + $0x30] sm:$0xf]
  %v4999 = vld [vmem:[%s9 + $0x34] sm:$0xf]
  %v5000 = vld [vmem:[%s9 + $0x38] sm:$0xf]
  %v5001 = vld [vmem:[%s9 + $0x3c] sm:$0xf]
  %v5002 = vld [vmem:[%s10] sm:$0x1]
  %v5004 = vperm.slane %v5002, 0
  %v5022 = vunpack.c.l.b16 %v4986
  %v5023 = vunpack.c.l.b16 %v4987
  %v5024 = vunpack.c.l.b16 %v4988
  %v5025 = vunpack.c.l.b16 %v4989
  %v5026 = vunpack.c.l.b16 %v4990
  %v5027 = vunpack.c.l.b16 %v4991
  %v5028 = vunpack.c.l.b16 %v4992
  %v5029 = vunpack.c.l.b16 %v4993
  %v5030 = vunpack.c.l.b16 %v4994
  %v5031 = vunpack.c.l.b16 %v4995
  %v5032 = vunpack.c.l.b16 %v4996
  %v5033 = vunpack.c.l.b16 %v4997
  %v5034 = vunpack.c.l.b16 %v4998
  %v5035 = vunpack.c.l.b16 %v4999
  %v5036 = vunpack.c.l.b16 %v5000
  %v5037 = vunpack.c.l.b16 %v5001
  %v5038 = vpack.c.b16 %v5023, %v5022
  %v5039 = vpack.c.b16 %v5025, %v5024
  %v5040 = vpack.c.b16 %v5027, %v5026
  %v5041 = vpack.c.b16 %v5029, %v5028
  %v5042 = vpack.c.b16 %v5031, %v5030
  %v5043 = vpack.c.b16 %v5033, %v5032
  %v5044 = vpack.c.b16 %v5035, %v5034
  %v5045 = vpack.c.b16 %v5037, %v5036
  %5054 = vmatpush.bf16.msra.mxu0 %v5045
  %5055 = vmatpush.bf16.msra.mxu0 %v5044
  %5056 = vmatpush.bf16.msra.mxu0 %v5043
  %5057 = vmatpush.bf16.msra.mxu0 %v5042
  %5058 = vmatpush.bf16.msra.mxu0 %v5041
  %5059 = vmatpush.bf16.msra.mxu0 %v5040
  %5060 = vmatpush.bf16.msra.mxu0 %v5039
  %5061 = vmatpush.bf16.msra.mxu0 %v5038
  %5062 = vmatmul.bf16.gmra.mxu0 %v4914
  %v5063 = vpop.f32.mrf.mxu0
  %v5064 = vadd.f32 %v5004, %v5063
  %v5065 = vpop.f32.mrf.mxu0
  %v5066 = vadd.f32 %v5004, %v5065
  %5067 = vmatmul.bf16.gmra.mxu0 %v4915
  %v5068 = vpop.f32.mrf.mxu0
  %v5069 = vadd.f32 %v5004, %v5068
  %v5070 = vpop.f32.mrf.mxu0
  %v5071 = vadd.f32 %v5004, %v5070
  %5072 = vmatmul.bf16.gmra.mxu0 %v4916
  %v5073 = vpop.f32.mrf.mxu0
  %v5074 = vadd.f32 %v5004, %v5073
  %v5075 = vpop.f32.mrf.mxu0
  %v5076 = vadd.f32 %v5004, %v5075
  %5077 = vmatmul.bf16.gmra.mxu0 %v4917
  %v5078 = vpop.f32.mrf.mxu0
  %v5079 = vadd.f32 %v5004, %v5078
  %v5080 = vpop.f32.mrf.mxu0
  %v5081 = vadd.f32 %v5004, %v5080
  %5082 = vmatmul.bf16.gmra.mxu0 %v4918
  %v5083 = vpop.f32.mrf.mxu0
  %v5084 = vadd.f32 %v5004, %v5083
  %v5085 = vpop.f32.mrf.mxu0
  %v5086 = vadd.f32 %v5004, %v5085
  %5087 = vmatmul.bf16.gmra.mxu0 %v4919
  %v5088 = vpop.f32.mrf.mxu0
  %v5089 = vadd.f32 %v5004, %v5088
  %v5090 = vpop.f32.mrf.mxu0
  %v5091 = vadd.f32 %v5004, %v5090
  %5092 = vmatmul.bf16.gmra.mxu0 %v4920
  %v5093 = vpop.f32.mrf.mxu0
  %v5094 = vadd.f32 %v5004, %v5093
  %v5095 = vpop.f32.mrf.mxu0
  %v5096 = vadd.f32 %v5004, %v5095
  %5097 = vmatmul.bf16.gmra.mxu0 %v4921
  %v5098 = vpop.f32.mrf.mxu0
  %v5099 = vadd.f32 %v5004, %v5098
  %v5100 = vpop.f32.mrf.mxu0
  %v5101 = vadd.f32 %v5004, %v5100
  %5102 = vmatmul.bf16.gmra.mxu0 %v4922
  %v5103 = vpop.f32.mrf.mxu0
  %v5104 = vadd.f32 %v5004, %v5103
  %v5105 = vpop.f32.mrf.mxu0
  %v5106 = vadd.f32 %v5004, %v5105
  %5107 = vmatmul.bf16.gmra.mxu0 %v4923
  %v5108 = vpop.f32.mrf.mxu0
  %v5109 = vadd.f32 %v5004, %v5108
  %v5110 = vpop.f32.mrf.mxu0
  %v5111 = vadd.f32 %v5004, %v5110
  %5112 = vmatmul.bf16.gmra.mxu0 %v4924
  %v5113 = vpop.f32.mrf.mxu0
  %v5114 = vadd.f32 %v5004, %v5113
  %v5115 = vpop.f32.mrf.mxu0
  %v5116 = vadd.f32 %v5004, %v5115
  %5117 = vmatmul.bf16.gmra.mxu0 %v4925
  %v5118 = vpop.f32.mrf.mxu0
  %v5119 = vadd.f32 %v5004, %v5118
  %v5120 = vpop.f32.mrf.mxu0
  %v5121 = vadd.f32 %v5004, %v5120
  %5122 = vmatmul.bf16.gmra.mxu0 %v4926
  %v5123 = vpop.f32.mrf.mxu0
  %v5124 = vadd.f32 %v5004, %v5123
  %v5125 = vpop.f32.mrf.mxu0
  %v5126 = vadd.f32 %v5004, %v5125
  %5127 = vmatmul.bf16.gmra.mxu0 %v4927
  %v5128 = vpop.f32.mrf.mxu0
  %v5129 = vadd.f32 %v5004, %v5128
  %v5130 = vpop.f32.mrf.mxu0
  %v5131 = vadd.f32 %v5004, %v5130
  %5132 = vmatmul.bf16.gmra.mxu0 %v4928
  %v5133 = vpop.f32.mrf.mxu0
  %v5134 = vadd.f32 %v5004, %v5133
  %v5135 = vpop.f32.mrf.mxu0
  %v5136 = vadd.f32 %v5004, %v5135
  %5137 = vmatmul.bf16.gmra.mxu0 %v4929
  %v5138 = vpop.f32.mrf.mxu0
  %v5139 = vadd.f32 %v5004, %v5138
  %v5140 = vpop.f32.mrf.mxu0
  %v5141 = vadd.f32 %v5004, %v5140
  %5142 = vmatmul.bf16.gmra.mxu0 %v4930
  %v5143 = vpop.f32.mrf.mxu0
  %v5144 = vadd.f32 %v5004, %v5143
  %v5145 = vpop.f32.mrf.mxu0
  %v5146 = vadd.f32 %v5004, %v5145
  %5147 = vmatmul.bf16.gmra.mxu0 %v4931
  %v5148 = vpop.f32.mrf.mxu0
  %v5149 = vadd.f32 %v5004, %v5148
  %v5150 = vpop.f32.mrf.mxu0
  %v5151 = vadd.f32 %v5004, %v5150
  %5152 = vmatmul.bf16.gmra.mxu0 %v4932
  %v5153 = vpop.f32.mrf.mxu0
  %v5154 = vadd.f32 %v5004, %v5153
  %v5155 = vpop.f32.mrf.mxu0
  %v5156 = vadd.f32 %v5004, %v5155
  %5157 = vmatmul.bf16.gmra.mxu0 %v4933
  %v5158 = vpop.f32.mrf.mxu0
  %v5159 = vadd.f32 %v5004, %v5158
  %v5160 = vpop.f32.mrf.mxu0
  %v5161 = vadd.f32 %v5004, %v5160
  %5162 = vmatmul.bf16.gmra.mxu0 %v4934
  %v5163 = vpop.f32.mrf.mxu0
  %v5164 = vadd.f32 %v5004, %v5163
  %v5165 = vpop.f32.mrf.mxu0
  %v5166 = vadd.f32 %v5004, %v5165
  %5167 = vmatmul.bf16.gmra.mxu0 %v4935
  %v5168 = vpop.f32.mrf.mxu0
  %v5169 = vadd.f32 %v5004, %v5168
  %v5170 = vpop.f32.mrf.mxu0
  %v5171 = vadd.f32 %v5004, %v5170
  %5172 = vmatmul.bf16.gmra.mxu0 %v4936
  %v5173 = vpop.f32.mrf.mxu0
  %v5174 = vadd.f32 %v5004, %v5173
  %v5175 = vpop.f32.mrf.mxu0
  %v5176 = vadd.f32 %v5004, %v5175
  %5177 = vmatmul.bf16.gmra.mxu0 %v4937
  %v5178 = vpop.f32.mrf.mxu0
  %v5179 = vadd.f32 %v5004, %v5178
  %v5180 = vpop.f32.mrf.mxu0
  %v5181 = vadd.f32 %v5004, %v5180
  %5182 = vmatmul.bf16.gmra.mxu0 %v4938
  %v5183 = vpop.f32.mrf.mxu0
  %v5184 = vadd.f32 %v5004, %v5183
  %v5185 = vpop.f32.mrf.mxu0
  %v5186 = vadd.f32 %v5004, %v5185
  %5187 = vmatmul.bf16.gmra.mxu0 %v4939
  %v5188 = vpop.f32.mrf.mxu0
  %v5189 = vadd.f32 %v5004, %v5188
  %v5190 = vpop.f32.mrf.mxu0
  %v5191 = vadd.f32 %v5004, %v5190
  %5192 = vmatmul.bf16.gmra.mxu0 %v4940
  %v5193 = vpop.f32.mrf.mxu0
  %v5194 = vadd.f32 %v5004, %v5193
  %v5195 = vpop.f32.mrf.mxu0
  %v5196 = vadd.f32 %v5004, %v5195
  %5197 = vmatmul.bf16.gmra.mxu0 %v4941
  %v5198 = vpop.f32.mrf.mxu0
  %v5199 = vadd.f32 %v5004, %v5198
  %v5200 = vpop.f32.mrf.mxu0
  %v5201 = vadd.f32 %v5004, %v5200
  %5202 = vmatmul.bf16.gmra.mxu0 %v4942
  %v5203 = vpop.f32.mrf.mxu0
  %v5204 = vadd.f32 %v5004, %v5203
  %v5205 = vpop.f32.mrf.mxu0
  %v5206 = vadd.f32 %v5004, %v5205
  %5207 = vmatmul.bf16.gmra.mxu0 %v4943
  %v5208 = vpop.f32.mrf.mxu0
  %v5209 = vadd.f32 %v5004, %v5208
  %v5210 = vpop.f32.mrf.mxu0
  %v5211 = vadd.f32 %v5004, %v5210
  %5212 = vmatmul.bf16.gmra.mxu0 %v4944
  %v5213 = vpop.f32.mrf.mxu0
  %v5214 = vadd.f32 %v5004, %v5213
  %v5215 = vpop.f32.mrf.mxu0
  %v5216 = vadd.f32 %v5004, %v5215
  %5217 = vmatmul.bf16.gmra.mxu0 %v4945
  %v5218 = vpop.f32.mrf.mxu0
  %v5219 = vadd.f32 %v5004, %v5218
  %v5220 = vpop.f32.mrf.mxu0
  %v5221 = vadd.f32 %v5004, %v5220
  %5222 = vmatmul.bf16.gmra.mxu0 %v4946
  %v5223 = vpop.f32.mrf.mxu0
  %v5224 = vadd.f32 %v5004, %v5223
  %v5225 = vpop.f32.mrf.mxu0
  %v5226 = vadd.f32 %v5004, %v5225
  %5227 = vmatmul.bf16.gmra.mxu0 %v4947
  %v5228 = vpop.f32.mrf.mxu0
  %v5229 = vadd.f32 %v5004, %v5228
  %v5230 = vpop.f32.mrf.mxu0
  %v5231 = vadd.f32 %v5004, %v5230
  %5232 = vmatmul.bf16.gmra.mxu0 %v4948
  %v5233 = vpop.f32.mrf.mxu0
  %v5234 = vadd.f32 %v5004, %v5233
  %v5235 = vpop.f32.mrf.mxu0
  %v5236 = vadd.f32 %v5004, %v5235
  %5237 = vmatmul.bf16.gmra.mxu0 %v4949
  %v5238 = vpop.f32.mrf.mxu0
  %v5239 = vadd.f32 %v5004, %v5238
  %v5240 = vpop.f32.mrf.mxu0
  %v5241 = vadd.f32 %v5004, %v5240
  %5242 = vmatmul.bf16.gmra.mxu0 %v4950
  %v5243 = vpop.f32.mrf.mxu0
  %v5244 = vadd.f32 %v5004, %v5243
  %v5245 = vpop.f32.mrf.mxu0
  %v5246 = vadd.f32 %v5004, %v5245
  %5247 = vmatmul.bf16.gmra.mxu0 %v4951
  %v5248 = vpop.f32.mrf.mxu0
  %v5249 = vadd.f32 %v5004, %v5248
  %v5250 = vpop.f32.mrf.mxu0
  %v5251 = vadd.f32 %v5004, %v5250
  %5252 = vmatmul.bf16.gmra.mxu0 %v4952
  %v5253 = vpop.f32.mrf.mxu0
  %v5254 = vadd.f32 %v5004, %v5253
  %v5255 = vpop.f32.mrf.mxu0
  %v5256 = vadd.f32 %v5004, %v5255
  %5257 = vmatmul.bf16.gmra.mxu0 %v4953
  %v5258 = vpop.f32.mrf.mxu0
  %v5259 = vadd.f32 %v5004, %v5258
  %v5260 = vpop.f32.mrf.mxu0
  %v5261 = vadd.f32 %v5004, %v5260
  %5262 = vmatmul.bf16.gmra.mxu0 %v4954
  %v5263 = vpop.f32.mrf.mxu0
  %v5264 = vadd.f32 %v5004, %v5263
  %v5265 = vpop.f32.mrf.mxu0
  %v5266 = vadd.f32 %v5004, %v5265
  %5267 = vmatmul.bf16.gmra.mxu0 %v4955
  %v5268 = vpop.f32.mrf.mxu0
  %v5269 = vadd.f32 %v5004, %v5268
  %v5270 = vpop.f32.mrf.mxu0
  %v5271 = vadd.f32 %v5004, %v5270
  %5272 = vmatmul.bf16.gmra.mxu0 %v4956
  %v5273 = vpop.f32.mrf.mxu0
  %v5274 = vadd.f32 %v5004, %v5273
  %v5275 = vpop.f32.mrf.mxu0
  %v5276 = vadd.f32 %v5004, %v5275
  %5277 = vmatmul.bf16.gmra.mxu0 %v4957
  %v5278 = vpop.f32.mrf.mxu0
  %v5279 = vadd.f32 %v5004, %v5278
  %v5280 = vpop.f32.mrf.mxu0
  %v5281 = vadd.f32 %v5004, %v5280
  %5282 = vmatmul.bf16.gmra.mxu0 %v4958
  %v5283 = vpop.f32.mrf.mxu0
  %v5284 = vadd.f32 %v5004, %v5283
  %v5285 = vpop.f32.mrf.mxu0
  %v5286 = vadd.f32 %v5004, %v5285
  %5287 = vmatmul.bf16.gmra.mxu0 %v4959
  %v5288 = vpop.f32.mrf.mxu0
  %v5289 = vadd.f32 %v5004, %v5288
  %v5290 = vpop.f32.mrf.mxu0
  %v5291 = vadd.f32 %v5004, %v5290
  %5292 = vmatmul.bf16.gmra.mxu0 %v4960
  %v5293 = vpop.f32.mrf.mxu0
  %v5294 = vadd.f32 %v5004, %v5293
  %v5295 = vpop.f32.mrf.mxu0
  %v5296 = vadd.f32 %v5004, %v5295
  %5297 = vmatmul.bf16.gmra.mxu0 %v4961
  %v5298 = vpop.f32.mrf.mxu0
  %v5299 = vadd.f32 %v5004, %v5298
  %v5300 = vpop.f32.mrf.mxu0
  %v5301 = vadd.f32 %v5004, %v5300
  %5302 = vmatmul.bf16.gmra.mxu0 %v4962
  %v5303 = vpop.f32.mrf.mxu0
  %v5304 = vadd.f32 %v5004, %v5303
  %v5305 = vpop.f32.mrf.mxu0
  %v5306 = vadd.f32 %v5004, %v5305
  %5307 = vmatmul.bf16.gmra.mxu0 %v4963
  %v5308 = vpop.f32.mrf.mxu0
  %v5309 = vadd.f32 %v5004, %v5308
  %v5310 = vpop.f32.mrf.mxu0
  %v5311 = vadd.f32 %v5004, %v5310
  %5312 = vmatmul.bf16.gmra.mxu0 %v4964
  %v5313 = vpop.f32.mrf.mxu0
  %v5314 = vadd.f32 %v5004, %v5313
  %v5315 = vpop.f32.mrf.mxu0
  %v5316 = vadd.f32 %v5004, %v5315
  %5317 = vmatmul.bf16.gmra.mxu0 %v4965
  %v5318 = vpop.f32.mrf.mxu0
  %v5319 = vadd.f32 %v5004, %v5318
  %v5320 = vpop.f32.mrf.mxu0
  %v5321 = vadd.f32 %v5004, %v5320
  %5322 = vmatmul.bf16.gmra.mxu0 %v4966
  %v5323 = vpop.f32.mrf.mxu0
  %v5324 = vadd.f32 %v5004, %v5323
  %v5325 = vpop.f32.mrf.mxu0
  %v5326 = vadd.f32 %v5004, %v5325
  %5327 = vmatmul.bf16.gmra.mxu0 %v4967
  %v5328 = vpop.f32.mrf.mxu0
  %v5329 = vadd.f32 %v5004, %v5328
  %v5330 = vpop.f32.mrf.mxu0
  %v5331 = vadd.f32 %v5004, %v5330
  %5332 = vmatmul.bf16.gmra.mxu0 %v4968
  %v5333 = vpop.f32.mrf.mxu0
  %v5334 = vadd.f32 %v5004, %v5333
  %v5335 = vpop.f32.mrf.mxu0
  %v5336 = vadd.f32 %v5004, %v5335
  %5337 = vmatmul.bf16.gmra.mxu0 %v4969
  %v5338 = vpop.f32.mrf.mxu0
  %v5339 = vadd.f32 %v5004, %v5338
  %v5340 = vpop.f32.mrf.mxu0
  %v5341 = vadd.f32 %v5004, %v5340
  %5342 = vmatmul.bf16.gmra.mxu0 %v4970
  %v5343 = vpop.f32.mrf.mxu0
  %v5344 = vadd.f32 %v5004, %v5343
  %v5345 = vpop.f32.mrf.mxu0
  %v5346 = vadd.f32 %v5004, %v5345
  %5347 = vmatmul.bf16.gmra.mxu0 %v4971
  %v5348 = vpop.f32.mrf.mxu0
  %v5349 = vadd.f32 %v5004, %v5348
  %v5350 = vpop.f32.mrf.mxu0
  %v5351 = vadd.f32 %v5004, %v5350
  %5352 = vmatmul.bf16.gmra.mxu0 %v4972
  %v5353 = vpop.f32.mrf.mxu0
  %v5354 = vadd.f32 %v5004, %v5353
  %v5355 = vpop.f32.mrf.mxu0
  %v5356 = vadd.f32 %v5004, %v5355
  %5357 = vmatmul.bf16.gmra.mxu0 %v4973
  %v5358 = vpop.f32.mrf.mxu0
  %v5359 = vadd.f32 %v5004, %v5358
  %v5360 = vpop.f32.mrf.mxu0
  %v5361 = vadd.f32 %v5004, %v5360
  %5362 = vmatmul.bf16.gmra.mxu0 %v4974
  %v5363 = vpop.f32.mrf.mxu0
  %v5364 = vadd.f32 %v5004, %v5363
  %v5365 = vpop.f32.mrf.mxu0
  %v5366 = vadd.f32 %v5004, %v5365
  %5367 = vmatmul.bf16.gmra.mxu0 %v4975
  %v5368 = vpop.f32.mrf.mxu0
  %v5369 = vadd.f32 %v5004, %v5368
  %v5370 = vpop.f32.mrf.mxu0
  %v5371 = vadd.f32 %v5004, %v5370
  %5372 = vmatmul.bf16.gmra.mxu0 %v4976
  %v5373 = vpop.f32.mrf.mxu0
  %v5374 = vadd.f32 %v5004, %v5373
  %v5375 = vpop.f32.mrf.mxu0
  %v5376 = vadd.f32 %v5004, %v5375
  %5377 = vmatmul.bf16.gmra.mxu0 %v4977
  %v5378 = vpop.f32.mrf.mxu0
  %v5379 = vadd.f32 %v5004, %v5378
  %v5380 = vpop.f32.mrf.mxu0
  %v5381 = vadd.f32 %v5004, %v5380
  %5382 = vmatmul.bf16.gmra.mxu0 %v4978
  %v5383 = vpop.f32.mrf.mxu0
  %v5384 = vadd.f32 %v5004, %v5383
  %v5385 = vpop.f32.mrf.mxu0
  %v5386 = vadd.f32 %v5004, %v5385
  %5387 = vmatmul.bf16.gmra.mxu0 %v4979
  %v5388 = vpop.f32.mrf.mxu0
  %v5389 = vadd.f32 %v5004, %v5388
  %v5390 = vpop.f32.mrf.mxu0
  %v5391 = vadd.f32 %v5004, %v5390
  %5392 = vmatmul.bf16.gmra.mxu0 %v4980
  %v5393 = vpop.f32.mrf.mxu0
  %v5394 = vadd.f32 %v5004, %v5393
  %v5395 = vpop.f32.mrf.mxu0
  %v5396 = vadd.f32 %v5004, %v5395
  %5397 = vmatmul.bf16.gmra.mxu0 %v4981
  %v5398 = vpop.f32.mrf.mxu0
  %v5399 = vadd.f32 %v5004, %v5398
  %v5400 = vpop.f32.mrf.mxu0
  %v5401 = vadd.f32 %v5004, %v5400
  %5402 = vmatmul.bf16.gmra.mxu0 %v4982
  %v5403 = vpop.f32.mrf.mxu0
  %v5404 = vadd.f32 %v5004, %v5403
  %v5405 = vpop.f32.mrf.mxu0
  %v5406 = vadd.f32 %v5004, %v5405
  %5407 = vmatmul.bf16.gmra.mxu0 %v4983
  %v5408 = vpop.f32.mrf.mxu0
  %v5409 = vadd.f32 %v5004, %v5408
  %v5410 = vpop.f32.mrf.mxu0
  %v5411 = vadd.f32 %v5004, %v5410
  %5412 = vmatmul.bf16.gmra.mxu0 %v4984
  %v5413 = vpop.f32.mrf.mxu0
  %v5414 = vadd.f32 %v5004, %v5413
  %v5415 = vpop.f32.mrf.mxu0
  %v5416 = vadd.f32 %v5004, %v5415
  %5417 = vmatmul.bf16.gmra.mxu0 %v4985
  %v5418 = vpop.f32.mrf.mxu0
  %v5419 = vadd.f32 %v5004, %v5418
  %v5420 = vpop.f32.mrf.mxu0
  %v5421 = vadd.f32 %v5004, %v5420
  %5422 = vdwg.mxu0
  %v5423 = vmax.f32 %v5064, 0.0
  %v5424 = vmax.f32 %v5066, 0.0
  %v5425 = vmax.f32 %v5069, 0.0
  %v5426 = vmax.f32 %v5071, 0.0
  %v5427 = vmax.f32 %v5074, 0.0
  %v5428 = vmax.f32 %v5076, 0.0
  %v5429 = vmax.f32 %v5079, 0.0
  %v5430 = vmax.f32 %v5081, 0.0
  %v5431 = vmax.f32 %v5084, 0.0
  %v5432 = vmax.f32 %v5086, 0.0
  %v5433 = vmax.f32 %v5089, 0.0
  %v5434 = vmax.f32 %v5091, 0.0
  %v5435 = vmax.f32 %v5094, 0.0
  %v5436 = vmax.f32 %v5096, 0.0
  %v5437 = vmax.f32 %v5099, 0.0
  %v5438 = vmax.f32 %v5101, 0.0
  %v5439 = vmax.f32 %v5104, 0.0
  %v5440 = vmax.f32 %v5106, 0.0
  %v5441 = vmax.f32 %v5109, 0.0
  %v5442 = vmax.f32 %v5111, 0.0
  %v5443 = vmax.f32 %v5114, 0.0
  %v5444 = vmax.f32 %v5116, 0.0
  %v5445 = vmax.f32 %v5119, 0.0
  %v5446 = vmax.f32 %v5121, 0.0
  %v5447 = vmax.f32 %v5124, 0.0
  %v5448 = vmax.f32 %v5126, 0.0
  %v5449 = vmax.f32 %v5129, 0.0
  %v5450 = vmax.f32 %v5131, 0.0
  %v5451 = vmax.f32 %v5134, 0.0
  %v5452 = vmax.f32 %v5136, 0.0
  %v5453 = vmax.f32 %v5139, 0.0
  %v5454 = vmax.f32 %v5141, 0.0
  %v5455 = vmax.f32 %v5144, 0.0
  %v5456 = vmax.f32 %v5146, 0.0
  %v5457 = vmax.f32 %v5149, 0.0
  %v5458 = vmax.f32 %v5151, 0.0
  %v5459 = vmax.f32 %v5154, 0.0
  %v5460 = vmax.f32 %v5156, 0.0
  %v5461 = vmax.f32 %v5159, 0.0
  %v5462 = vmax.f32 %v5161, 0.0
  %v5463 = vmax.f32 %v5164, 0.0
  %v5464 = vmax.f32 %v5166, 0.0
  %v5465 = vmax.f32 %v5169, 0.0
  %v5466 = vmax.f32 %v5171, 0.0
  %v5467 = vmax.f32 %v5174, 0.0
  %v5468 = vmax.f32 %v5176, 0.0
  %v5469 = vmax.f32 %v5179, 0.0
  %v5470 = vmax.f32 %v5181, 0.0
  %v5471 = vmax.f32 %v5184, 0.0
  %v5472 = vmax.f32 %v5186, 0.0
  %v5473 = vmax.f32 %v5189, 0.0
  %v5474 = vmax.f32 %v5191, 0.0
  %v5475 = vmax.f32 %v5194, 0.0
  %v5476 = vmax.f32 %v5196, 0.0
  %v5477 = vmax.f32 %v5199, 0.0
  %v5478 = vmax.f32 %v5201, 0.0
  %v5479 = vmax.f32 %v5204, 0.0
  %v5480 = vmax.f32 %v5206, 0.0
  %v5481 = vmax.f32 %v5209, 0.0
  %v5482 = vmax.f32 %v5211, 0.0
  %v5483 = vmax.f32 %v5214, 0.0
  %v5484 = vmax.f32 %v5216, 0.0
  %v5485 = vmax.f32 %v5219, 0.0
  %v5486 = vmax.f32 %v5221, 0.0
  %v5487 = vmax.f32 %v5224, 0.0
  %v5488 = vmax.f32 %v5226, 0.0
  %v5489 = vmax.f32 %v5229, 0.0
  %v5490 = vmax.f32 %v5231, 0.0
  %v5491 = vmax.f32 %v5234, 0.0
  %v5492 = vmax.f32 %v5236, 0.0
  %v5493 = vmax.f32 %v5239, 0.0
  %v5494 = vmax.f32 %v5241, 0.0
  %v5495 = vmax.f32 %v5244, 0.0
  %v5496 = vmax.f32 %v5246, 0.0
  %v5497 = vmax.f32 %v5249, 0.0
  %v5498 = vmax.f32 %v5251, 0.0
  %v5499 = vmax.f32 %v5254, 0.0
  %v5500 = vmax.f32 %v5256, 0.0
  %v5501 = vmax.f32 %v5259, 0.0
  %v5502 = vmax.f32 %v5261, 0.0
  %v5503 = vmax.f32 %v5264, 0.0
  %v5504 = vmax.f32 %v5266, 0.0
  %v5505 = vmax.f32 %v5269, 0.0
  %v5506 = vmax.f32 %v5271, 0.0
  %v5507 = vmax.f32 %v5274, 0.0
  %v5508 = vmax.f32 %v5276, 0.0
  %v5509 = vmax.f32 %v5279, 0.0
  %v5510 = vmax.f32 %v5281, 0.0
  %v5511 = vmax.f32 %v5284, 0.0
  %v5512 = vmax.f32 %v5286, 0.0
  %v5513 = vmax.f32 %v5289, 0.0
  %v5514 = vmax.f32 %v5291, 0.0
  %v5515 = vmax.f32 %v5294, 0.0
  %v5516 = vmax.f32 %v5296, 0.0
  %v5517 = vmax.f32 %v5299, 0.0
  %v5518 = vmax.f32 %v5301, 0.0
  %v5519 = vmax.f32 %v5304, 0.0
  %v5520 = vmax.f32 %v5306, 0.0
  %v5521 = vmax.f32 %v5309, 0.0
  %v5522 = vmax.f32 %v5311, 0.0
  %v5523 = vmax.f32 %v5314, 0.0
  %v5524 = vmax.f32 %v5316, 0.0
  %v5525 = vmax.f32 %v5319, 0.0
  %v5526 = vmax.f32 %v5321, 0.0
  %v5527 = vmax.f32 %v5324, 0.0
  %v5528 = vmax.f32 %v5326, 0.0
  %v5529 = vmax.f32 %v5329, 0.0
  %v5530 = vmax.f32 %v5331, 0.0
  %v5531 = vmax.f32 %v5334, 0.0
  %v5532 = vmax.f32 %v5336, 0.0
  %v5533 = vmax.f32 %v5339, 0.0
  %v5534 = vmax.f32 %v5341, 0.0
  %v5535 = vmax.f32 %v5344, 0.0
  %v5536 = vmax.f32 %v5346, 0.0
  %v5537 = vmax.f32 %v5349, 0.0
  %v5538 = vmax.f32 %v5351, 0.0
  %v5539 = vmax.f32 %v5354, 0.0
  %v5540 = vmax.f32 %v5356, 0.0
  %v5541 = vmax.f32 %v5359, 0.0
  %v5542 = vmax.f32 %v5361, 0.0
  %v5543 = vmax.f32 %v5364, 0.0
  %v5544 = vmax.f32 %v5366, 0.0
  %v5545 = vmax.f32 %v5369, 0.0
  %v5546 = vmax.f32 %v5371, 0.0
  %v5547 = vmax.f32 %v5374, 0.0
  %v5548 = vmax.f32 %v5376, 0.0
  %v5549 = vmax.f32 %v5379, 0.0
  %v5550 = vmax.f32 %v5381, 0.0
  %v5551 = vmax.f32 %v5384, 0.0
  %v5552 = vmax.f32 %v5386, 0.0
  %v5553 = vmax.f32 %v5389, 0.0
  %v5554 = vmax.f32 %v5391, 0.0
  %v5555 = vmax.f32 %v5394, 0.0
  %v5556 = vmax.f32 %v5396, 0.0
  %v5557 = vmax.f32 %v5399, 0.0
  %v5558 = vmax.f32 %v5401, 0.0
  %v5559 = vmax.f32 %v5404, 0.0
  %v5560 = vmax.f32 %v5406, 0.0
  %v5561 = vmax.f32 %v5409, 0.0
  %v5562 = vmax.f32 %v5411, 0.0
  %v5563 = vmax.f32 %v5414, 0.0
  %v5564 = vmax.f32 %v5416, 0.0
  %v5565 = vmax.f32 %v5419, 0.0
  %v5566 = vmax.f32 %v5421, 0.0
  %vm5567 = vcmask 523264
  %v5568 = vsel %vm5567, %v5423, -inf
  %v5569 = vsel %vm5567, %v5424, -inf
  %v5570 = vmax.f32 %v5568, %v5569
  %v5571 = vsel %vm5567, %v5425, -inf
  %v5572 = vmax.f32 %v5570, %v5571
  %v5573 = vsel %vm5567, %v5426, -inf
  %v5574 = vmax.f32 %v5572, %v5573
  %v5575 = vsel %vm5567, %v5427, -inf
  %v5576 = vmax.f32 %v5574, %v5575
  %v5577 = vsel %vm5567, %v5428, -inf
  %v5578 = vmax.f32 %v5576, %v5577
  %v5579 = vsel %vm5567, %v5429, -inf
  %v5580 = vmax.f32 %v5578, %v5579
  %v5581 = vsel %vm5567, %v5430, -inf
  %v5582 = vmax.f32 %v5580, %v5581
  %v5583 = vsel %vm5567, %v5431, -inf
  %v5584 = vmax.f32 %v5582, %v5583
  %v5585 = vsel %vm5567, %v5432, -inf
  %v5586 = vmax.f32 %v5584, %v5585
  %v5587 = vsel %vm5567, %v5433, -inf
  %v5588 = vmax.f32 %v5586, %v5587
  %v5589 = vsel %vm5567, %v5434, -inf
  %v5590 = vmax.f32 %v5588, %v5589
  %v5591 = vsel %vm5567, %v5435, -inf
  %v5592 = vmax.f32 %v5590, %v5591
  %v5593 = vsel %vm5567, %v5436, -inf
  %v5594 = vmax.f32 %v5592, %v5593
  %v5595 = vsel %vm5567, %v5437, -inf
  %v5596 = vmax.f32 %v5594, %v5595
  %v5597 = vsel %vm5567, %v5438, -inf
  %v5598 = vmax.f32 %v5596, %v5597
  %v5599 = vsel %vm5567, %v5439, -inf
  %v5600 = vmax.f32 %v5598, %v5599
  %v5601 = vsel %vm5567, %v5440, -inf
  %v5602 = vmax.f32 %v5600, %v5601
  %v5603 = vrot.slane %v5602, 4
  %v5604 = vmax.f32 %v5602, %v5603
  %v5605 = vrot.slane %v5604, 2
  %v5606 = vmax.f32 %v5604, %v5605
  %v5607 = vrot.slane %v5606, 1
  %v5608 = vmax.f32 %v5606, %v5607
  %v5609 = vsel %vm5567, %v5441, -inf
  %v5610 = vsel %vm5567, %v5442, -inf
  %v5611 = vmax.f32 %v5609, %v5610
  %v5612 = vsel %vm5567, %v5443, -inf
  %v5613 = vmax.f32 %v5611, %v5612
  %v5614 = vsel %vm5567, %v5444, -inf
  %v5615 = vmax.f32 %v5613, %v5614
  %v5616 = vsel %vm5567, %v5445, -inf
  %v5617 = vmax.f32 %v5615, %v5616
  %v5618 = vsel %vm5567, %v5446, -inf
  %v5619 = vmax.f32 %v5617, %v5618
  %v5620 = vsel %vm5567, %v5447, -inf
  %v5621 = vmax.f32 %v5619, %v5620
  %v5622 = vsel %vm5567, %v5448, -inf
  %v5623 = vmax.f32 %v5621, %v5622
  %v5624 = vsel %vm5567, %v5449, -inf
  %v5625 = vmax.f32 %v5623, %v5624
  %v5626 = vsel %vm5567, %v5450, -inf
  %v5627 = vmax.f32 %v5625, %v5626
  %v5628 = vsel %vm5567, %v5451, -inf
  %v5629 = vmax.f32 %v5627, %v5628
  %v5630 = vsel %vm5567, %v5452, -inf
  %v5631 = vmax.f32 %v5629, %v5630
  %v5632 = vsel %vm5567, %v5453, -inf
  %v5633 = vmax.f32 %v5631, %v5632
  %v5634 = vsel %vm5567, %v5454, -inf
  %v5635 = vmax.f32 %v5633, %v5634
  %v5636 = vsel %vm5567, %v5455, -inf
  %v5637 = vmax.f32 %v5635, %v5636
  %v5638 = vsel %vm5567, %v5456, -inf
  %v5639 = vmax.f32 %v5637, %v5638
  %v5640 = vsel %vm5567, %v5457, -inf
  %v5641 = vmax.f32 %v5639, %v5640
  %v5642 = vsel %vm5567, %v5458, -inf
  %v5643 = vmax.f32 %v5641, %v5642
  %v5644 = vrot.slane %v5643, 4
  %v5645 = vmax.f32 %v5643, %v5644
  %v5646 = vrot.slane %v5645, 2
  %v5647 = vmax.f32 %v5645, %v5646
  %v5648 = vrot.slane %v5647, 1
  %v5649 = vmax.f32 %v5647, %v5648
  %v5650 = vsel %vm5567, %v5459, -inf
  %v5651 = vsel %vm5567, %v5460, -inf
  %v5652 = vmax.f32 %v5650, %v5651
  %v5653 = vsel %vm5567, %v5461, -inf
  %v5654 = vmax.f32 %v5652, %v5653
  %v5655 = vsel %vm5567, %v5462, -inf
  %v5656 = vmax.f32 %v5654, %v5655
  %v5657 = vsel %vm5567, %v5463, -inf
  %v5658 = vmax.f32 %v5656, %v5657
  %v5659 = vsel %vm5567, %v5464, -inf
  %v5660 = vmax.f32 %v5658, %v5659
  %v5661 = vsel %vm5567, %v5465, -inf
  %v5662 = vmax.f32 %v5660, %v5661
  %v5663 = vsel %vm5567, %v5466, -inf
  %v5664 = vmax.f32 %v5662, %v5663
  %v5665 = vsel %vm5567, %v5467, -inf
  %v5666 = vmax.f32 %v5664, %v5665
  %v5667 = vsel %vm5567, %v5468, -inf
  %v5668 = vmax.f32 %v5666, %v5667
  %v5669 = vsel %vm5567, %v5469, -inf
  %v5670 = vmax.f32 %v5668, %v5669
  %v5671 = vsel %vm5567, %v5470, -inf
  %v5672 = vmax.f32 %v5670, %v5671
  %v5673 = vsel %vm5567, %v5471, -inf
  %v5674 = vmax.f32 %v5672, %v5673
  %v5675 = vsel %vm5567, %v5472, -inf
  %v5676 = vmax.f32 %v5674, %v5675
  %v5677 = vsel %vm5567, %v5473, -inf
  %v5678 = vmax.f32 %v5676, %v5677
  %v5679 = vsel %vm5567, %v5474, -inf
  %v5680 = vmax.f32 %v5678, %v5679
  %v5681 = vsel %vm5567, %v5475, -inf
  %v5682 = vmax.f32 %v5680, %v5681
  %v5683 = vsel %vm5567, %v5476, -inf
  %v5684 = vmax.f32 %v5682, %v5683
  %v5685 = vrot.slane %v5684, 4
  %v5686 = vmax.f32 %v5684, %v5685
  %v5687 = vrot.slane %v5686, 2
  %v5688 = vmax.f32 %v5686, %v5687
  %v5689 = vrot.slane %v5688, 1
  %v5690 = vmax.f32 %v5688, %v5689
  %v5691 = vsel %vm5567, %v5477, -inf
  %v5692 = vsel %vm5567, %v5478, -inf
  %v5693 = vmax.f32 %v5691, %v5692
  %v5694 = vsel %vm5567, %v5479, -inf
  %v5695 = vmax.f32 %v5693, %v5694
  %v5696 = vsel %vm5567, %v5480, -inf
  %v5697 = vmax.f32 %v5695, %v5696
  %v5698 = vsel %vm5567, %v5481, -inf
  %v5699 = vmax.f32 %v5697, %v5698
  %v5700 = vsel %vm5567, %v5482, -inf
  %v5701 = vmax.f32 %v5699, %v5700
  %v5702 = vsel %vm5567, %v5483, -inf
  %v5703 = vmax.f32 %v5701, %v5702
  %v5704 = vsel %vm5567, %v5484, -inf
  %v5705 = vmax.f32 %v5703, %v5704
  %v5706 = vsel %vm5567, %v5485, -inf
  %v5707 = vmax.f32 %v5705, %v5706
  %v5708 = vsel %vm5567, %v5486, -inf
  %v5709 = vmax.f32 %v5707, %v5708
  %v5710 = vsel %vm5567, %v5487, -inf
  %v5711 = vmax.f32 %v5709, %v5710
  %v5712 = vsel %vm5567, %v5488, -inf
  %v5713 = vmax.f32 %v5711, %v5712
  %v5714 = vsel %vm5567, %v5489, -inf
  %v5715 = vmax.f32 %v5713, %v5714
  %v5716 = vsel %vm5567, %v5490, -inf
  %v5717 = vmax.f32 %v5715, %v5716
  %v5718 = vsel %vm5567, %v5491, -inf
  %v5719 = vmax.f32 %v5717, %v5718
  %v5720 = vsel %vm5567, %v5492, -inf
  %v5721 = vmax.f32 %v5719, %v5720
  %v5722 = vsel %vm5567, %v5493, -inf
  %v5723 = vmax.f32 %v5721, %v5722
  %v5724 = vsel %vm5567, %v5494, -inf
  %v5725 = vmax.f32 %v5723, %v5724
  %v5726 = vrot.slane %v5725, 4
  %v5727 = vmax.f32 %v5725, %v5726
  %v5728 = vrot.slane %v5727, 2
  %v5729 = vmax.f32 %v5727, %v5728
  %v5730 = vrot.slane %v5729, 1
  %v5731 = vmax.f32 %v5729, %v5730
  %v5732 = vsel %vm5567, %v5495, -inf
  %v5733 = vsel %vm5567, %v5496, -inf
  %v5734 = vmax.f32 %v5732, %v5733
  %v5735 = vsel %vm5567, %v5497, -inf
  %v5736 = vmax.f32 %v5734, %v5735
  %v5737 = vsel %vm5567, %v5498, -inf
  %v5738 = vmax.f32 %v5736, %v5737
  %v5739 = vsel %vm5567, %v5499, -inf
  %v5740 = vmax.f32 %v5738, %v5739
  %v5741 = vsel %vm5567, %v5500, -inf
  %v5742 = vmax.f32 %v5740, %v5741
  %v5743 = vsel %vm5567, %v5501, -inf
  %v5744 = vmax.f32 %v5742, %v5743
  %v5745 = vsel %vm5567, %v5502, -inf
  %v5746 = vmax.f32 %v5744, %v5745
  %v5747 = vsel %vm5567, %v5503, -inf
  %v5748 = vmax.f32 %v5746, %v5747
  %v5749 = vsel %vm5567, %v5504, -inf
  %v5750 = vmax.f32 %v5748, %v5749
  %v5751 = vsel %vm5567, %v5505, -inf
  %v5752 = vmax.f32 %v5750, %v5751
  %v5753 = vsel %vm5567, %v5506, -inf
  %v5754 = vmax.f32 %v5752, %v5753
  %v5755 = vsel %vm5567, %v5507, -inf
  %v5756 = vmax.f32 %v5754, %v5755
  %v5757 = vsel %vm5567, %v5508, -inf
  %v5758 = vmax.f32 %v5756, %v5757
  %v5759 = vsel %vm5567, %v5509, -inf
  %v5760 = vmax.f32 %v5758, %v5759
  %v5761 = vsel %vm5567, %v5510, -inf
  %v5762 = vmax.f32 %v5760, %v5761
  %v5763 = vsel %vm5567, %v5511, -inf
  %v5764 = vmax.f32 %v5762, %v5763
  %v5765 = vsel %vm5567, %v5512, -inf
  %v5766 = vmax.f32 %v5764, %v5765
  %v5767 = vrot.slane %v5766, 4
  %v5768 = vmax.f32 %v5766, %v5767
  %v5769 = vrot.slane %v5768, 2
  %v5770 = vmax.f32 %v5768, %v5769
  %v5771 = vrot.slane %v5770, 1
  %v5772 = vmax.f32 %v5770, %v5771
  %v5773 = vsel %vm5567, %v5513, -inf
  %v5774 = vsel %vm5567, %v5514, -inf
  %v5775 = vmax.f32 %v5773, %v5774
  %v5776 = vsel %vm5567, %v5515, -inf
  %v5777 = vmax.f32 %v5775, %v5776
  %v5778 = vsel %vm5567, %v5516, -inf
  %v5779 = vmax.f32 %v5777, %v5778
  %v5780 = vsel %vm5567, %v5517, -inf
  %v5781 = vmax.f32 %v5779, %v5780
  %v5782 = vsel %vm5567, %v5518, -inf
  %v5783 = vmax.f32 %v5781, %v5782
  %v5784 = vsel %vm5567, %v5519, -inf
  %v5785 = vmax.f32 %v5783, %v5784
  %v5786 = vsel %vm5567, %v5520, -inf
  %v5787 = vmax.f32 %v5785, %v5786
  %v5788 = vsel %vm5567, %v5521, -inf
  %v5789 = vmax.f32 %v5787, %v5788
  %v5790 = vsel %vm5567, %v5522, -inf
  %v5791 = vmax.f32 %v5789, %v5790
  %v5792 = vsel %vm5567, %v5523, -inf
  %v5793 = vmax.f32 %v5791, %v5792
  %v5794 = vsel %vm5567, %v5524, -inf
  %v5795 = vmax.f32 %v5793, %v5794
  %v5796 = vsel %vm5567, %v5525, -inf
  %v5797 = vmax.f32 %v5795, %v5796
  %v5798 = vsel %vm5567, %v5526, -inf
  %v5799 = vmax.f32 %v5797, %v5798
  %v5800 = vsel %vm5567, %v5527, -inf
  %v5801 = vmax.f32 %v5799, %v5800
  %v5802 = vsel %vm5567, %v5528, -inf
  %v5803 = vmax.f32 %v5801, %v5802
  %v5804 = vsel %vm5567, %v5529, -inf
  %v5805 = vmax.f32 %v5803, %v5804
  %v5806 = vsel %vm5567, %v5530, -inf
  %v5807 = vmax.f32 %v5805, %v5806
  %v5808 = vrot.slane %v5807, 4
  %v5809 = vmax.f32 %v5807, %v5808
  %v5810 = vrot.slane %v5809, 2
  %v5811 = vmax.f32 %v5809, %v5810
  %v5812 = vrot.slane %v5811, 1
  %v5813 = vmax.f32 %v5811, %v5812
  %v5814 = vsel %vm5567, %v5531, -inf
  %v5815 = vsel %vm5567, %v5532, -inf
  %v5816 = vmax.f32 %v5814, %v5815
  %v5817 = vsel %vm5567, %v5533, -inf
  %v5818 = vmax.f32 %v5816, %v5817
  %v5819 = vsel %vm5567, %v5534, -inf
  %v5820 = vmax.f32 %v5818, %v5819
  %v5821 = vsel %vm5567, %v5535, -inf
  %v5822 = vmax.f32 %v5820, %v5821
  %v5823 = vsel %vm5567, %v5536, -inf
  %v5824 = vmax.f32 %v5822, %v5823
  %v5825 = vsel %vm5567, %v5537, -inf
  %v5826 = vmax.f32 %v5824, %v5825
  %v5827 = vsel %vm5567, %v5538, -inf
  %v5828 = vmax.f32 %v5826, %v5827
  %v5829 = vsel %vm5567, %v5539, -inf
  %v5830 = vmax.f32 %v5828, %v5829
  %v5831 = vsel %vm5567, %v5540, -inf
  %v5832 = vmax.f32 %v5830, %v5831
  %v5833 = vsel %vm5567, %v5541, -inf
  %v5834 = vmax.f32 %v5832, %v5833
  %v5835 = vsel %vm5567, %v5542, -inf
  %v5836 = vmax.f32 %v5834, %v5835
  %v5837 = vsel %vm5567, %v5543, -inf
  %v5838 = vmax.f32 %v5836, %v5837
  %v5839 = vsel %vm5567, %v5544, -inf
  %v5840 = vmax.f32 %v5838, %v5839
  %v5841 = vsel %vm5567, %v5545, -inf
  %v5842 = vmax.f32 %v5840, %v5841
  %v5843 = vsel %vm5567, %v5546, -inf
  %v5844 = vmax.f32 %v5842, %v5843
  %v5845 = vsel %vm5567, %v5547, -inf
  %v5846 = vmax.f32 %v5844, %v5845
  %v5847 = vsel %vm5567, %v5548, -inf
  %v5848 = vmax.f32 %v5846, %v5847
  %v5849 = vrot.slane %v5848, 4
  %v5850 = vmax.f32 %v5848, %v5849
  %v5851 = vrot.slane %v5850, 2
  %v5852 = vmax.f32 %v5850, %v5851
  %v5853 = vrot.slane %v5852, 1
  %v5854 = vmax.f32 %v5852, %v5853
  %v5855 = vsel %vm5567, %v5549, -inf
  %v5856 = vsel %vm5567, %v5550, -inf
  %v5857 = vmax.f32 %v5855, %v5856
  %v5858 = vsel %vm5567, %v5551, -inf
  %v5859 = vmax.f32 %v5857, %v5858
  %v5860 = vsel %vm5567, %v5552, -inf
  %v5861 = vmax.f32 %v5859, %v5860
  %v5862 = vsel %vm5567, %v5553, -inf
  %v5863 = vmax.f32 %v5861, %v5862
  %v5864 = vsel %vm5567, %v5554, -inf
  %v5865 = vmax.f32 %v5863, %v5864
  %v5866 = vsel %vm5567, %v5555, -inf
  %v5867 = vmax.f32 %v5865, %v5866
  %v5868 = vsel %vm5567, %v5556, -inf
  %v5869 = vmax.f32 %v5867, %v5868
  %v5870 = vsel %vm5567, %v5557, -inf
  %v5871 = vmax.f32 %v5869, %v5870
  %v5872 = vsel %vm5567, %v5558, -inf
  %v5873 = vmax.f32 %v5871, %v5872
  %v5874 = vsel %vm5567, %v5559, -inf
  %v5875 = vmax.f32 %v5873, %v5874
  %v5876 = vsel %vm5567, %v5560, -inf
  %v5877 = vmax.f32 %v5875, %v5876
  %v5878 = vsel %vm5567, %v5561, -inf
  %v5879 = vmax.f32 %v5877, %v5878
  %v5880 = vsel %vm5567, %v5562, -inf
  %v5881 = vmax.f32 %v5879, %v5880
  %v5882 = vsel %vm5567, %v5563, -inf
  %v5883 = vmax.f32 %v5881, %v5882
  %v5884 = vsel %vm5567, %v5564, -inf
  %v5885 = vmax.f32 %v5883, %v5884
  %v5886 = vsel %vm5567, %v5565, -inf
  %v5887 = vmax.f32 %v5885, %v5886
  %v5888 = vsel %vm5567, %v5566, -inf
  %v5889 = vmax.f32 %v5887, %v5888
  %v5890 = vrot.slane %v5889, 4
  %v5891 = vmax.f32 %v5889, %v5890
  %v5892 = vrot.slane %v5891, 2
  %v5893 = vmax.f32 %v5891, %v5892
  %v5894 = vrot.slane %v5893, 1
  %v5895 = vmax.f32 %v5893, %v5894
  %v5896 = vmax.f32 %v4627, %v4629
  %v5897 = vmax.f32 %v5896, %v4631
  %v5898 = vmax.f32 %v5897, %v4633
  %v5899 = vmax.f32 %v5898, %v4635
  %v5900 = vmax.f32 %v5899, %v4637
  %v5901 = vmax.f32 %v5900, %v4639
  %v5902 = vmax.f32 %v5901, %v4641
  %v5903 = vmax.f32 %v5902, %v4643
  %v5904 = vmax.f32 %v5903, %v4645
  %v5905 = vmax.f32 %v5904, %v4647
  %v5906 = vmax.f32 %v5905, %v4649
  %v5907 = vmax.f32 %v5906, %v4651
  %v5908 = vmax.f32 %v5907, %v4653
  %v5909 = vmax.f32 %v5908, %v4655
  %v5910 = vmax.f32 %v5909, %v4657
  %v5911 = vmax.f32 %v5910, %v4659
  %v5912 = vmax.f32 %v5911, %v4661
  %v5913 = vrot.slane %v5912, 4
  %v5914 = vmax.f32 %v5912, %v5913
  %v5915 = vrot.slane %v5914, 2
  %v5916 = vmax.f32 %v5914, %v5915
  %v5917 = vrot.slane %v5916, 1
  %v5918 = vmax.f32 %v5916, %v5917
  %v5919 = vmax.f32 %v4663, %v4665
  %v5920 = vmax.f32 %v5919, %v4667
  %v5921 = vmax.f32 %v5920, %v4669
  %v5922 = vmax.f32 %v5921, %v4671
  %v5923 = vmax.f32 %v5922, %v4673
  %v5924 = vmax.f32 %v5923, %v4675
  %v5925 = vmax.f32 %v5924, %v4677
  %v5926 = vmax.f32 %v5925, %v4679
  %v5927 = vmax.f32 %v5926, %v4681
  %v5928 = vmax.f32 %v5927, %v4683
  %v5929 = vmax.f32 %v5928, %v4685
  %v5930 = vmax.f32 %v5929, %v4687
  %v5931 = vmax.f32 %v5930, %v4689
  %v5932 = vmax.f32 %v5931, %v4691
  %v5933 = vmax.f32 %v5932, %v4693
  %v5934 = vmax.f32 %v5933, %v4695
  %v5935 = vmax.f32 %v5934, %v4697
  %v5936 = vrot.slane %v5935, 4
  %v5937 = vmax.f32 %v5935, %v5936
  %v5938 = vrot.slane %v5937, 2
  %v5939 = vmax.f32 %v5937, %v5938
  %v5940 = vrot.slane %v5939, 1
  %v5941 = vmax.f32 %v5939, %v5940
  %v5942 = vmax.f32 %v4699, %v4701
  %v5943 = vmax.f32 %v5942, %v4703
  %v5944 = vmax.f32 %v5943, %v4705
  %v5945 = vmax.f32 %v5944, %v4707
  %v5946 = vmax.f32 %v5945, %v4709
  %v5947 = vmax.f32 %v5946, %v4711
  %v5948 = vmax.f32 %v5947, %v4713
  %v5949 = vmax.f32 %v5948, %v4715
  %v5950 = vmax.f32 %v5949, %v4717
  %v5951 = vmax.f32 %v5950, %v4719
  %v5952 = vmax.f32 %v5951, %v4721
  %v5953 = vmax.f32 %v5952, %v4723
  %v5954 = vmax.f32 %v5953, %v4725
  %v5955 = vmax.f32 %v5954, %v4727
  %v5956 = vmax.f32 %v5955, %v4729
  %v5957 = vmax.f32 %v5956, %v4731
  %v5958 = vmax.f32 %v5957, %v4733
  %v5959 = vrot.slane %v5958, 4
  %v5960 = vmax.f32 %v5958, %v5959
  %v5961 = vrot.slane %v5960, 2
  %v5962 = vmax.f32 %v5960, %v5961
  %v5963 = vrot.slane %v5962, 1
  %v5964 = vmax.f32 %v5962, %v5963
  %v5965 = vmax.f32 %v4735, %v4737
  %v5966 = vmax.f32 %v5965, %v4739
  %v5967 = vmax.f32 %v5966, %v4741
  %v5968 = vmax.f32 %v5967, %v4743
  %v5969 = vmax.f32 %v5968, %v4745
  %v5970 = vmax.f32 %v5969, %v4747
  %v5971 = vmax.f32 %v5970, %v4749
  %v5972 = vmax.f32 %v5971, %v4751
  %v5973 = vmax.f32 %v5972, %v4753
  %v5974 = vmax.f32 %v5973, %v4755
  %v5975 = vmax.f32 %v5974, %v4757
  %v5976 = vmax.f32 %v5975, %v4759
  %v5977 = vmax.f32 %v5976, %v4761
  %v5978 = vmax.f32 %v5977, %v4763
  %v5979 = vmax.f32 %v5978, %v4765
  %v5980 = vmax.f32 %v5979, %v4767
  %v5981 = vmax.f32 %v5980, %v4769
  %v5982 = vrot.slane %v5981, 4
  %v5983 = vmax.f32 %v5981, %v5982
  %v5984 = vrot.slane %v5983, 2
  %v5985 = vmax.f32 %v5983, %v5984
  %v5986 = vrot.slane %v5985, 1
  %v5987 = vmax.f32 %v5985, %v5986
  %v5988 = vmax.f32 %v4771, %v4773
  %v5989 = vmax.f32 %v5988, %v4775
  %v5990 = vmax.f32 %v5989, %v4777
  %v5991 = vmax.f32 %v5990, %v4779
  %v5992 = vmax.f32 %v5991, %v4781
  %v5993 = vmax.f32 %v5992, %v4783
  %v5994 = vmax.f32 %v5993, %v4785
  %v5995 = vmax.f32 %v5994, %v4787
  %v5996 = vmax.f32 %v5995, %v4789
  %v5997 = vmax.f32 %v5996, %v4791
  %v5998 = vmax.f32 %v5997, %v4793
  %v5999 = vmax.f32 %v5998, %v4795
  %v6000 = vmax.f32 %v5999, %v4797
  %v6001 = vmax.f32 %v6000, %v4799
  %v6002 = vmax.f32 %v6001, %v4801
  %v6003 = vmax.f32 %v6002, %v4803
  %v6004 = vmax.f32 %v6003, %v4805
  %v6005 = vrot.slane %v6004, 4
  %v6006 = vmax.f32 %v6004, %v6005
  %v6007 = vrot.slane %v6006, 2
  %v6008 = vmax.f32 %v6006, %v6007
  %v6009 = vrot.slane %v6008, 1
  %v6010 = vmax.f32 %v6008, %v6009
  %v6011 = vmax.f32 %v4807, %v4809
  %v6012 = vmax.f32 %v6011, %v4811
  %v6013 = vmax.f32 %v6012, %v4813
  %v6014 = vmax.f32 %v6013, %v4815
  %v6015 = vmax.f32 %v6014, %v4817
  %v6016 = vmax.f32 %v6015, %v4819
  %v6017 = vmax.f32 %v6016, %v4821
  %v6018 = vmax.f32 %v6017, %v4823
  %v6019 = vmax.f32 %v6018, %v4825
  %v6020 = vmax.f32 %v6019, %v4827
  %v6021 = vmax.f32 %v6020, %v4829
  %v6022 = vmax.f32 %v6021, %v4831
  %v6023 = vmax.f32 %v6022, %v4833
  %v6024 = vmax.f32 %v6023, %v4835
  %v6025 = vmax.f32 %v6024, %v4837
  %v6026 = vmax.f32 %v6025, %v4839
  %v6027 = vmax.f32 %v6026, %v4841
  %v6028 = vrot.slane %v6027, 4
  %v6029 = vmax.f32 %v6027, %v6028
  %v6030 = vrot.slane %v6029, 2
  %v6031 = vmax.f32 %v6029, %v6030
  %v6032 = vrot.slane %v6031, 1
  %v6033 = vmax.f32 %v6031, %v6032
  %v6034 = vmax.f32 %v4843, %v4845
  %v6035 = vmax.f32 %v6034, %v4847
  %v6036 = vmax.f32 %v6035, %v4849
  %v6037 = vmax.f32 %v6036, %v4851
  %v6038 = vmax.f32 %v6037, %v4853
  %v6039 = vmax.f32 %v6038, %v4855
  %v6040 = vmax.f32 %v6039, %v4857
  %v6041 = vmax.f32 %v6040, %v4859
  %v6042 = vmax.f32 %v6041, %v4861
  %v6043 = vmax.f32 %v6042, %v4863
  %v6044 = vmax.f32 %v6043, %v4865
  %v6045 = vmax.f32 %v6044, %v4867
  %v6046 = vmax.f32 %v6045, %v4869
  %v6047 = vmax.f32 %v6046, %v4871
  %v6048 = vmax.f32 %v6047, %v4873
  %v6049 = vmax.f32 %v6048, %v4875
  %v6050 = vmax.f32 %v6049, %v4877
  %v6051 = vrot.slane %v6050, 4
  %v6052 = vmax.f32 %v6050, %v6051
  %v6053 = vrot.slane %v6052, 2
  %v6054 = vmax.f32 %v6052, %v6053
  %v6055 = vrot.slane %v6054, 1
  %v6056 = vmax.f32 %v6054, %v6055
  %v6057 = vmax.f32 %v4879, %v4881
  %v6058 = vmax.f32 %v6057, %v4883
  %v6059 = vmax.f32 %v6058, %v4885
  %v6060 = vmax.f32 %v6059, %v4887
  %v6061 = vmax.f32 %v6060, %v4889
  %v6062 = vmax.f32 %v6061, %v4891
  %v6063 = vmax.f32 %v6062, %v4893
  %v6064 = vmax.f32 %v6063, %v4895
  %v6065 = vmax.f32 %v6064, %v4897
  %v6066 = vmax.f32 %v6065, %v4899
  %v6067 = vmax.f32 %v6066, %v4901
  %v6068 = vmax.f32 %v6067, %v4903
  %v6069 = vmax.f32 %v6068, %v4905
  %v6070 = vmax.f32 %v6069, %v4907
  %v6071 = vmax.f32 %v6070, %v4909
  %v6072 = vmax.f32 %v6071, %v4911
  %v6073 = vmax.f32 %v6072, %v4913
  %v6074 = vrot.slane %v6073, 4
  %v6075 = vmax.f32 %v6073, %v6074
  %v6076 = vrot.slane %v6075, 2
  %v6077 = vmax.f32 %v6075, %v6076
  %v6078 = vrot.slane %v6077, 1
  %v6079 = vmax.f32 %v6077, %v6078
  %v6080 = vpack.c.bf16 %v5608, %v5608
  %v6081 = vpack.c.bf16 %v5649, %v5649
  %v6082 = vpack.c.bf16 %v5690, %v5690
  %v6083 = vpack.c.bf16 %v5731, %v5731
  %v6084 = vpack.c.bf16 %v5772, %v5772
  %v6085 = vpack.c.bf16 %v5813, %v5813
  %v6086 = vpack.c.bf16 %v5854, %v5854
  %v6087 = vpack.c.bf16 %v5895, %v5895
  %v6088 = vpack.c.bf16 %v5918, %v5918
  %v6089 = vpack.c.bf16 %v5941, %v5941
  %v6090 = vpack.c.bf16 %v5964, %v5964
  %v6091 = vpack.c.bf16 %v5987, %v5987
  %v6092 = vpack.c.bf16 %v6010, %v6010
  %v6093 = vpack.c.bf16 %v6033, %v6033
  %v6094 = vpack.c.bf16 %v6056, %v6056
  %v6095 = vpack.c.bf16 %v6079, %v6079
  %v6104 = vperm.slane %v6080, 0
  %v6105 = vperm.slane %v6081, 0
  %v6106 = vperm.slane %v6082, 0
  %v6107 = vperm.slane %v6083, 0
  %v6108 = vperm.slane %v6084, 0
  %v6109 = vperm.slane %v6085, 0
  %v6110 = vperm.slane %v6086, 0
  %v6111 = vperm.slane %v6087, 0
  %v6112 = vunpack.c.l.b16 %v6104
  %v6113 = vunpack.c.l.b16 %v6105
  %v6114 = vunpack.c.l.b16 %v6106
  %v6115 = vunpack.c.l.b16 %v6107
  %v6116 = vunpack.c.l.b16 %v6108
  %v6117 = vunpack.c.l.b16 %v6109
  %v6118 = vunpack.c.l.b16 %v6110
  %v6119 = vunpack.c.l.b16 %v6111
  %v6120 = vsel %vm4285, %v6113, %v6112
  %v6121 = vsel %vm4288, %v6114, %v6120
  %v6122 = vsel %vm4291, %v6115, %v6121
  %v6123 = vsel %vm4294, %v6116, %v6122
  %v6124 = vsel %vm4297, %v6117, %v6123
  %v6125 = vsel %vm4300, %v6118, %v6124
  %vm6126 = vcmask 1047559
  %v6127 = vsel %vm6126, %v6119, %v6125
  %v6128 = vpack.c.b16 %v6127, %v6127
  %v6137 = vperm.slane %v6088, 0
  %v6138 = vperm.slane %v6089, 0
  %v6139 = vperm.slane %v6090, 0
  %v6140 = vperm.slane %v6091, 0
  %v6141 = vperm.slane %v6092, 0
  %v6142 = vperm.slane %v6093, 0
  %v6143 = vperm.slane %v6094, 0
  %v6144 = vperm.slane %v6095, 0
  %v6145 = vunpack.c.l.b16 %v6137
  %v6146 = vunpack.c.l.b16 %v6138
  %v6147 = vunpack.c.l.b16 %v6139
  %v6148 = vunpack.c.l.b16 %v6140
  %v6149 = vunpack.c.l.b16 %v6141
  %v6150 = vunpack.c.l.b16 %v6142
  %v6151 = vunpack.c.l.b16 %v6143
  %v6152 = vunpack.c.l.b16 %v6144
  %v6153 = vsel %vm4285, %v6146, %v6145
  %v6154 = vsel %vm4288, %v6147, %v6153
  %v6155 = vsel %vm4291, %v6148, %v6154
  %v6156 = vsel %vm4294, %v6149, %v6155
  %v6157 = vsel %vm4297, %v6150, %v6156
  %v6158 = vsel %vm4300, %v6151, %v6157
  %v6159 = vsel %vm6126, %v6152, %v6158
  %v6160 = vpack.c.b16 %v6159, %v6159
  %6161 = vrot.lane.b32.xlu0 %v6160, 64
  %v6162 = vpop.permute.xlu0 %6161
  %v6165 = vsel %vm5567, %v6128, %v6162
  %v6167 = vld [vmem:[%s11] sm:$0xf]
  %v6168 = vld [vmem:[%s11 + $0x4] sm:$0xf]
  %v6169 = vld [vmem:[%s11 + $0x8] sm:$0xf]
  %v6170 = vld [vmem:[%s11 + $0xc] sm:$0xf]
  %v6171 = vld [vmem:[%s11 + $0x10] sm:$0xf]
  %v6172 = vld [vmem:[%s11 + $0x14] sm:$0xf]
  %v6173 = vld [vmem:[%s11 + $0x18] sm:$0xf]
  %v6174 = vld [vmem:[%s11 + $0x1c] sm:$0xf]
  %v6175 = vld [vmem:[%s11 + $0x20] sm:$0xf]
  %v6176 = vld [vmem:[%s11 + $0x24] sm:$0xf]
  %v6177 = vld [vmem:[%s11 + $0x28] sm:$0xf]
  %v6178 = vld [vmem:[%s11 + $0x2c] sm:$0xf]
  %v6179 = vld [vmem:[%s11 + $0x30] sm:$0xf]
  %v6180 = vld [vmem:[%s11 + $0x34] sm:$0xf]
  %v6181 = vld [vmem:[%s11 + $0x38] sm:$0xf]
  %v6182 = vld [vmem:[%s11 + $0x3c] sm:$0xf]
  %v6183 = vld [vmem:[%s11 + $0x40] sm:$0xf]
  %v6184 = vld [vmem:[%s11 + $0x44] sm:$0xf]
  %v6185 = vld [vmem:[%s11 + $0x48] sm:$0xf]
  %v6186 = vld [vmem:[%s11 + $0x4c] sm:$0xf]
  %v6187 = vld [vmem:[%s11 + $0x50] sm:$0xf]
  %v6188 = vld [vmem:[%s11 + $0x54] sm:$0xf]
  %v6189 = vld [vmem:[%s11 + $0x58] sm:$0xf]
  %v6190 = vld [vmem:[%s11 + $0x5c] sm:$0xf]
  %v6191 = vld [vmem:[%s12] sm:$0x1]
  %v6193 = vperm.slane %v6191, 0
  %v6219 = vunpack.c.l.b16 %v6167
  %v6220 = vunpack.c.l.b16 %v6168
  %v6221 = vunpack.c.l.b16 %v6169
  %v6222 = vunpack.c.l.b16 %v6170
  %v6223 = vunpack.c.l.b16 %v6171
  %v6224 = vunpack.c.l.b16 %v6172
  %v6225 = vunpack.c.l.b16 %v6173
  %v6226 = vunpack.c.l.b16 %v6174
  %v6227 = vunpack.c.l.b16 %v6175
  %v6228 = vunpack.c.l.b16 %v6176
  %v6229 = vunpack.c.l.b16 %v6177
  %v6230 = vunpack.c.l.b16 %v6178
  %v6231 = vunpack.c.l.b16 %v6179
  %v6232 = vunpack.c.l.b16 %v6180
  %v6233 = vunpack.c.l.b16 %v6181
  %v6234 = vunpack.c.l.b16 %v6182
  %v6235 = vunpack.c.l.b16 %v6183
  %v6236 = vunpack.c.l.b16 %v6184
  %v6237 = vunpack.c.l.b16 %v6185
  %v6238 = vunpack.c.l.b16 %v6186
  %v6239 = vunpack.c.l.b16 %v6187
  %v6240 = vunpack.c.l.b16 %v6188
  %v6241 = vunpack.c.l.b16 %v6189
  %v6242 = vunpack.c.l.b16 %v6190
  %v6243 = vpack.c.b16 %v6220, %v6219
  %v6244 = vpack.c.b16 %v6222, %v6221
  %v6245 = vpack.c.b16 %v6224, %v6223
  %v6246 = vpack.c.b16 %v6226, %v6225
  %v6247 = vpack.c.b16 %v6228, %v6227
  %v6248 = vpack.c.b16 %v6230, %v6229
  %v6249 = vpack.c.b16 %v6232, %v6231
  %v6250 = vpack.c.b16 %v6234, %v6233
  %v6251 = vpack.c.b16 %v6236, %v6235
  %v6252 = vpack.c.b16 %v6238, %v6237
  %v6253 = vpack.c.b16 %v6240, %v6239
  %v6254 = vpack.c.b16 %v6242, %v6241
  %v6267 = vsel %vm5567, %v6162, 0
  %6269 = vmatpush.bf16.msra.mxu0 %v6250
  %6270 = vmatpush.bf16.msra.mxu0 %v6249
  %6271 = vmatpush.bf16.msra.mxu0 %v6248
  %6272 = vmatpush.bf16.msra.mxu0 %v6247
  %6273 = vmatpush.bf16.msra.mxu0 %v6246
  %6274 = vmatpush.bf16.msra.mxu0 %v6245
  %6275 = vmatpush.bf16.msra.mxu0 %v6244
  %6276 = vmatpush.bf16.msra.mxu0 %v6243
  %6277 = vmatmul.bf16.gmra.mxu0 %v6165
  %v6278 = vpop.f32.mrf.mxu0
  %v6279 = vadd.f32 %v6193, %v6278
  %v6280 = vpop.f32.mrf.mxu0
  %6281 = vdwg.mxu0
  %6282 = vmatpush.bf16.msra.mxu0 0
  %6283 = vmatpush.bf16.msra.mxu0 0
  %6284 = vmatpush.bf16.msra.mxu0 0
  %6285 = vmatpush.bf16.msra.mxu0 0
  %6286 = vmatpush.bf16.msra.mxu0 %v6254
  %6287 = vmatpush.bf16.msra.mxu0 %v6253
  %6288 = vmatpush.bf16.msra.mxu0 %v6252
  %6289 = vmatpush.bf16.msra.mxu0 %v6251
  %6290 = vmatmul.bf16.gmra.mxu0 %v6267
  %v6291 = vpop.f32.mrf.mxu0
  %v6292 = vadd.f32 %v6279, %v6291
  %v6293 = vpop.f32.mrf.mxu0
  %6294 = vdwg.mxu0
  %6295 = vst [vmem:[%s13] sm:$0xff] %v6292
  // Predicated region
  $region54: #{georef_forward.1} parent=0 // pred_check
    _
  $region55: #{georef_forward.1} parent=0 // pred_check_branch
    %6297 = sbr.rel (0) target = $region57
  $region56: #{georef_forward.1} parent=0 // pred_region
    _
  $region57: #{georef_forward.1} parent=0 // pred_fallthru
    _
  // Predicated region
  $region58: #{georef_forward.1} parent=0 // pred_check
    _
  $region59: #{georef_forward.1} parent=0 // pred_check_branch
    %6299 = sbr.rel (0) target = $region61
  $region60: #{georef_forward.1} parent=0 // pred_region
    _
  $region61: #{georef_forward.1} parent=0 // pred_fallthru
    _

</llo_original>
